<compile_context>
chip_gen: v6e
topology: v6e:2x2x1
jax: 0.10.0
libtpu: 0.0.40
codegen_flags: <defaults>
</compile_context>

<pallas_src>
import functools
import math

import jax
import jax.numpy as jnp
from jax.experimental import pallas as pl
from jax.experimental.pallas import tpu as pltpu


# ----------------------------------------------------------------------------
# Pallas kernels
# ----------------------------------------------------------------------------
def _gemm_bias_act_kernel(x_ref, w_ref, b_ref, o_ref, *, relu):
    y = jnp.dot(x_ref[...], w_ref[...], preferred_element_type=jnp.float32)
    y = y + b_ref[...]
    if relu:
        y = jnp.maximum(y, 0.0)
    o_ref[...] = y


def _pick_tm(m, max_tm=1024):
    """Largest M-tile <= max_tm that divides M and is a multiple of 8; else full M."""
    if m <= max_tm:
        return m
    for t in range(max_tm, 7, -8):           # all multiples of 8
        if m % t == 0:
            return t
    return m                                  # full-array block is always legal


def matmul_bias_act(x, w, b2, *, relu=False, max_tm=1024):
    """y = act(x @ w + b); x:(M,K) f32, w:(K,N) f32, b2:(1,N) f32.  No padding."""
    M, K = x.shape
    _, N = w.shape
    tm = _pick_tm(M, max_tm)
    kern = functools.partial(_gemm_bias_act_kernel, relu=relu)
    return pl.pallas_call(
        kern,
        out_shape=jax.ShapeDtypeStruct((M, N), jnp.float32),
        grid_spec=pltpu.PrefetchScalarGridSpec(
            num_scalar_prefetch=0,
            grid=(M // tm,),
            in_specs=[
                pl.BlockSpec((tm, K), lambda i: (i, 0)),
                pl.BlockSpec((K, N), lambda i: (0, 0)),
                pl.BlockSpec((1, N), lambda i: (0, 0)),
            ],
            out_specs=pl.BlockSpec((tm, N), lambda i: (i, 0)),
        ),
        compiler_params=pltpu.CompilerParams(dimension_semantics=("parallel",)),
    )(x, w, b2)


def _pool_relu_kernel(x_ref, o_ref, *, c):
    # x: (R, 2, PW, 2C) where axis1 = OH parity and the lane dim holds
    # [even-OW channels | odd-OW channels].
    x = x_ref[...]
    m = jnp.maximum(x[:, 0], x[:, 1])            # max over OH parity  -> (R, PW, 2C)
    m = jnp.maximum(m[..., :c], m[..., c:])      # max over OW parity  -> (R, PW, C)
    o_ref[...] = jnp.maximum(m, 0.0)             # fused ReLU


def maxpool2_relu(x):
    """nn.MaxPool2d(2) + ReLU on channel-last (B, OHe, OWe, C) with even OHe/OWe."""
    B, OHe, OWe, C = x.shape
    PH, PW = OHe // 2, OWe // 2
    xv = x.reshape(B * PH, 2, PW, 2 * C)         # free row-major reshape
    out = pl.pallas_call(
        functools.partial(_pool_relu_kernel, c=C),
        out_shape=jax.ShapeDtypeStruct((B * PH, PW, C), x.dtype),
    )(xv)
    return out.reshape(B, PH, PW, C)


def _mlp_kernel(x_ref, w1_ref, b1_ref, w2_ref, b2_ref, w3_ref, b3_ref, o_ref):
    h = jnp.dot(x_ref[...], w1_ref[...], preferred_element_type=jnp.float32) + b1_ref[...]
    h = jnp.maximum(h, 0.0)
    h = jnp.dot(h, w2_ref[...], preferred_element_type=jnp.float32) + b2_ref[...]
    h = jnp.maximum(h, 0.0)
    o_ref[...] = jnp.dot(h, w3_ref[...], preferred_element_type=jnp.float32) + b3_ref[...]


def mlp_fused(x, w1, b1, w2, b2, w3, b3):
    """Fused Linear(384,128)+ReLU -> Linear(128,128)+ReLU -> Linear(128,out)."""
    B = x.shape[0]
    out_dim = w3.shape[1]
    return pl.pallas_call(
        _mlp_kernel,
        out_shape=jax.ShapeDtypeStruct((B, out_dim), jnp.float32),
    )(x, w1, b1, w2, b2, w3, b3)


# ----------------------------------------------------------------------------
# Conv via im2col (concat only, no transposes) + Pallas GEMM
# ----------------------------------------------------------------------------
def _im2col_nhwc(x, k, s, oh, ow):
    """x: (B, H, W, C) -> (B*oh*ow, k*k*C), feature order (dh, dw, c)."""
    B = x.shape[0]
    C = x.shape[3]
    cols = []
    for dh in range(k):
        for dw in range(k):
            cols.append(x[:, dh:dh + s * oh:s, dw:dw + s * ow:s, :])  # (B,oh,ow,C)
    p = jnp.concatenate(cols, axis=-1)               # (B, oh, ow, k*k*C)
    return p.reshape(B * oh * ow, k * k * C)


def conv2d_nhwc(x, wm, b2, k, s, *, relu=False, even_output=False):
    """x: (B,H,W,C); wm: (k*k*C, Cout) pre-permuted; b2: (1, Cout). VALID padding.
    If even_output, only the rows/cols a following floor-mode 2x2 pool uses are
    computed (exactly equivalent for pool(conv(x)))."""
    B, H, W, _ = x.shape
    oh = (H - k) // s + 1
    ow = (W - k) // s + 1
    if even_output:
        oh -= oh % 2
        ow -= ow % 2
    patches = _im2col_nhwc(x, k, s, oh, ow)
    y = matmul_bias_act(patches, wm, b2, relu=relu)
    return y.reshape(B, oh, ow, wm.shape[1])         # channel-last, no transpose


# ----------------------------------------------------------------------------
# Parameter prep: fold layout permutations + 1/255 into the weights (once).
# ----------------------------------------------------------------------------
def prepare_params(p):
    def conv_w(w):
        # torch OIHW (Cout,Cin,ky,kx) -> (dh,dw,Cin,Cout) for (H,W,C) activations,
        # where my H-axis pairs with torch's 2nd spatial dim and W with the 1st.
        cout = w.shape[0]
        return jnp.transpose(w, (3, 2, 1, 0)).reshape(-1, cout)

    # PyTorch flatten order of conv3 out (C=64, Wp=2, Hp=3) -> my (Hp, Wp, C) order.
    fc1_w = p["fc1_w"].reshape(64, 2, 3, 128).transpose(2, 1, 0, 3).reshape(384, 128)

    return {
        "w1m": conv_w(p["w1"]) * (1.0 / 255.0), "b1": p["b1"].reshape(1, -1),
        "w2m": conv_w(p["w2"]),                  "b2": p["b2"].reshape(1, -1),
        "w3m": conv_w(p["w3"]),                  "b3": p["b3"].reshape(1, -1),
        "fc1_w": fc1_w,       "fc1_b": p["fc1_b"].reshape(1, -1),
        "fc2_w": p["fc2_w"],  "fc2_b": p["fc2_b"].reshape(1, -1),
        "fc3_w": p["fc3_w"],  "fc3_b": p["fc3_b"].reshape(1, -1),
    }


# ----------------------------------------------------------------------------
# Full model forward (channel-last; numerically equals the PyTorch module)
# ----------------------------------------------------------------------------
def cnn_forward(x_u8, pp):
    # img_preprocess's transpose(-1,1) and /255 are folded into the prepped
    # weights; `.to('cuda')` is a device move (no-op here).
    x = x_u8.astype(jnp.float32)                               # (B, 210, 160, 3)
    # Conv2d(3,32,8,4) -> MaxPool2d(2) -> ReLU
    h = conv2d_nhwc(x, pp["w1m"], pp["b1"], 8, 4, even_output=True)
    h = maxpool2_relu(h)
    # Conv2d(32,64,4,2) -> MaxPool2d(2) -> ReLU
    h = conv2d_nhwc(h, pp["w2m"], pp["b2"], 4, 2, even_output=True)
    h = maxpool2_relu(h)
    # Conv2d(64,64,3,1) -> ReLU
    h = conv2d_nhwc(h, pp["w3m"], pp["b3"], 3, 1, relu=True)
    # Flatten -> fused Linear(384,128)+ReLU -> Linear(128,128)+ReLU -> Linear(128,out)
    h = h.reshape(h.shape[0], -1)                              # (B, 384), free reshape
    return mlp_fused(h, pp["fc1_w"], pp["fc1_b"], pp["fc2_w"], pp["fc2_b"],
                     pp["fc3_w"], pp["fc3_b"])


# ----------------------------------------------------------------------------
# Deterministic parameter init (PyTorch-style uniform(-1/sqrt(fan_in), +))
# ----------------------------------------------------------------------------
def init_params(key, out_dim):
    ks = jax.random.split(key, 12)

    def u(k, shape, fan_in):
        bound = 1.0 / math.sqrt(fan_in)
        return jax.random.uniform(k, shape, jnp.float32, -bound, bound)

    return {
        "w1": u(ks[0], (32, 3, 8, 8), 3 * 8 * 8),   "b1": u(ks[1], (32,), 3 * 8 * 8),
        "w2": u(ks[2], (64, 32, 4, 4), 32 * 4 * 4), "b2": u(ks[3], (64,), 32 * 4 * 4),
        "w3": u(ks[4], (64, 64, 3, 3), 64 * 3 * 3), "b3": u(ks[5], (64,), 64 * 3 * 3),
        "fc1_w": u(ks[6], (384, 128), 384), "fc1_b": u(ks[7], (128,), 384),
        "fc2_w": u(ks[8], (128, 128), 128), "fc2_b": u(ks[9], (128,), 128),
        "fc3_w": u(ks[10], (128, out_dim), 128), "fc3_b": u(ks[11], (out_dim,), 128),
    }


# ----------------------------------------------------------------------------
# Pure-JAX reference (PyTorch semantics, NCHW) for sanity check
# ----------------------------------------------------------------------------
def reference_forward(x_u8, p):
    x = jnp.transpose(x_u8.astype(jnp.float32), (0, 3, 2, 1)) / 255.0

    def conv(x, w, b, s):
        y = jax.lax.conv_general_dilated(
            x, w, (s, s), "VALID",
            dimension_numbers=("NCHW", "OIHW", "NCHW"),
            precision=jax.lax.Precision.HIGHEST)
        return y + b[None, :, None, None]

    def pool(x):
        return jax.lax.reduce_window(x, -jnp.inf, jax.lax.max,
                                     (1, 1, 2, 2), (1, 1, 2, 2), "VALID")

    h = jax.nn.relu(pool(conv(x, p["w1"], p["b1"], 4)))
    h = jax.nn.relu(pool(conv(h, p["w2"], p["b2"], 2)))
    h = jax.nn.relu(conv(h, p["w3"], p["b3"], 1))
    h = h.reshape(h.shape[0], -1)
    h = jax.nn.relu(h @ p["fc1_w"] + p["fc1_b"])
    h = jax.nn.relu(h @ p["fc2_w"] + p["fc2_b"])
    return h @ p["fc3_w"] + p["fc3_b"]


if __name__ == "__main__":
    out_dim = 6
    batch = 2
    key = jax.random.PRNGKey(0)
    k_in, k_par = jax.random.split(key)

    # Raw Atari-style frames: (B, H=210, W=160, C=3) uint8 — the only spatial size
    # consistent with the hard-coded Linear(384, 128) after flatten.
    x = jax.random.randint(k_in, (batch, 210, 160, 3), 0, 256, dtype=jnp.int32)
    x = x.astype(jnp.uint8)

    params = init_params(k_par, out_dim)
    pp = prepare_params(params)          # one-time layout / 1/255 folding

    fwd = jax.jit(cnn_forward)
    out = jax.block_until_ready(fwd(x, pp))
    assert out.shape == (batch, out_dim), out.shape

    ref = jax.block_until_ready(reference_forward(x, params))
    max_err = float(jnp.max(jnp.abs(out - ref)))
    assert max_err < 5e-2, f"mismatch vs reference: {max_err}"

    print("KERNEL_OK")
</pallas_src>

<mosaic_0001>
module attributes {stable_mosaic.version = 11 : i64} {
  func.func @_gemm_bias_act_kernel(%arg0: i32, %arg1: memref<760x192xf32, #tpu.memory_space<vmem>>, %arg2: memref<192x32xf32, #tpu.memory_space<vmem>>, %arg3: memref<1x32xf32, #tpu.memory_space<vmem>>, %arg4: memref<760x32xf32, #tpu.memory_space<vmem>>) attributes {dimension_semantics = [#tpu.dimension_semantics<parallel>], iteration_bounds = array<i64: 5>, scalar_prefetch = 0 : i64, scratch_operands = 0 : i64, tpu.core_type = #tpu.core_type<tc>, window_params = [{transform_indices = @transform_0, window_bounds = array<i64: 760, 192>}, {pipeline_mode = #tpu.pipeline_mode<synchronous>, transform_indices = @transform_1, window_bounds = array<i64: 192, 32>}, {pipeline_mode = #tpu.pipeline_mode<synchronous>, transform_indices = @transform_2, window_bounds = array<i64: 1, 32>}, {transform_indices = @transform_3, window_bounds = array<i64: 760, 32>}]} {
    %c0 = arith.constant 0 : index
    %c0_0 = arith.constant 0 : index
    %0 = vector.load %arg1[%c0, %c0_0] : memref<760x192xf32, #tpu.memory_space<vmem>>, vector<760x192xf32>
    %c0_1 = arith.constant 0 : index
    %c0_2 = arith.constant 0 : index
    %1 = vector.load %arg2[%c0_1, %c0_2] : memref<192x32xf32, #tpu.memory_space<vmem>>, vector<192x32xf32>
    %cst = arith.constant dense<0.000000e+00> : vector<760x32xf32>
    %2 = tpu.matmul %0, %1, %cst {dimension_numbers = #tpu.dot_dimension_numbers<[1], [0], [0], [1], [0, 0, 1, 1], [], []>} : vector<760x192xf32>, vector<192x32xf32>, vector<760x32xf32> -> vector<760x32xf32>
    %c0_3 = arith.constant 0 : index
    %c0_4 = arith.constant 0 : index
    %3 = vector.load %arg3[%c0_3, %c0_4] : memref<1x32xf32, #tpu.memory_space<vmem>>, vector<1x32xf32>
    %4 = vector.broadcast %3 : vector<1x32xf32> to vector<760x32xf32>
    %5 = arith.addf %2, %4 : vector<760x32xf32>
    %c0_5 = arith.constant 0 : index
    %c0_6 = arith.constant 0 : index
    %6 = vector.load %arg4[%c0_5, %c0_6] : memref<760x32xf32, #tpu.memory_space<vmem>>, vector<760x32xf32>
    tpu.vector_store %arg4[%c0_5, %c0_6], %5 {strides = array<i32>} : memref<760x32xf32, #tpu.memory_space<vmem>>, vector<760x32xf32>,
    return
  }
  func.func @transform_0(%arg0: i32) -> (i32, i32) {
    %c0_i32 = arith.constant 0 : i32
    %c0_i32_0 = arith.constant 0 : i32
    return %arg0, %c0_i32 : i32, i32
  }
  func.func @transform_1(%arg0: i32) -> (i32, i32) {
    %c0_i32 = arith.constant 0 : i32
    %c0_i32_0 = arith.constant 0 : i32
    %c0_i32_1 = arith.constant 0 : i32
    return %c0_i32, %c0_i32_0 : i32, i32
  }
  func.func @transform_2(%arg0: i32) -> (i32, i32) {
    %c0_i32 = arith.constant 0 : i32
    %c0_i32_0 = arith.constant 0 : i32
    %c0_i32_1 = arith.constant 0 : i32
    return %c0_i32, %c0_i32_0 : i32, i32
  }
  func.func @transform_3(%arg0: i32) -> (i32, i32) {
    %c0_i32 = arith.constant 0 : i32
    %c0_i32_0 = arith.constant 0 : i32
    return %arg0, %c0_i32 : i32, i32
  }
}

module attributes {stable_mosaic.version = 11 : i64} {
  func.func @_pool_relu_kernel(%arg0: memref<50x2x19x64xf32, #tpu.memory_space<vmem>>, %arg1: memref<50x19x32xf32, #tpu.memory_space<vmem>>) attributes {dimension_semantics = [], scalar_prefetch = 0 : i64, scratch_operands = 0 : i64, tpu.core_type = #tpu.core_type<tc>} {
    %c0 = arith.constant 0 : index
    %c0_0 = arith.constant 0 : index
    %c0_1 = arith.constant 0 : index
    %c0_2 = arith.constant 0 : index
    %0 = vector.load %arg0[%c0, %c0_0, %c0_1, %c0_2] : memref<50x2x19x64xf32, #tpu.memory_space<vmem>>, vector<50x2x19x64xf32>
    %1 = vector.extract_strided_slice %0 {offsets = [0, 0, 0, 0], sizes = [50, 1, 19, 64], strides = [1, 1, 1, 1]} : vector<50x2x19x64xf32> to vector<50x1x19x64xf32>
    %2 = vector.shape_cast %1 : vector<50x1x19x64xf32> to vector<50x19x64xf32>
    %3 = vector.extract_strided_slice %0 {offsets = [0, 1, 0, 0], sizes = [50, 1, 19, 64], strides = [1, 1, 1, 1]} : vector<50x2x19x64xf32> to vector<50x1x19x64xf32>
    %4 = vector.shape_cast %3 : vector<50x1x19x64xf32> to vector<50x19x64xf32>
    %5 = arith.maximumf %2, %4 : vector<50x19x64xf32>
    %6 = vector.extract_strided_slice %5 {offsets = [0, 0, 0], sizes = [50, 19, 32], strides = [1, 1, 1]} : vector<50x19x64xf32> to vector<50x19x32xf32>
    %7 = vector.extract_strided_slice %5 {offsets = [0, 0, 32], sizes = [50, 19, 32], strides = [1, 1, 1]} : vector<50x19x64xf32> to vector<50x19x32xf32>
    %8 = arith.maximumf %6, %7 : vector<50x19x32xf32>
    %cst = arith.constant 0.000000e+00 : f32
    %9 = vector.broadcast %cst : f32 to vector<50x19x32xf32>
    %10 = arith.maximumf %8, %9 : vector<50x19x32xf32>
    %c0_3 = arith.constant 0 : index
    %c0_4 = arith.constant 0 : index
    %c0_5 = arith.constant 0 : index
    %11 = vector.load %arg1[%c0_3, %c0_4, %c0_5] : memref<50x19x32xf32, #tpu.memory_space<vmem>>, vector<50x19x32xf32>
    tpu.vector_store %arg1[%c0_3, %c0_4, %c0_5], %10 {strides = array<i32>} : memref<50x19x32xf32, #tpu.memory_space<vmem>>, vector<50x19x32xf32>,
    return
  }
}

module attributes {stable_mosaic.version = 11 : i64} {
  func.func @_pool_relu_kernel(%arg0: memref<10x2x4x128xf32, #tpu.memory_space<vmem>>, %arg1: memref<10x4x64xf32, #tpu.memory_space<vmem>>) attributes {dimension_semantics = [], scalar_prefetch = 0 : i64, scratch_operands = 0 : i64, tpu.core_type = #tpu.core_type<tc>} {
    %c0 = arith.constant 0 : index
    %c0_0 = arith.constant 0 : index
    %c0_1 = arith.constant 0 : index
    %c0_2 = arith.constant 0 : index
    %0 = vector.load %arg0[%c0, %c0_0, %c0_1, %c0_2] : memref<10x2x4x128xf32, #tpu.memory_space<vmem>>, vector<10x2x4x128xf32>
    %1 = vector.extract_strided_slice %0 {offsets = [0, 0, 0, 0], sizes = [10, 1, 4, 128], strides = [1, 1, 1, 1]} : vector<10x2x4x128xf32> to vector<10x1x4x128xf32>
    %2 = vector.shape_cast %1 : vector<10x1x4x128xf32> to vector<10x4x128xf32>
    %3 = vector.extract_strided_slice %0 {offsets = [0, 1, 0, 0], sizes = [10, 1, 4, 128], strides = [1, 1, 1, 1]} : vector<10x2x4x128xf32> to vector<10x1x4x128xf32>
    %4 = vector.shape_cast %3 : vector<10x1x4x128xf32> to vector<10x4x128xf32>
    %5 = arith.maximumf %2, %4 : vector<10x4x128xf32>
    %6 = vector.extract_strided_slice %5 {offsets = [0, 0, 0], sizes = [10, 4, 64], strides = [1, 1, 1]} : vector<10x4x128xf32> to vector<10x4x64xf32>
    %7 = vector.extract_strided_slice %5 {offsets = [0, 0, 64], sizes = [10, 4, 64], strides = [1, 1, 1]} : vector<10x4x128xf32> to vector<10x4x64xf32>
    %8 = arith.maximumf %6, %7 : vector<10x4x64xf32>
    %cst = arith.constant 0.000000e+00 : f32
    %9 = vector.broadcast %cst : f32 to vector<10x4x64xf32>
    %10 = arith.maximumf %8, %9 : vector<10x4x64xf32>
    %c0_3 = arith.constant 0 : index
    %c0_4 = arith.constant 0 : index
    %c0_5 = arith.constant 0 : index
    %11 = vector.load %arg1[%c0_3, %c0_4, %c0_5] : memref<10x4x64xf32, #tpu.memory_space<vmem>>, vector<10x4x64xf32>
    tpu.vector_store %arg1[%c0_3, %c0_4, %c0_5], %10 {strides = array<i32>} : memref<10x4x64xf32, #tpu.memory_space<vmem>>, vector<10x4x64xf32>,
    return
  }
}

module attributes {stable_mosaic.version = 11 : i64} {
  func.func @_gemm_bias_act_kernel(%arg0: i32, %arg1: memref<160x512xf32, #tpu.memory_space<vmem>>, %arg2: memref<512x64xf32, #tpu.memory_space<vmem>>, %arg3: memref<1x64xf32, #tpu.memory_space<vmem>>, %arg4: memref<160x64xf32, #tpu.memory_space<vmem>>) attributes {dimension_semantics = [#tpu.dimension_semantics<parallel>], iteration_bounds = array<i64: 1>, scalar_prefetch = 0 : i64, scratch_operands = 0 : i64, tpu.core_type = #tpu.core_type<tc>, window_params = [{transform_indices = @transform_0, window_bounds = array<i64: 160, 512>}, {pipeline_mode = #tpu.pipeline_mode<synchronous>, transform_indices = @transform_1, window_bounds = array<i64: 512, 64>}, {pipeline_mode = #tpu.pipeline_mode<synchronous>, transform_indices = @transform_2, window_bounds = array<i64: 1, 64>}, {transform_indices = @transform_3, window_bounds = array<i64: 160, 64>}]} {
    %c0 = arith.constant 0 : index
    %c0_0 = arith.constant 0 : index
    %0 = vector.load %arg1[%c0, %c0_0] : memref<160x512xf32, #tpu.memory_space<vmem>>, vector<160x512xf32>
    %c0_1 = arith.constant 0 : index
    %c0_2 = arith.constant 0 : index
    %1 = vector.load %arg2[%c0_1, %c0_2] : memref<512x64xf32, #tpu.memory_space<vmem>>, vector<512x64xf32>
    %cst = arith.constant dense<0.000000e+00> : vector<160x64xf32>
    %2 = tpu.matmul %0, %1, %cst {dimension_numbers = #tpu.dot_dimension_numbers<[1], [0], [0], [1], [0, 0, 1, 1], [], []>} : vector<160x512xf32>, vector<512x64xf32>, vector<160x64xf32> -> vector<160x64xf32>
    %c0_3 = arith.constant 0 : index
    %c0_4 = arith.constant 0 : index
    %3 = vector.load %arg3[%c0_3, %c0_4] : memref<1x64xf32, #tpu.memory_space<vmem>>, vector<1x64xf32>
    %4 = vector.broadcast %3 : vector<1x64xf32> to vector<160x64xf32>
    %5 = arith.addf %2, %4 : vector<160x64xf32>
    %c0_5 = arith.constant 0 : index
    %c0_6 = arith.constant 0 : index
    %6 = vector.load %arg4[%c0_5, %c0_6] : memref<160x64xf32, #tpu.memory_space<vmem>>, vector<160x64xf32>
    tpu.vector_store %arg4[%c0_5, %c0_6], %5 {strides = array<i32>} : memref<160x64xf32, #tpu.memory_space<vmem>>, vector<160x64xf32>,
    return
  }
  func.func @transform_0(%arg0: i32) -> (i32, i32) {
    %c0_i32 = arith.constant 0 : i32
    %c0_i32_0 = arith.constant 0 : i32
    return %arg0, %c0_i32 : i32, i32
  }
  func.func @transform_1(%arg0: i32) -> (i32, i32) {
    %c0_i32 = arith.constant 0 : i32
    %c0_i32_0 = arith.constant 0 : i32
    %c0_i32_1 = arith.constant 0 : i32
    return %c0_i32, %c0_i32_0 : i32, i32
  }
  func.func @transform_2(%arg0: i32) -> (i32, i32) {
    %c0_i32 = arith.constant 0 : i32
    %c0_i32_0 = arith.constant 0 : i32
    %c0_i32_1 = arith.constant 0 : i32
    return %c0_i32, %c0_i32_0 : i32, i32
  }
  func.func @transform_3(%arg0: i32) -> (i32, i32) {
    %c0_i32 = arith.constant 0 : i32
    %c0_i32_0 = arith.constant 0 : i32
    return %arg0, %c0_i32 : i32, i32
  }
}

module attributes {stable_mosaic.version = 11 : i64} {
  func.func @_gemm_bias_act_kernel(%arg0: i32, %arg1: memref<12x576xf32, #tpu.memory_space<vmem>>, %arg2: memref<576x64xf32, #tpu.memory_space<vmem>>, %arg3: memref<1x64xf32, #tpu.memory_space<vmem>>, %arg4: memref<12x64xf32, #tpu.memory_space<vmem>>) attributes {dimension_semantics = [#tpu.dimension_semantics<parallel>], iteration_bounds = array<i64: 1>, scalar_prefetch = 0 : i64, scratch_operands = 0 : i64, tpu.core_type = #tpu.core_type<tc>, window_params = [{transform_indices = @transform_0, window_bounds = array<i64: 12, 576>}, {pipeline_mode = #tpu.pipeline_mode<synchronous>, transform_indices = @transform_1, window_bounds = array<i64: 576, 64>}, {pipeline_mode = #tpu.pipeline_mode<synchronous>, transform_indices = @transform_2, window_bounds = array<i64: 1, 64>}, {transform_indices = @transform_3, window_bounds = array<i64: 12, 64>}]} {
    %c0 = arith.constant 0 : index
    %c0_0 = arith.constant 0 : index
    %0 = vector.load %arg1[%c0, %c0_0] : memref<12x576xf32, #tpu.memory_space<vmem>>, vector<12x576xf32>
    %c0_1 = arith.constant 0 : index
    %c0_2 = arith.constant 0 : index
    %1 = vector.load %arg2[%c0_1, %c0_2] : memref<576x64xf32, #tpu.memory_space<vmem>>, vector<576x64xf32>
    %cst = arith.constant dense<0.000000e+00> : vector<12x64xf32>
    %2 = tpu.matmul %0, %1, %cst {dimension_numbers = #tpu.dot_dimension_numbers<[1], [0], [0], [1], [0, 0, 1, 1], [], []>} : vector<12x576xf32>, vector<576x64xf32>, vector<12x64xf32> -> vector<12x64xf32>
    %c0_3 = arith.constant 0 : index
    %c0_4 = arith.constant 0 : index
    %3 = vector.load %arg3[%c0_3, %c0_4] : memref<1x64xf32, #tpu.memory_space<vmem>>, vector<1x64xf32>
    %4 = vector.broadcast %3 : vector<1x64xf32> to vector<12x64xf32>
    %5 = arith.addf %2, %4 : vector<12x64xf32>
    %cst_5 = arith.constant 0.000000e+00 : f32
    %6 = vector.broadcast %cst_5 : f32 to vector<12x64xf32>
    %7 = arith.maximumf %5, %6 : vector<12x64xf32>
    %c0_6 = arith.constant 0 : index
    %c0_7 = arith.constant 0 : index
    %8 = vector.load %arg4[%c0_6, %c0_7] : memref<12x64xf32, #tpu.memory_space<vmem>>, vector<12x64xf32>
    tpu.vector_store %arg4[%c0_6, %c0_7], %7 {strides = array<i32>} : memref<12x64xf32, #tpu.memory_space<vmem>>, vector<12x64xf32>,
    return
  }
  func.func @transform_0(%arg0: i32) -> (i32, i32) {
    %c0_i32 = arith.constant 0 : i32
    %c0_i32_0 = arith.constant 0 : i32
    return %arg0, %c0_i32 : i32, i32
  }
  func.func @transform_1(%arg0: i32) -> (i32, i32) {
    %c0_i32 = arith.constant 0 : i32
    %c0_i32_0 = arith.constant 0 : i32
    %c0_i32_1 = arith.constant 0 : i32
    return %c0_i32, %c0_i32_0 : i32, i32
  }
  func.func @transform_2(%arg0: i32) -> (i32, i32) {
    %c0_i32 = arith.constant 0 : i32
    %c0_i32_0 = arith.constant 0 : i32
    %c0_i32_1 = arith.constant 0 : i32
    return %c0_i32, %c0_i32_0 : i32, i32
  }
  func.func @transform_3(%arg0: i32) -> (i32, i32) {
    %c0_i32 = arith.constant 0 : i32
    %c0_i32_0 = arith.constant 0 : i32
    return %arg0, %c0_i32 : i32, i32
  }
}

module attributes {stable_mosaic.version = 11 : i64} {
  func.func @_mlp_kernel(%arg0: memref<2x384xf32, #tpu.memory_space<vmem>>, %arg1: memref<384x128xf32, #tpu.memory_space<vmem>>, %arg2: memref<1x128xf32, #tpu.memory_space<vmem>>, %arg3: memref<128x128xf32, #tpu.memory_space<vmem>>, %arg4: memref<1x128xf32, #tpu.memory_space<vmem>>, %arg5: memref<128x6xf32, #tpu.memory_space<vmem>>, %arg6: memref<1x6xf32, #tpu.memory_space<vmem>>, %arg7: memref<2x6xf32, #tpu.memory_space<vmem>>) attributes {dimension_semantics = [], scalar_prefetch = 0 : i64, scratch_operands = 0 : i64, tpu.core_type = #tpu.core_type<tc>} {
    %c0 = arith.constant 0 : index
    %c0_0 = arith.constant 0 : index
    %0 = vector.load %arg0[%c0, %c0_0] : memref<2x384xf32, #tpu.memory_space<vmem>>, vector<2x384xf32>
    %c0_1 = arith.constant 0 : index
    %c0_2 = arith.constant 0 : index
    %1 = vector.load %arg1[%c0_1, %c0_2] : memref<384x128xf32, #tpu.memory_space<vmem>>, vector<384x128xf32>
    %cst = arith.constant dense<0.000000e+00> : vector<2x128xf32>
    %2 = tpu.matmul %0, %1, %cst {dimension_numbers = #tpu.dot_dimension_numbers<[1], [0], [0], [1], [0, 0, 1, 1], [], []>} : vector<2x384xf32>, vector<384x128xf32>, vector<2x128xf32> -> vector<2x128xf32>
    %c0_3 = arith.constant 0 : index
    %c0_4 = arith.constant 0 : index
    %3 = vector.load %arg2[%c0_3, %c0_4] : memref<1x128xf32, #tpu.memory_space<vmem>>, vector<1x128xf32>
    %4 = vector.broadcast %3 : vector<1x128xf32> to vector<2x128xf32>
    %5 = arith.addf %2, %4 : vector<2x128xf32>
    %cst_5 = arith.constant 0.000000e+00 : f32
    %6 = vector.broadcast %cst_5 : f32 to vector<2x128xf32>
    %7 = arith.maximumf %5, %6 : vector<2x128xf32>
    %c0_6 = arith.constant 0 : index
    %c0_7 = arith.constant 0 : index
    %8 = vector.load %arg3[%c0_6, %c0_7] : memref<128x128xf32, #tpu.memory_space<vmem>>, vector<128x128xf32>
    %cst_8 = arith.constant dense<0.000000e+00> : vector<2x128xf32>
    %9 = tpu.matmul %7, %8, %cst_8 {dimension_numbers = #tpu.dot_dimension_numbers<[1], [0], [0], [1], [0, 0, 1, 1], [], []>} : vector<2x128xf32>, vector<128x128xf32>, vector<2x128xf32> -> vector<2x128xf32>
    %c0_9 = arith.constant 0 : index
    %c0_10 = arith.constant 0 : index
    %10 = vector.load %arg4[%c0_9, %c0_10] : memref<1x128xf32, #tpu.memory_space<vmem>>, vector<1x128xf32>
    %11 = vector.broadcast %10 : vector<1x128xf32> to vector<2x128xf32>
    %12 = arith.addf %9, %11 : vector<2x128xf32>
    %cst_11 = arith.constant 0.000000e+00 : f32
    %13 = vector.broadcast %cst_11 : f32 to vector<2x128xf32>
    %14 = arith.maximumf %12, %13 : vector<2x128xf32>
    %c0_12 = arith.constant 0 : index
    %c0_13 = arith.constant 0 : index
    %15 = vector.load %arg5[%c0_12, %c0_13] : memref<128x6xf32, #tpu.memory_space<vmem>>, vector<128x6xf32>
    %cst_14 = arith.constant dense<0.000000e+00> : vector<2x6xf32>
    %16 = tpu.matmul %14, %15, %cst_14 {dimension_numbers = #tpu.dot_dimension_numbers<[1], [0], [0], [1], [0, 0, 1, 1], [], []>} : vector<2x128xf32>, vector<128x6xf32>, vector<2x6xf32> -> vector<2x6xf32>
    %c0_15 = arith.constant 0 : index
    %c0_16 = arith.constant 0 : index
    %17 = vector.load %arg6[%c0_15, %c0_16] : memref<1x6xf32, #tpu.memory_space<vmem>>, vector<1x6xf32>
    %18 = vector.broadcast %17 : vector<1x6xf32> to vector<2x6xf32>
    %19 = arith.addf %16, %18 : vector<2x6xf32>
    %c0_17 = arith.constant 0 : index
    %c0_18 = arith.constant 0 : index
    %20 = vector.load %arg7[%c0_17, %c0_18] : memref<2x6xf32, #tpu.memory_space<vmem>>, vector<2x6xf32>
    tpu.vector_store %arg7[%c0_17, %c0_18], %19 {strides = array<i32>} : memref<2x6xf32, #tpu.memory_space<vmem>>, vector<2x6xf32>,
    return
  }
}

</mosaic_0001>

<llo_original>
// kernel: cnn_forward.6
$region0: #{cnn_forward.6}
  #allocation0 [shape = 'u32[]', space=smem, size = 0x4, offset = 0x4, fixed_abs, tag = 'smem constant byte address 0x4 - core index']
  #allocation1 [shape = 'u32[144,128]{1,0:T(1,128)}', space=vmem, size = 0x12000, scoped, tag = 'internal scratch']
  %s0 = inlined_call_operand.vmem [shape: f32[3800,192], index: 0, kind: input, shape index: {}]
  %s1 = inlined_call_operand.vmem [shape: f32[192,32], index: 1, kind: input, shape index: {}]
  %s2 = inlined_call_operand.vmem [shape: f32[1,32], index: 2, kind: input, shape index: {}]
  %s3 = inlined_call_operand.vmem [shape: f32[3800,32], index: 3, kind: output, shape index: {}]
  %s4 = sld [smem:[#allocation0]]
  $region45: #{cnn_forward.6} parent=0
    _
  %s6 = ssub.s32 1, %s4
  %s7 = scalar_select 0, %s6, %s4
  loop: start=0, step=1, limit=7
  $region2: #{cnn_forward.6} parent=0 // loop_pre_header
    _
  $region3: #{cnn_forward.6} parent=0 // loop_header
    %s9 = sphi 0, %s13
    %p10 = scmp.ge.s32.totalorder %s9, 7
    %s19 = sphi 0, %s21
    %s22 = sphi 0, %s19
    %s23 = sphi 0, %s22
    %s39 = sphi 0, %s23
    %s43 = sphi 0, %s43
    %s45 = sphi 0, %s43
    %s46 = sphi 0, %s45
    %s60 = sphi 0, %s46
    %s64 = sphi 0, %s64
    %s66 = sphi 0, %s64
    %s67 = sphi 0, %s66
    %s81 = sphi 0, %s67
    %s87 = sphi 0, %s89
    %s90 = sphi 0, %s87
    %s91 = sphi 0, %s90
    %s107 = sphi 0, %s91
  $region4: #{cnn_forward.6} parent=0 // loop_header_branch
    %12 = sbr.rel (%p10) target = $region8
  $region5: #{cnn_forward.6} parent=0 // loop_body
    %s14 = ssub.s32 %s9, 1
    %s15 = ssub.s32 %s9, 2
    %s16 = sadd.s32 %s9, 1
    %s17 = ssub.s32 %s9, %s16
    %p18 = scmp.eq.s32.totalorder %s17, 0
    %s20 = sadd.s32 %s19, 1
    %s21 = scalar_select %p18, %s19, %s20
    %p24 = pneg %p18
    %p25 = scmp.eq.s32.totalorder %s9, 4
    %p26 = por %p24, %p25
    %p27 = scmp.ne.s32.totalorder %s19, %s22
    %p28 = scmp.eq.s32.totalorder %s9, 0
    %p29 = por %p27, %p28
    %p30 = scmp.ne.s32.totalorder %s19, %s22
    %p31 = scmp.eq.s32.totalorder %s14, 4
    %p32 = por %p30, %p31
    %p33 = scmp.ne.s32.totalorder %s22, %s23
    %p34 = scmp.eq.s32.totalorder %s14, 0
    %p35 = por %p33, %p34
    %p36 = scmp.ne.s32.totalorder %s22, %s23
    %p37 = scmp.eq.s32.totalorder %s15, 4
    %p38 = por %p36, %p37
    %p40 = scmp.ne.s32.totalorder %s23, %s39
    %p41 = scmp.eq.s32.totalorder %s15, 0
    %p42 = por %p40, %p41
    %s44 = sadd.s32 %s43, 1
    %p47 = scmp.eq.s32.totalorder %s9, 4
    %p48 = scmp.ne.s32.totalorder %s43, %s45
    %p49 = scmp.eq.s32.totalorder %s9, 0
    %p50 = por %p48, %p49
    %p51 = scmp.ne.s32.totalorder %s43, %s45
    %p52 = scmp.eq.s32.totalorder %s14, 4
    %p53 = por %p51, %p52
    %p54 = scmp.ne.s32.totalorder %s45, %s46
    %p55 = scmp.eq.s32.totalorder %s14, 0
    %p56 = por %p54, %p55
    %p57 = scmp.ne.s32.totalorder %s45, %s46
    %p58 = scmp.eq.s32.totalorder %s15, 4
    %p59 = por %p57, %p58
    %p61 = scmp.ne.s32.totalorder %s46, %s60
    %p62 = scmp.eq.s32.totalorder %s15, 0
    %p63 = por %p61, %p62
    %s65 = sadd.s32 %s64, 1
    %p68 = scmp.eq.s32.totalorder %s9, 4
    %p69 = scmp.ne.s32.totalorder %s64, %s66
    %p70 = scmp.eq.s32.totalorder %s9, 0
    %p71 = por %p69, %p70
    %p72 = scmp.ne.s32.totalorder %s64, %s66
    %p73 = scmp.eq.s32.totalorder %s14, 4
    %p74 = por %p72, %p73
    %p75 = scmp.ne.s32.totalorder %s66, %s67
    %p76 = scmp.eq.s32.totalorder %s14, 0
    %p77 = por %p75, %p76
    %p78 = scmp.ne.s32.totalorder %s66, %s67
    %p79 = scmp.eq.s32.totalorder %s15, 4
    %p80 = por %p78, %p79
    %p82 = scmp.ne.s32.totalorder %s67, %s81
    %p83 = scmp.eq.s32.totalorder %s15, 0
    %p84 = por %p82, %p83
    %s85 = ssub.s32 %s9, %s16
    %p86 = scmp.eq.s32.totalorder %s85, 0
    %s88 = sadd.s32 %s87, 1
    %s89 = scalar_select %p86, %s87, %s88
    %p92 = pneg %p86
    %p93 = scmp.eq.s32.totalorder %s9, 4
    %p94 = por %p92, %p93
    %p95 = scmp.ne.s32.totalorder %s87, %s90
    %p96 = scmp.eq.s32.totalorder %s9, 0
    %p97 = por %p95, %p96
    %p98 = scmp.ne.s32.totalorder %s87, %s90
    %p99 = scmp.eq.s32.totalorder %s14, 4
    %p100 = por %p98, %p99
    %p101 = scmp.ne.s32.totalorder %s90, %s91
    %p102 = scmp.eq.s32.totalorder %s14, 0
    %p103 = por %p101, %p102
    %p104 = scmp.ne.s32.totalorder %s90, %s91
    %p105 = scmp.eq.s32.totalorder %s15, 4
    %p106 = por %p104, %p105
    %p108 = scmp.ne.s32.totalorder %s91, %s107
    %p109 = scmp.eq.s32.totalorder %s15, 0
    %p110 = por %p108, %p109
    %p111 = scmp.le.s32.totalorder 1, %s9
    %p112 = scmp.lt.s32.totalorder %s9, 6
    %p113 = pnand %p111, %p112
    %p114 = pneg %p113
    // Predicated region
    $region9: #{cnn_forward.6} parent=5 // pred_check
      _
    $region10: #{cnn_forward.6} parent=5 // pred_check_branch
      %116 = sbr.rel (%p113) target = $region12
    $region11: #{cnn_forward.6} parent=5 // pred_region
      %s117 = ssub.s32 %s9, 1
      // Predicated region
      $region13: #{cnn_forward.6} parent=11 // pred_check
        %p118 = pneg %p56
      $region14: #{cnn_forward.6} parent=11 // pred_check_branch
        %120 = sbr.rel (%p118) target = $region16
      $region15: #{cnn_forward.6} parent=11 // pred_region
        _
      $region16: #{cnn_forward.6} parent=11 // pred_fallthru
        _
      // Predicated region
      $region17: #{cnn_forward.6} parent=11 // pred_check
        %p121 = pneg %p77
      $region18: #{cnn_forward.6} parent=11 // pred_check_branch
        %123 = sbr.rel (%p121) target = $region20
      $region19: #{cnn_forward.6} parent=11 // pred_region
        _
      $region20: #{cnn_forward.6} parent=11 // pred_fallthru
        _
    $region12: #{cnn_forward.6} parent=5 // pred_fallthru
      _
    %p124 = scmp.lt.s32.totalorder %s9, 5
    // Predicated region
    $region21: #{cnn_forward.6} parent=5 // pred_check
      %p125 = pneg %p124
    $region22: #{cnn_forward.6} parent=5 // pred_check_branch
      %127 = sbr.rel (%p125) target = $region24
    $region23: #{cnn_forward.6} parent=5 // pred_region
      // Predicated region
      $region25: #{cnn_forward.6} parent=23 // pred_check
        %p128 = pneg %p29
      $region26: #{cnn_forward.6} parent=23 // pred_check_branch
        %130 = sbr.rel (%p128) target = $region28
      $region27: #{cnn_forward.6} parent=23 // pred_region
        %s131 = smul.u32 95, %s9
        %p132 = scmp.lt.s32.totalorder %s131, 474
        %s133 = scalar_select %p132, %s131, 474
        %s134 = smul.addr %s133, 2
        %s135 = smul.addr %s134, 8
        %s136 = scalar_lea.vmem %s0, %s135
        %s137 = smul.u32 95, %s9
      $region28: #{cnn_forward.6} parent=23 // pred_fallthru
        _
    $region24: #{cnn_forward.6} parent=5 // pred_fallthru
      _
    %p138 = scmp.le.s32.totalorder 1, %s9
    %p139 = scmp.lt.s32.totalorder %s9, 6
    %p140 = pnand %p138, %p139
    %p141 = pneg %p140
    // Predicated region
    $region29: #{cnn_forward.6} parent=5 // pred_check
      _
    $region30: #{cnn_forward.6} parent=5 // pred_check_branch
      %143 = sbr.rel (%p140) target = $region32
    $region31: #{cnn_forward.6} parent=5 // pred_region
      %s144 = ssub.s32 %s9, 1
      %s145 = smul.u32 95, %s14
      %p146 = scmp.lt.s32.totalorder %s145, 474
      %s147 = scalar_select %p146, %s145, 474
      %s148 = smul.addr %s147, 2
      %s149 = smul.addr %s148, 8
      %s150 = scalar_lea.vmem %s0, %s149
      %p151 = pneg %p35
      %p152 = pneg %p32
      %p153 = pneg %p56
      %p154 = pneg %p53
      %p155 = pneg %p77
      %p156 = pneg %p74
      %p157 = pneg %p103
      %p158 = pneg %p100
      %s159 = smul.u32 95, %s14
      %p160 = scmp.lt.s32.totalorder %s159, 474
      %s161 = scalar_select %p160, %s159, 474
      %s162 = smul.addr %s161, 8
      %s163 = scalar_lea.vmem %s3, %s162
      %s164 = smul.u32 95, %s14
      %p165 = scmp.lt.s32.totalorder %s164, 474
      %s166 = scalar_select %p165, %s164, 474
      %s167 = smul.addr %s166, 2
      %s168 = smul.addr %s167, 8
      %s169 = scalar_lea.vmem %s0, %s168
      %s170 = smul.u32 95, %s14
      %s171 = smul.u32 95, %s14
      %p172 = scmp.lt.s32.totalorder %s171, 474
      %s173 = scalar_select %p172, %s171, 474
      %s174 = smul.addr %s173, 8
      %s175 = scalar_lea.vmem %s3, %s174
      %s176 = smul.u32 95, %s14
      %v177 = vld [vmem:[%s169] sm:$0xff]
      %v178 = vld [vmem:[%s169 + $0x8] sm:$0xff]
      %v179 = vld [vmem:[%s169 + $0x10] sm:$0xff]
      %v180 = vld [vmem:[%s169 + $0x18] sm:$0xff]
      %v181 = vld [vmem:[%s169 + $0x20] sm:$0xff]
      %v182 = vld [vmem:[%s169 + $0x28] sm:$0xff]
      %v183 = vld [vmem:[%s169 + $0x30] sm:$0xff]
      %v184 = vld [vmem:[%s169 + $0x38] sm:$0xff]
      %v185 = vld [vmem:[%s169 + $0x40] sm:$0xff]
      %v186 = vld [vmem:[%s169 + $0x48] sm:$0xff]
      %v187 = vld [vmem:[%s169 + $0x50] sm:$0xff]
      %v188 = vld [vmem:[%s169 + $0x58] sm:$0xff]
      %v189 = vld [vmem:[%s169 + $0x60] sm:$0xff]
      %v190 = vld [vmem:[%s169 + $0x68] sm:$0xff]
      %v191 = vld [vmem:[%s169 + $0x70] sm:$0xff]
      %v192 = vld [vmem:[%s169 + $0x78] sm:$0xff]
      %v193 = vld [vmem:[%s169 + $0x80] sm:$0xff]
      %v194 = vld [vmem:[%s169 + $0x88] sm:$0xff]
      %v195 = vld [vmem:[%s169 + $0x90] sm:$0xff]
      %v196 = vld [vmem:[%s169 + $0x98] sm:$0xff]
      %v197 = vld [vmem:[%s169 + $0xa0] sm:$0xff]
      %v198 = vld [vmem:[%s169 + $0xa8] sm:$0xff]
      %v199 = vld [vmem:[%s169 + $0xb0] sm:$0xff]
      %v200 = vld [vmem:[%s169 + $0xb8] sm:$0xff]
      %v201 = vld [vmem:[%s169 + $0xc0] sm:$0xff]
      %v202 = vld [vmem:[%s169 + $0xc8] sm:$0xff]
      %v203 = vld [vmem:[%s169 + $0xd0] sm:$0xff]
      %v204 = vld [vmem:[%s169 + $0xd8] sm:$0xff]
      %v205 = vld [vmem:[%s169 + $0xe0] sm:$0xff]
      %v206 = vld [vmem:[%s169 + $0xe8] sm:$0xff]
      %v207 = vld [vmem:[%s169 + $0xf0] sm:$0xff]
      %v208 = vld [vmem:[%s169 + $0xf8] sm:$0xff]
      %v209 = vld [vmem:[%s169 + $0x100] sm:$0xff]
      %v210 = vld [vmem:[%s169 + $0x108] sm:$0xff]
      %v211 = vld [vmem:[%s169 + $0x110] sm:$0xff]
      %v212 = vld [vmem:[%s169 + $0x118] sm:$0xff]
      %v213 = vld [vmem:[%s169 + $0x120] sm:$0xff]
      %v214 = vld [vmem:[%s169 + $0x128] sm:$0xff]
      %v215 = vld [vmem:[%s169 + $0x130] sm:$0xff]
      %v216 = vld [vmem:[%s169 + $0x138] sm:$0xff]
      %v217 = vld [vmem:[%s169 + $0x140] sm:$0xff]
      %v218 = vld [vmem:[%s169 + $0x148] sm:$0xff]
      %v219 = vld [vmem:[%s169 + $0x150] sm:$0xff]
      %v220 = vld [vmem:[%s169 + $0x158] sm:$0xff]
      %v221 = vld [vmem:[%s169 + $0x160] sm:$0xff]
      %v222 = vld [vmem:[%s169 + $0x168] sm:$0xff]
      %v223 = vld [vmem:[%s169 + $0x170] sm:$0xff]
      %v224 = vld [vmem:[%s169 + $0x178] sm:$0xff]
      %v225 = vld [vmem:[%s169 + $0x180] sm:$0xff]
      %v226 = vld [vmem:[%s169 + $0x188] sm:$0xff]
      %v227 = vld [vmem:[%s169 + $0x190] sm:$0xff]
      %v228 = vld [vmem:[%s169 + $0x198] sm:$0xff]
      %v229 = vld [vmem:[%s169 + $0x1a0] sm:$0xff]
      %v230 = vld [vmem:[%s169 + $0x1a8] sm:$0xff]
      %v231 = vld [vmem:[%s169 + $0x1b0] sm:$0xff]
      %v232 = vld [vmem:[%s169 + $0x1b8] sm:$0xff]
      %v233 = vld [vmem:[%s169 + $0x1c0] sm:$0xff]
      %v234 = vld [vmem:[%s169 + $0x1c8] sm:$0xff]
      %v235 = vld [vmem:[%s169 + $0x1d0] sm:$0xff]
      %v236 = vld [vmem:[%s169 + $0x1d8] sm:$0xff]
      %v237 = vld [vmem:[%s169 + $0x1e0] sm:$0xff]
      %v238 = vld [vmem:[%s169 + $0x1e8] sm:$0xff]
      %v239 = vld [vmem:[%s169 + $0x1f0] sm:$0xff]
      %v240 = vld [vmem:[%s169 + $0x1f8] sm:$0xff]
      %v241 = vld [vmem:[%s169 + $0x200] sm:$0xff]
      %v242 = vld [vmem:[%s169 + $0x208] sm:$0xff]
      %v243 = vld [vmem:[%s169 + $0x210] sm:$0xff]
      %v244 = vld [vmem:[%s169 + $0x218] sm:$0xff]
      %v245 = vld [vmem:[%s169 + $0x220] sm:$0xff]
      %v246 = vld [vmem:[%s169 + $0x228] sm:$0xff]
      %v247 = vld [vmem:[%s169 + $0x230] sm:$0xff]
      %v248 = vld [vmem:[%s169 + $0x238] sm:$0xff]
      %v249 = vld [vmem:[%s169 + $0x240] sm:$0xff]
      %v250 = vld [vmem:[%s169 + $0x248] sm:$0xff]
      %v251 = vld [vmem:[%s169 + $0x250] sm:$0xff]
      %v252 = vld [vmem:[%s169 + $0x258] sm:$0xff]
      %v253 = vld [vmem:[%s169 + $0x260] sm:$0xff]
      %v254 = vld [vmem:[%s169 + $0x268] sm:$0xff]
      %v255 = vld [vmem:[%s169 + $0x270] sm:$0xff]
      %v256 = vld [vmem:[%s169 + $0x278] sm:$0xff]
      %v257 = vld [vmem:[%s169 + $0x280] sm:$0xff]
      %v258 = vld [vmem:[%s169 + $0x288] sm:$0xff]
      %v259 = vld [vmem:[%s169 + $0x290] sm:$0xff]
      %v260 = vld [vmem:[%s169 + $0x298] sm:$0xff]
      %v261 = vld [vmem:[%s169 + $0x2a0] sm:$0xff]
      %v262 = vld [vmem:[%s169 + $0x2a8] sm:$0xff]
      %v263 = vld [vmem:[%s169 + $0x2b0] sm:$0xff]
      %v264 = vld [vmem:[%s169 + $0x2b8] sm:$0xff]
      %v265 = vld [vmem:[%s169 + $0x2c0] sm:$0xff]
      %v266 = vld [vmem:[%s169 + $0x2c8] sm:$0xff]
      %v267 = vld [vmem:[%s169 + $0x2d0] sm:$0xff]
      %v268 = vld [vmem:[%s169 + $0x2d8] sm:$0xff]
      %v269 = vld [vmem:[%s169 + $0x2e0] sm:$0xff]
      %v270 = vld [vmem:[%s169 + $0x2e8] sm:$0xff]
      %v271 = vld [vmem:[%s169 + $0x2f0] sm:$0xff]
      %v272 = vld [vmem:[%s169 + $0x2f8] sm:$0xff]
      %v273 = vld [vmem:[%s169 + $0x300] sm:$0xff]
      %v274 = vld [vmem:[%s169 + $0x308] sm:$0xff]
      %v275 = vld [vmem:[%s169 + $0x310] sm:$0xff]
      %v276 = vld [vmem:[%s169 + $0x318] sm:$0xff]
      %v277 = vld [vmem:[%s169 + $0x320] sm:$0xff]
      %v278 = vld [vmem:[%s169 + $0x328] sm:$0xff]
      %v279 = vld [vmem:[%s169 + $0x330] sm:$0xff]
      %v280 = vld [vmem:[%s169 + $0x338] sm:$0xff]
      %v281 = vld [vmem:[%s169 + $0x340] sm:$0xff]
      %v282 = vld [vmem:[%s169 + $0x348] sm:$0xff]
      %v283 = vld [vmem:[%s169 + $0x350] sm:$0xff]
      %v284 = vld [vmem:[%s169 + $0x358] sm:$0xff]
      %v285 = vld [vmem:[%s169 + $0x360] sm:$0xff]
      %v286 = vld [vmem:[%s169 + $0x368] sm:$0xff]
      %v287 = vld [vmem:[%s169 + $0x370] sm:$0xff]
      %v288 = vld [vmem:[%s169 + $0x378] sm:$0xff]
      %v289 = vld [vmem:[%s169 + $0x380] sm:$0xff]
      %v290 = vld [vmem:[%s169 + $0x388] sm:$0xff]
      %v291 = vld [vmem:[%s169 + $0x390] sm:$0xff]
      %v292 = vld [vmem:[%s169 + $0x398] sm:$0xff]
      %v293 = vld [vmem:[%s169 + $0x3a0] sm:$0xff]
      %v294 = vld [vmem:[%s169 + $0x3a8] sm:$0xff]
      %v295 = vld [vmem:[%s169 + $0x3b0] sm:$0xff]
      %v296 = vld [vmem:[%s169 + $0x3b8] sm:$0xff]
      %v297 = vld [vmem:[%s169 + $0x3c0] sm:$0xff]
      %v298 = vld [vmem:[%s169 + $0x3c8] sm:$0xff]
      %v299 = vld [vmem:[%s169 + $0x3d0] sm:$0xff]
      %v300 = vld [vmem:[%s169 + $0x3d8] sm:$0xff]
      %v301 = vld [vmem:[%s169 + $0x3e0] sm:$0xff]
      %v302 = vld [vmem:[%s169 + $0x3e8] sm:$0xff]
      %v303 = vld [vmem:[%s169 + $0x3f0] sm:$0xff]
      %v304 = vld [vmem:[%s169 + $0x3f8] sm:$0xff]
      %v305 = vld [vmem:[%s169 + $0x400] sm:$0xff]
      %v306 = vld [vmem:[%s169 + $0x408] sm:$0xff]
      %v307 = vld [vmem:[%s169 + $0x410] sm:$0xff]
      %v308 = vld [vmem:[%s169 + $0x418] sm:$0xff]
      %v309 = vld [vmem:[%s169 + $0x420] sm:$0xff]
      %v310 = vld [vmem:[%s169 + $0x428] sm:$0xff]
      %v311 = vld [vmem:[%s169 + $0x430] sm:$0xff]
      %v312 = vld [vmem:[%s169 + $0x438] sm:$0xff]
      %v313 = vld [vmem:[%s169 + $0x440] sm:$0xff]
      %v314 = vld [vmem:[%s169 + $0x448] sm:$0xff]
      %v315 = vld [vmem:[%s169 + $0x450] sm:$0xff]
      %v316 = vld [vmem:[%s169 + $0x458] sm:$0xff]
      %v317 = vld [vmem:[%s169 + $0x460] sm:$0xff]
      %v318 = vld [vmem:[%s169 + $0x468] sm:$0xff]
      %v319 = vld [vmem:[%s169 + $0x470] sm:$0xff]
      %v320 = vld [vmem:[%s169 + $0x478] sm:$0xff]
      %v321 = vld [vmem:[%s169 + $0x480] sm:$0xff]
      %v322 = vld [vmem:[%s169 + $0x488] sm:$0xff]
      %v323 = vld [vmem:[%s169 + $0x490] sm:$0xff]
      %v324 = vld [vmem:[%s169 + $0x498] sm:$0xff]
      %v325 = vld [vmem:[%s169 + $0x4a0] sm:$0xff]
      %v326 = vld [vmem:[%s169 + $0x4a8] sm:$0xff]
      %v327 = vld [vmem:[%s169 + $0x4b0] sm:$0xff]
      %v328 = vld [vmem:[%s169 + $0x4b8] sm:$0xff]
      %v329 = vld [vmem:[%s169 + $0x4c0] sm:$0xff]
      %v330 = vld [vmem:[%s169 + $0x4c8] sm:$0xff]
      %v331 = vld [vmem:[%s169 + $0x4d0] sm:$0xff]
      %v332 = vld [vmem:[%s169 + $0x4d8] sm:$0xff]
      %v333 = vld [vmem:[%s169 + $0x4e0] sm:$0xff]
      %v334 = vld [vmem:[%s169 + $0x4e8] sm:$0xff]
      %v335 = vld [vmem:[%s169 + $0x4f0] sm:$0xff]
      %v336 = vld [vmem:[%s169 + $0x4f8] sm:$0xff]
      %v337 = vld [vmem:[%s169 + $0x500] sm:$0xff]
      %v338 = vld [vmem:[%s169 + $0x508] sm:$0xff]
      %v339 = vld [vmem:[%s169 + $0x510] sm:$0xff]
      %v340 = vld [vmem:[%s169 + $0x518] sm:$0xff]
      %v341 = vld [vmem:[%s169 + $0x520] sm:$0xff]
      %v342 = vld [vmem:[%s169 + $0x528] sm:$0xff]
      %v343 = vld [vmem:[%s169 + $0x530] sm:$0xff]
      %v344 = vld [vmem:[%s169 + $0x538] sm:$0xff]
      %v345 = vld [vmem:[%s169 + $0x540] sm:$0xff]
      %v346 = vld [vmem:[%s169 + $0x548] sm:$0xff]
      %v347 = vld [vmem:[%s169 + $0x550] sm:$0xff]
      %v348 = vld [vmem:[%s169 + $0x558] sm:$0xff]
      %v349 = vld [vmem:[%s169 + $0x560] sm:$0xff]
      %v350 = vld [vmem:[%s169 + $0x568] sm:$0xff]
      %v351 = vld [vmem:[%s169 + $0x570] sm:$0xff]
      %v352 = vld [vmem:[%s169 + $0x578] sm:$0xff]
      %v353 = vld [vmem:[%s169 + $0x580] sm:$0xff]
      %v354 = vld [vmem:[%s169 + $0x588] sm:$0xff]
      %v355 = vld [vmem:[%s169 + $0x590] sm:$0xff]
      %v356 = vld [vmem:[%s169 + $0x598] sm:$0xff]
      %v357 = vld [vmem:[%s169 + $0x5a0] sm:$0xff]
      %v358 = vld [vmem:[%s169 + $0x5a8] sm:$0xff]
      %v359 = vld [vmem:[%s169 + $0x5b0] sm:$0xff]
      %v360 = vld [vmem:[%s169 + $0x5b8] sm:$0xff]
      %v361 = vld [vmem:[%s169 + $0x5c0] sm:$0xff]
      %v362 = vld [vmem:[%s169 + $0x5c8] sm:$0xff]
      %v363 = vld [vmem:[%s169 + $0x5d0] sm:$0xff]
      %v364 = vld [vmem:[%s169 + $0x5d8] sm:$0xff]
      %v365 = vld [vmem:[%s169 + $0x5e0] sm:$0xff]
      %v366 = vld [vmem:[%s169 + $0x5e8] sm:$0xff]
      %v367 = vld [vmem:[%s1] sm:$0xff]
      %v368 = vld [vmem:[%s1 + $0x8] sm:$0xff]
      %v369 = vld [vmem:[%s1 + $0x10] sm:$0xff]
      %v370 = vld [vmem:[%s1 + $0x18] sm:$0xff]
      %v371 = vld [vmem:[%s1 + $0x20] sm:$0xff]
      %v372 = vld [vmem:[%s1 + $0x28] sm:$0xff]
      %v373 = vld [vmem:[%s1 + $0x30] sm:$0xff]
      %v374 = vld [vmem:[%s1 + $0x38] sm:$0xff]
      %v375 = vld [vmem:[%s1 + $0x40] sm:$0xff]
      %v376 = vld [vmem:[%s1 + $0x48] sm:$0xff]
      %v377 = vld [vmem:[%s1 + $0x50] sm:$0xff]
      %v378 = vld [vmem:[%s1 + $0x58] sm:$0xff]
      %v379 = vld [vmem:[%s1 + $0x60] sm:$0xff]
      %v380 = vld [vmem:[%s1 + $0x68] sm:$0xff]
      %v381 = vld [vmem:[%s1 + $0x70] sm:$0xff]
      %v382 = vld [vmem:[%s1 + $0x78] sm:$0xff]
      %v383 = vld [vmem:[%s1 + $0x80] sm:$0xff]
      %v384 = vld [vmem:[%s1 + $0x88] sm:$0xff]
      %v385 = vld [vmem:[%s1 + $0x90] sm:$0xff]
      %v386 = vld [vmem:[%s1 + $0x98] sm:$0xff]
      %v387 = vld [vmem:[%s1 + $0xa0] sm:$0xff]
      %v388 = vld [vmem:[%s1 + $0xa8] sm:$0xff]
      %v389 = vld [vmem:[%s1 + $0xb0] sm:$0xff]
      %v390 = vld [vmem:[%s1 + $0xb8] sm:$0xff]
      %v391 = vld [vmem:[%s2] sm:$0x1]
      %v393 = vlaneseq
      %v394 = vshrl.u32 %v393, 7
      %v395 = vsub.s32 0, %v394
      %v396 = vrot.slane %v391, %v395
      %vm398 = vcmask 523264
      %v400 = vsel %vm398, %v178, 0
      %v403 = vsel %vm398, %v180, 0
      %v406 = vsel %vm398, %v182, 0
      %v409 = vsel %vm398, %v184, 0
      %v412 = vsel %vm398, %v186, 0
      %v415 = vsel %vm398, %v188, 0
      %v418 = vsel %vm398, %v190, 0
      %v421 = vsel %vm398, %v192, 0
      %v424 = vsel %vm398, %v194, 0
      %v427 = vsel %vm398, %v196, 0
      %v430 = vsel %vm398, %v198, 0
      %v433 = vsel %vm398, %v200, 0
      %v436 = vsel %vm398, %v202, 0
      %v439 = vsel %vm398, %v204, 0
      %v442 = vsel %vm398, %v206, 0
      %v445 = vsel %vm398, %v208, 0
      %v448 = vsel %vm398, %v210, 0
      %v451 = vsel %vm398, %v212, 0
      %v454 = vsel %vm398, %v214, 0
      %v457 = vsel %vm398, %v216, 0
      %v460 = vsel %vm398, %v218, 0
      %v463 = vsel %vm398, %v220, 0
      %v466 = vsel %vm398, %v222, 0
      %v469 = vsel %vm398, %v224, 0
      %v472 = vsel %vm398, %v226, 0
      %v475 = vsel %vm398, %v228, 0
      %v478 = vsel %vm398, %v230, 0
      %v481 = vsel %vm398, %v232, 0
      %v484 = vsel %vm398, %v234, 0
      %v487 = vsel %vm398, %v236, 0
      %v490 = vsel %vm398, %v238, 0
      %v493 = vsel %vm398, %v240, 0
      %v496 = vsel %vm398, %v242, 0
      %v499 = vsel %vm398, %v244, 0
      %v502 = vsel %vm398, %v246, 0
      %v505 = vsel %vm398, %v248, 0
      %v508 = vsel %vm398, %v250, 0
      %v511 = vsel %vm398, %v252, 0
      %v514 = vsel %vm398, %v254, 0
      %v517 = vsel %vm398, %v256, 0
      %v520 = vsel %vm398, %v258, 0
      %v523 = vsel %vm398, %v260, 0
      %v526 = vsel %vm398, %v262, 0
      %v529 = vsel %vm398, %v264, 0
      %v532 = vsel %vm398, %v266, 0
      %v535 = vsel %vm398, %v268, 0
      %v538 = vsel %vm398, %v270, 0
      %v541 = vsel %vm398, %v272, 0
      %v544 = vsel %vm398, %v274, 0
      %v547 = vsel %vm398, %v276, 0
      %v550 = vsel %vm398, %v278, 0
      %v553 = vsel %vm398, %v280, 0
      %v556 = vsel %vm398, %v282, 0
      %v559 = vsel %vm398, %v284, 0
      %v562 = vsel %vm398, %v286, 0
      %v565 = vsel %vm398, %v288, 0
      %v568 = vsel %vm398, %v290, 0
      %v571 = vsel %vm398, %v292, 0
      %v574 = vsel %vm398, %v294, 0
      %v577 = vsel %vm398, %v296, 0
      %v580 = vsel %vm398, %v298, 0
      %v583 = vsel %vm398, %v300, 0
      %v586 = vsel %vm398, %v302, 0
      %v589 = vsel %vm398, %v304, 0
      %v592 = vsel %vm398, %v306, 0
      %v595 = vsel %vm398, %v308, 0
      %v598 = vsel %vm398, %v310, 0
      %v601 = vsel %vm398, %v312, 0
      %v604 = vsel %vm398, %v314, 0
      %v607 = vsel %vm398, %v316, 0
      %v610 = vsel %vm398, %v318, 0
      %v613 = vsel %vm398, %v320, 0
      %v616 = vsel %vm398, %v322, 0
      %v619 = vsel %vm398, %v324, 0
      %v622 = vsel %vm398, %v326, 0
      %v625 = vsel %vm398, %v328, 0
      %v628 = vsel %vm398, %v330, 0
      %v631 = vsel %vm398, %v332, 0
      %v634 = vsel %vm398, %v334, 0
      %v637 = vsel %vm398, %v336, 0
      %v640 = vsel %vm398, %v338, 0
      %v643 = vsel %vm398, %v340, 0
      %v646 = vsel %vm398, %v342, 0
      %v649 = vsel %vm398, %v344, 0
      %v652 = vsel %vm398, %v346, 0
      %v655 = vsel %vm398, %v348, 0
      %v658 = vsel %vm398, %v350, 0
      %v661 = vsel %vm398, %v352, 0
      %v664 = vsel %vm398, %v354, 0
      %v667 = vsel %vm398, %v356, 0
      %v670 = vsel %vm398, %v358, 0
      %v673 = vsel %vm398, %v360, 0
      %v676 = vsel %vm398, %v362, 0
      %v679 = vsel %vm398, %v364, 0
      %v682 = vsel %vm398, %v366, 0
      %684 = vmatprep.subr.mxu0 0.0
      %685 = vmatpush1.msra.mxu0 %v382
      %686 = vmatprep.subr.mxu0 0.0
      %687 = vmatpush1.msra.mxu0 %v381
      %688 = vmatprep.subr.mxu0 0.0
      %689 = vmatpush1.msra.mxu0 %v380
      %690 = vmatprep.subr.mxu0 0.0
      %691 = vmatpush1.msra.mxu0 %v379
      %692 = vmatprep.subr.mxu0 0.0
      %693 = vmatpush1.msra.mxu0 %v378
      %694 = vmatprep.subr.mxu0 0.0
      %695 = vmatpush1.msra.mxu0 %v377
      %696 = vmatprep.subr.mxu0 0.0
      %697 = vmatpush1.msra.mxu0 %v376
      %698 = vmatprep.subr.mxu0 0.0
      %699 = vmatpush1.msra.mxu0 %v375
      %700 = vmatprep.subr.mxu0 0.0
      %701 = vmatpush1.msra.mxu0 %v374
      %702 = vmatprep.subr.mxu0 0.0
      %703 = vmatpush1.msra.mxu0 %v373
      %704 = vmatprep.subr.mxu0 0.0
      %705 = vmatpush1.msra.mxu0 %v372
      %706 = vmatprep.subr.mxu0 0.0
      %707 = vmatpush1.msra.mxu0 %v371
      %708 = vmatprep.subr.mxu0 0.0
      %709 = vmatpush1.msra.mxu0 %v370
      %710 = vmatprep.subr.mxu0 0.0
      %711 = vmatpush1.msra.mxu0 %v369
      %712 = vmatprep.subr.mxu0 0.0
      %713 = vmatpush1.msra.mxu0 %v368
      %714 = vmatprep.subr.mxu0 0.0
      %715 = vmatpush1.msra.mxu0 %v367
      %716 = vmatprep.subr.mxu0 0.0
      %717 = vmatpush2.msra.mxu0 0.0
      %718 = vmatprep.subr.mxu0 0.0
      %719 = vmatpush2.msra.mxu0 0.0
      %720 = vmatprep.subr.mxu0 0.0
      %721 = vmatpush2.msra.mxu0 0.0
      %722 = vmatprep.subr.mxu0 0.0
      %723 = vmatpush2.msra.mxu0 0.0
      %724 = vmatprep.subr.mxu0 0.0
      %725 = vmatpush2.msra.mxu0 0.0
      %726 = vmatprep.subr.mxu0 0.0
      %727 = vmatpush2.msra.mxu0 0.0
      %728 = vmatprep.subr.mxu0 0.0
      %729 = vmatpush2.msra.mxu0 0.0
      %730 = vmatprep.subr.mxu0 0.0
      %731 = vmatpush2.msra.mxu0 0.0
      %732 = vmatprep.subr.mxu0 0.0
      %733 = vmatpush2.msra.mxu0 %v390
      %734 = vmatprep.subr.mxu0 0.0
      %735 = vmatpush2.msra.mxu0 %v389
      %736 = vmatprep.subr.mxu0 0.0
      %737 = vmatpush2.msra.mxu0 %v388
      %738 = vmatprep.subr.mxu0 0.0
      %739 = vmatpush2.msra.mxu0 %v387
      %740 = vmatprep.subr.mxu0 0.0
      %741 = vmatpush2.msra.mxu0 %v386
      %742 = vmatprep.subr.mxu0 0.0
      %743 = vmatpush2.msra.mxu0 %v385
      %744 = vmatprep.subr.mxu0 0.0
      %745 = vmatpush2.msra.mxu0 %v384
      %746 = vmatprep.subr.mxu0 0.0
      %747 = vmatpush2.msra.mxu0 %v383
      %748 = vmatprep.mubr.f32.mxu0 %v400
      %749 = vmatmul.mubr.f32.gmra.mxu0 %v177
      %v750 = vpop.f32.mrf.mxu0
      %v751 = vadd.f32 %v396, %v750
      %v752 = vpop.f32.mrf.mxu0
      %753 = vmatprep.mubr.f32.mxu0 %v403
      %754 = vmatmul.mubr.f32.gmra.mxu0 %v179
      %v755 = vpop.f32.mrf.mxu0
      %v756 = vadd.f32 %v396, %v755
      %v757 = vpop.f32.mrf.mxu0
      %758 = vmatprep.mubr.f32.mxu0 %v406
      %759 = vmatmul.mubr.f32.gmra.mxu0 %v181
      %v760 = vpop.f32.mrf.mxu0
      %v761 = vadd.f32 %v396, %v760
      %v762 = vpop.f32.mrf.mxu0
      %763 = vmatprep.mubr.f32.mxu0 %v409
      %764 = vmatmul.mubr.f32.gmra.mxu0 %v183
      %v765 = vpop.f32.mrf.mxu0
      %v766 = vadd.f32 %v396, %v765
      %v767 = vpop.f32.mrf.mxu0
      %768 = vmatprep.mubr.f32.mxu0 %v412
      %769 = vmatmul.mubr.f32.gmra.mxu0 %v185
      %v770 = vpop.f32.mrf.mxu0
      %v771 = vadd.f32 %v396, %v770
      %v772 = vpop.f32.mrf.mxu0
      %773 = vmatprep.mubr.f32.mxu0 %v415
      %774 = vmatmul.mubr.f32.gmra.mxu0 %v187
      %v775 = vpop.f32.mrf.mxu0
      %v776 = vadd.f32 %v396, %v775
      %v777 = vpop.f32.mrf.mxu0
      %778 = vmatprep.mubr.f32.mxu0 %v418
      %779 = vmatmul.mubr.f32.gmra.mxu0 %v189
      %v780 = vpop.f32.mrf.mxu0
      %v781 = vadd.f32 %v396, %v780
      %v782 = vpop.f32.mrf.mxu0
      %783 = vmatprep.mubr.f32.mxu0 %v421
      %784 = vmatmul.mubr.f32.gmra.mxu0 %v191
      %v785 = vpop.f32.mrf.mxu0
      %v786 = vadd.f32 %v396, %v785
      %v787 = vpop.f32.mrf.mxu0
      %788 = vmatprep.mubr.f32.mxu0 %v424
      %789 = vmatmul.mubr.f32.gmra.mxu0 %v193
      %v790 = vpop.f32.mrf.mxu0
      %v791 = vadd.f32 %v396, %v790
      %v792 = vpop.f32.mrf.mxu0
      %793 = vmatprep.mubr.f32.mxu0 %v427
      %794 = vmatmul.mubr.f32.gmra.mxu0 %v195
      %v795 = vpop.f32.mrf.mxu0
      %v796 = vadd.f32 %v396, %v795
      %v797 = vpop.f32.mrf.mxu0
      %798 = vmatprep.mubr.f32.mxu0 %v430
      %799 = vmatmul.mubr.f32.gmra.mxu0 %v197
      %v800 = vpop.f32.mrf.mxu0
      %v801 = vadd.f32 %v396, %v800
      %v802 = vpop.f32.mrf.mxu0
      %803 = vmatprep.mubr.f32.mxu0 %v433
      %804 = vmatmul.mubr.f32.gmra.mxu0 %v199
      %v805 = vpop.f32.mrf.mxu0
      %v806 = vadd.f32 %v396, %v805
      %v807 = vpop.f32.mrf.mxu0
      %808 = vmatprep.mubr.f32.mxu0 %v436
      %809 = vmatmul.mubr.f32.gmra.mxu0 %v201
      %v810 = vpop.f32.mrf.mxu0
      %v811 = vadd.f32 %v396, %v810
      %v812 = vpop.f32.mrf.mxu0
      %813 = vmatprep.mubr.f32.mxu0 %v439
      %814 = vmatmul.mubr.f32.gmra.mxu0 %v203
      %v815 = vpop.f32.mrf.mxu0
      %v816 = vadd.f32 %v396, %v815
      %v817 = vpop.f32.mrf.mxu0
      %818 = vmatprep.mubr.f32.mxu0 %v442
      %819 = vmatmul.mubr.f32.gmra.mxu0 %v205
      %v820 = vpop.f32.mrf.mxu0
      %v821 = vadd.f32 %v396, %v820
      %v822 = vpop.f32.mrf.mxu0
      %823 = vmatprep.mubr.f32.mxu0 %v445
      %824 = vmatmul.mubr.f32.gmra.mxu0 %v207
      %v825 = vpop.f32.mrf.mxu0
      %v826 = vadd.f32 %v396, %v825
      %v827 = vpop.f32.mrf.mxu0
      %828 = vmatprep.mubr.f32.mxu0 %v448
      %829 = vmatmul.mubr.f32.gmra.mxu0 %v209
      %v830 = vpop.f32.mrf.mxu0
      %v831 = vadd.f32 %v396, %v830
      %v832 = vpop.f32.mrf.mxu0
      %833 = vmatprep.mubr.f32.mxu0 %v451
      %834 = vmatmul.mubr.f32.gmra.mxu0 %v211
      %v835 = vpop.f32.mrf.mxu0
      %v836 = vadd.f32 %v396, %v835
      %v837 = vpop.f32.mrf.mxu0
      %838 = vmatprep.mubr.f32.mxu0 %v454
      %839 = vmatmul.mubr.f32.gmra.mxu0 %v213
      %v840 = vpop.f32.mrf.mxu0
      %v841 = vadd.f32 %v396, %v840
      %v842 = vpop.f32.mrf.mxu0
      %843 = vmatprep.mubr.f32.mxu0 %v457
      %844 = vmatmul.mubr.f32.gmra.mxu0 %v215
      %v845 = vpop.f32.mrf.mxu0
      %v846 = vadd.f32 %v396, %v845
      %v847 = vpop.f32.mrf.mxu0
      %848 = vmatprep.mubr.f32.mxu0 %v460
      %849 = vmatmul.mubr.f32.gmra.mxu0 %v217
      %v850 = vpop.f32.mrf.mxu0
      %v851 = vadd.f32 %v396, %v850
      %v852 = vpop.f32.mrf.mxu0
      %853 = vmatprep.mubr.f32.mxu0 %v463
      %854 = vmatmul.mubr.f32.gmra.mxu0 %v219
      %v855 = vpop.f32.mrf.mxu0
      %v856 = vadd.f32 %v396, %v855
      %v857 = vpop.f32.mrf.mxu0
      %858 = vmatprep.mubr.f32.mxu0 %v466
      %859 = vmatmul.mubr.f32.gmra.mxu0 %v221
      %v860 = vpop.f32.mrf.mxu0
      %v861 = vadd.f32 %v396, %v860
      %v862 = vpop.f32.mrf.mxu0
      %863 = vmatprep.mubr.f32.mxu0 %v469
      %864 = vmatmul.mubr.f32.gmra.mxu0 %v223
      %v865 = vpop.f32.mrf.mxu0
      %v866 = vadd.f32 %v396, %v865
      %v867 = vpop.f32.mrf.mxu0
      %868 = vmatprep.mubr.f32.mxu0 %v472
      %869 = vmatmul.mubr.f32.gmra.mxu0 %v225
      %v870 = vpop.f32.mrf.mxu0
      %v871 = vadd.f32 %v396, %v870
      %v872 = vpop.f32.mrf.mxu0
      %873 = vmatprep.mubr.f32.mxu0 %v475
      %874 = vmatmul.mubr.f32.gmra.mxu0 %v227
      %v875 = vpop.f32.mrf.mxu0
      %v876 = vadd.f32 %v396, %v875
      %v877 = vpop.f32.mrf.mxu0
      %878 = vmatprep.mubr.f32.mxu0 %v478
      %879 = vmatmul.mubr.f32.gmra.mxu0 %v229
      %v880 = vpop.f32.mrf.mxu0
      %v881 = vadd.f32 %v396, %v880
      %v882 = vpop.f32.mrf.mxu0
      %883 = vmatprep.mubr.f32.mxu0 %v481
      %884 = vmatmul.mubr.f32.gmra.mxu0 %v231
      %v885 = vpop.f32.mrf.mxu0
      %v886 = vadd.f32 %v396, %v885
      %v887 = vpop.f32.mrf.mxu0
      %888 = vmatprep.mubr.f32.mxu0 %v484
      %889 = vmatmul.mubr.f32.gmra.mxu0 %v233
      %v890 = vpop.f32.mrf.mxu0
      %v891 = vadd.f32 %v396, %v890
      %v892 = vpop.f32.mrf.mxu0
      %893 = vmatprep.mubr.f32.mxu0 %v487
      %894 = vmatmul.mubr.f32.gmra.mxu0 %v235
      %v895 = vpop.f32.mrf.mxu0
      %v896 = vadd.f32 %v396, %v895
      %v897 = vpop.f32.mrf.mxu0
      %898 = vmatprep.mubr.f32.mxu0 %v490
      %899 = vmatmul.mubr.f32.gmra.mxu0 %v237
      %v900 = vpop.f32.mrf.mxu0
      %v901 = vadd.f32 %v396, %v900
      %v902 = vpop.f32.mrf.mxu0
      %903 = vmatprep.mubr.f32.mxu0 %v493
      %904 = vmatmul.mubr.f32.gmra.mxu0 %v239
      %v905 = vpop.f32.mrf.mxu0
      %v906 = vadd.f32 %v396, %v905
      %v907 = vpop.f32.mrf.mxu0
      %908 = vmatprep.mubr.f32.mxu0 %v496
      %909 = vmatmul.mubr.f32.gmra.mxu0 %v241
      %v910 = vpop.f32.mrf.mxu0
      %v911 = vadd.f32 %v396, %v910
      %v912 = vpop.f32.mrf.mxu0
      %913 = vmatprep.mubr.f32.mxu0 %v499
      %914 = vmatmul.mubr.f32.gmra.mxu0 %v243
      %v915 = vpop.f32.mrf.mxu0
      %v916 = vadd.f32 %v396, %v915
      %v917 = vpop.f32.mrf.mxu0
      %918 = vmatprep.mubr.f32.mxu0 %v502
      %919 = vmatmul.mubr.f32.gmra.mxu0 %v245
      %v920 = vpop.f32.mrf.mxu0
      %v921 = vadd.f32 %v396, %v920
      %v922 = vpop.f32.mrf.mxu0
      %923 = vmatprep.mubr.f32.mxu0 %v505
      %924 = vmatmul.mubr.f32.gmra.mxu0 %v247
      %v925 = vpop.f32.mrf.mxu0
      %v926 = vadd.f32 %v396, %v925
      %v927 = vpop.f32.mrf.mxu0
      %928 = vmatprep.mubr.f32.mxu0 %v508
      %929 = vmatmul.mubr.f32.gmra.mxu0 %v249
      %v930 = vpop.f32.mrf.mxu0
      %v931 = vadd.f32 %v396, %v930
      %v932 = vpop.f32.mrf.mxu0
      %933 = vmatprep.mubr.f32.mxu0 %v511
      %934 = vmatmul.mubr.f32.gmra.mxu0 %v251
      %v935 = vpop.f32.mrf.mxu0
      %v936 = vadd.f32 %v396, %v935
      %v937 = vpop.f32.mrf.mxu0
      %938 = vmatprep.mubr.f32.mxu0 %v514
      %939 = vmatmul.mubr.f32.gmra.mxu0 %v253
      %v940 = vpop.f32.mrf.mxu0
      %v941 = vadd.f32 %v396, %v940
      %v942 = vpop.f32.mrf.mxu0
      %943 = vmatprep.mubr.f32.mxu0 %v517
      %944 = vmatmul.mubr.f32.gmra.mxu0 %v255
      %v945 = vpop.f32.mrf.mxu0
      %v946 = vadd.f32 %v396, %v945
      %v947 = vpop.f32.mrf.mxu0
      %948 = vmatprep.mubr.f32.mxu0 %v520
      %949 = vmatmul.mubr.f32.gmra.mxu0 %v257
      %v950 = vpop.f32.mrf.mxu0
      %v951 = vadd.f32 %v396, %v950
      %v952 = vpop.f32.mrf.mxu0
      %953 = vmatprep.mubr.f32.mxu0 %v523
      %954 = vmatmul.mubr.f32.gmra.mxu0 %v259
      %v955 = vpop.f32.mrf.mxu0
      %v956 = vadd.f32 %v396, %v955
      %v957 = vpop.f32.mrf.mxu0
      %958 = vmatprep.mubr.f32.mxu0 %v526
      %959 = vmatmul.mubr.f32.gmra.mxu0 %v261
      %v960 = vpop.f32.mrf.mxu0
      %v961 = vadd.f32 %v396, %v960
      %v962 = vpop.f32.mrf.mxu0
      %963 = vmatprep.mubr.f32.mxu0 %v529
      %964 = vmatmul.mubr.f32.gmra.mxu0 %v263
      %v965 = vpop.f32.mrf.mxu0
      %v966 = vadd.f32 %v396, %v965
      %v967 = vpop.f32.mrf.mxu0
      %968 = vmatprep.mubr.f32.mxu0 %v532
      %969 = vmatmul.mubr.f32.gmra.mxu0 %v265
      %v970 = vpop.f32.mrf.mxu0
      %v971 = vadd.f32 %v396, %v970
      %v972 = vpop.f32.mrf.mxu0
      %973 = vmatprep.mubr.f32.mxu0 %v535
      %974 = vmatmul.mubr.f32.gmra.mxu0 %v267
      %v975 = vpop.f32.mrf.mxu0
      %v976 = vadd.f32 %v396, %v975
      %v977 = vpop.f32.mrf.mxu0
      %978 = vmatprep.mubr.f32.mxu0 %v538
      %979 = vmatmul.mubr.f32.gmra.mxu0 %v269
      %v980 = vpop.f32.mrf.mxu0
      %v981 = vadd.f32 %v396, %v980
      %v982 = vpop.f32.mrf.mxu0
      %983 = vmatprep.mubr.f32.mxu0 %v541
      %984 = vmatmul.mubr.f32.gmra.mxu0 %v271
      %v985 = vpop.f32.mrf.mxu0
      %v986 = vadd.f32 %v396, %v985
      %v987 = vpop.f32.mrf.mxu0
      %988 = vmatprep.mubr.f32.mxu0 %v544
      %989 = vmatmul.mubr.f32.gmra.mxu0 %v273
      %v990 = vpop.f32.mrf.mxu0
      %v991 = vadd.f32 %v396, %v990
      %v992 = vpop.f32.mrf.mxu0
      %993 = vmatprep.mubr.f32.mxu0 %v547
      %994 = vmatmul.mubr.f32.gmra.mxu0 %v275
      %v995 = vpop.f32.mrf.mxu0
      %v996 = vadd.f32 %v396, %v995
      %v997 = vpop.f32.mrf.mxu0
      %998 = vmatprep.mubr.f32.mxu0 %v550
      %999 = vmatmul.mubr.f32.gmra.mxu0 %v277
      %v1000 = vpop.f32.mrf.mxu0
      %v1001 = vadd.f32 %v396, %v1000
      %v1002 = vpop.f32.mrf.mxu0
      %1003 = vmatprep.mubr.f32.mxu0 %v553
      %1004 = vmatmul.mubr.f32.gmra.mxu0 %v279
      %v1005 = vpop.f32.mrf.mxu0
      %v1006 = vadd.f32 %v396, %v1005
      %v1007 = vpop.f32.mrf.mxu0
      %1008 = vmatprep.mubr.f32.mxu0 %v556
      %1009 = vmatmul.mubr.f32.gmra.mxu0 %v281
      %v1010 = vpop.f32.mrf.mxu0
      %v1011 = vadd.f32 %v396, %v1010
      %v1012 = vpop.f32.mrf.mxu0
      %1013 = vmatprep.mubr.f32.mxu0 %v559
      %1014 = vmatmul.mubr.f32.gmra.mxu0 %v283
      %v1015 = vpop.f32.mrf.mxu0
      %v1016 = vadd.f32 %v396, %v1015
      %v1017 = vpop.f32.mrf.mxu0
      %1018 = vmatprep.mubr.f32.mxu0 %v562
      %1019 = vmatmul.mubr.f32.gmra.mxu0 %v285
      %v1020 = vpop.f32.mrf.mxu0
      %v1021 = vadd.f32 %v396, %v1020
      %v1022 = vpop.f32.mrf.mxu0
      %1023 = vmatprep.mubr.f32.mxu0 %v565
      %1024 = vmatmul.mubr.f32.gmra.mxu0 %v287
      %v1025 = vpop.f32.mrf.mxu0
      %v1026 = vadd.f32 %v396, %v1025
      %v1027 = vpop.f32.mrf.mxu0
      %1028 = vmatprep.mubr.f32.mxu0 %v568
      %1029 = vmatmul.mubr.f32.gmra.mxu0 %v289
      %v1030 = vpop.f32.mrf.mxu0
      %v1031 = vadd.f32 %v396, %v1030
      %v1032 = vpop.f32.mrf.mxu0
      %1033 = vmatprep.mubr.f32.mxu0 %v571
      %1034 = vmatmul.mubr.f32.gmra.mxu0 %v291
      %v1035 = vpop.f32.mrf.mxu0
      %v1036 = vadd.f32 %v396, %v1035
      %v1037 = vpop.f32.mrf.mxu0
      %1038 = vmatprep.mubr.f32.mxu0 %v574
      %1039 = vmatmul.mubr.f32.gmra.mxu0 %v293
      %v1040 = vpop.f32.mrf.mxu0
      %v1041 = vadd.f32 %v396, %v1040
      %v1042 = vpop.f32.mrf.mxu0
      %1043 = vmatprep.mubr.f32.mxu0 %v577
      %1044 = vmatmul.mubr.f32.gmra.mxu0 %v295
      %v1045 = vpop.f32.mrf.mxu0
      %v1046 = vadd.f32 %v396, %v1045
      %v1047 = vpop.f32.mrf.mxu0
      %1048 = vmatprep.mubr.f32.mxu0 %v580
      %1049 = vmatmul.mubr.f32.gmra.mxu0 %v297
      %v1050 = vpop.f32.mrf.mxu0
      %v1051 = vadd.f32 %v396, %v1050
      %v1052 = vpop.f32.mrf.mxu0
      %1053 = vmatprep.mubr.f32.mxu0 %v583
      %1054 = vmatmul.mubr.f32.gmra.mxu0 %v299
      %v1055 = vpop.f32.mrf.mxu0
      %v1056 = vadd.f32 %v396, %v1055
      %v1057 = vpop.f32.mrf.mxu0
      %1058 = vmatprep.mubr.f32.mxu0 %v586
      %1059 = vmatmul.mubr.f32.gmra.mxu0 %v301
      %v1060 = vpop.f32.mrf.mxu0
      %v1061 = vadd.f32 %v396, %v1060
      %v1062 = vpop.f32.mrf.mxu0
      %1063 = vmatprep.mubr.f32.mxu0 %v589
      %1064 = vmatmul.mubr.f32.gmra.mxu0 %v303
      %v1065 = vpop.f32.mrf.mxu0
      %v1066 = vadd.f32 %v396, %v1065
      %v1067 = vpop.f32.mrf.mxu0
      %1068 = vmatprep.mubr.f32.mxu0 %v592
      %1069 = vmatmul.mubr.f32.gmra.mxu0 %v305
      %v1070 = vpop.f32.mrf.mxu0
      %v1071 = vadd.f32 %v396, %v1070
      %v1072 = vpop.f32.mrf.mxu0
      %1073 = vmatprep.mubr.f32.mxu0 %v595
      %1074 = vmatmul.mubr.f32.gmra.mxu0 %v307
      %v1075 = vpop.f32.mrf.mxu0
      %v1076 = vadd.f32 %v396, %v1075
      %v1077 = vpop.f32.mrf.mxu0
      %1078 = vmatprep.mubr.f32.mxu0 %v598
      %1079 = vmatmul.mubr.f32.gmra.mxu0 %v309
      %v1080 = vpop.f32.mrf.mxu0
      %v1081 = vadd.f32 %v396, %v1080
      %v1082 = vpop.f32.mrf.mxu0
      %1083 = vmatprep.mubr.f32.mxu0 %v601
      %1084 = vmatmul.mubr.f32.gmra.mxu0 %v311
      %v1085 = vpop.f32.mrf.mxu0
      %v1086 = vadd.f32 %v396, %v1085
      %v1087 = vpop.f32.mrf.mxu0
      %1088 = vmatprep.mubr.f32.mxu0 %v604
      %1089 = vmatmul.mubr.f32.gmra.mxu0 %v313
      %v1090 = vpop.f32.mrf.mxu0
      %v1091 = vadd.f32 %v396, %v1090
      %v1092 = vpop.f32.mrf.mxu0
      %1093 = vmatprep.mubr.f32.mxu0 %v607
      %1094 = vmatmul.mubr.f32.gmra.mxu0 %v315
      %v1095 = vpop.f32.mrf.mxu0
      %v1096 = vadd.f32 %v396, %v1095
      %v1097 = vpop.f32.mrf.mxu0
      %1098 = vmatprep.mubr.f32.mxu0 %v610
      %1099 = vmatmul.mubr.f32.gmra.mxu0 %v317
      %v1100 = vpop.f32.mrf.mxu0
      %v1101 = vadd.f32 %v396, %v1100
      %v1102 = vpop.f32.mrf.mxu0
      %1103 = vmatprep.mubr.f32.mxu0 %v613
      %1104 = vmatmul.mubr.f32.gmra.mxu0 %v319
      %v1105 = vpop.f32.mrf.mxu0
      %v1106 = vadd.f32 %v396, %v1105
      %v1107 = vpop.f32.mrf.mxu0
      %1108 = vmatprep.mubr.f32.mxu0 %v616
      %1109 = vmatmul.mubr.f32.gmra.mxu0 %v321
      %v1110 = vpop.f32.mrf.mxu0
      %v1111 = vadd.f32 %v396, %v1110
      %v1112 = vpop.f32.mrf.mxu0
      %1113 = vmatprep.mubr.f32.mxu0 %v619
      %1114 = vmatmul.mubr.f32.gmra.mxu0 %v323
      %v1115 = vpop.f32.mrf.mxu0
      %v1116 = vadd.f32 %v396, %v1115
      %v1117 = vpop.f32.mrf.mxu0
      %1118 = vmatprep.mubr.f32.mxu0 %v622
      %1119 = vmatmul.mubr.f32.gmra.mxu0 %v325
      %v1120 = vpop.f32.mrf.mxu0
      %v1121 = vadd.f32 %v396, %v1120
      %v1122 = vpop.f32.mrf.mxu0
      %1123 = vmatprep.mubr.f32.mxu0 %v625
      %1124 = vmatmul.mubr.f32.gmra.mxu0 %v327
      %v1125 = vpop.f32.mrf.mxu0
      %v1126 = vadd.f32 %v396, %v1125
      %v1127 = vpop.f32.mrf.mxu0
      %1128 = vmatprep.mubr.f32.mxu0 %v628
      %1129 = vmatmul.mubr.f32.gmra.mxu0 %v329
      %v1130 = vpop.f32.mrf.mxu0
      %v1131 = vadd.f32 %v396, %v1130
      %v1132 = vpop.f32.mrf.mxu0
      %1133 = vmatprep.mubr.f32.mxu0 %v631
      %1134 = vmatmul.mubr.f32.gmra.mxu0 %v331
      %v1135 = vpop.f32.mrf.mxu0
      %v1136 = vadd.f32 %v396, %v1135
      %v1137 = vpop.f32.mrf.mxu0
      %1138 = vmatprep.mubr.f32.mxu0 %v634
      %1139 = vmatmul.mubr.f32.gmra.mxu0 %v333
      %v1140 = vpop.f32.mrf.mxu0
      %v1141 = vadd.f32 %v396, %v1140
      %v1142 = vpop.f32.mrf.mxu0
      %1143 = vmatprep.mubr.f32.mxu0 %v637
      %1144 = vmatmul.mubr.f32.gmra.mxu0 %v335
      %v1145 = vpop.f32.mrf.mxu0
      %v1146 = vadd.f32 %v396, %v1145
      %v1147 = vpop.f32.mrf.mxu0
      %1148 = vmatprep.mubr.f32.mxu0 %v640
      %1149 = vmatmul.mubr.f32.gmra.mxu0 %v337
      %v1150 = vpop.f32.mrf.mxu0
      %v1151 = vadd.f32 %v396, %v1150
      %v1152 = vpop.f32.mrf.mxu0
      %1153 = vmatprep.mubr.f32.mxu0 %v643
      %1154 = vmatmul.mubr.f32.gmra.mxu0 %v339
      %v1155 = vpop.f32.mrf.mxu0
      %v1156 = vadd.f32 %v396, %v1155
      %v1157 = vpop.f32.mrf.mxu0
      %1158 = vmatprep.mubr.f32.mxu0 %v646
      %1159 = vmatmul.mubr.f32.gmra.mxu0 %v341
      %v1160 = vpop.f32.mrf.mxu0
      %v1161 = vadd.f32 %v396, %v1160
      %v1162 = vpop.f32.mrf.mxu0
      %1163 = vmatprep.mubr.f32.mxu0 %v649
      %1164 = vmatmul.mubr.f32.gmra.mxu0 %v343
      %v1165 = vpop.f32.mrf.mxu0
      %v1166 = vadd.f32 %v396, %v1165
      %v1167 = vpop.f32.mrf.mxu0
      %1168 = vmatprep.mubr.f32.mxu0 %v652
      %1169 = vmatmul.mubr.f32.gmra.mxu0 %v345
      %v1170 = vpop.f32.mrf.mxu0
      %v1171 = vadd.f32 %v396, %v1170
      %v1172 = vpop.f32.mrf.mxu0
      %1173 = vmatprep.mubr.f32.mxu0 %v655
      %1174 = vmatmul.mubr.f32.gmra.mxu0 %v347
      %v1175 = vpop.f32.mrf.mxu0
      %v1176 = vadd.f32 %v396, %v1175
      %v1177 = vpop.f32.mrf.mxu0
      %1178 = vmatprep.mubr.f32.mxu0 %v658
      %1179 = vmatmul.mubr.f32.gmra.mxu0 %v349
      %v1180 = vpop.f32.mrf.mxu0
      %v1181 = vadd.f32 %v396, %v1180
      %v1182 = vpop.f32.mrf.mxu0
      %1183 = vmatprep.mubr.f32.mxu0 %v661
      %1184 = vmatmul.mubr.f32.gmra.mxu0 %v351
      %v1185 = vpop.f32.mrf.mxu0
      %v1186 = vadd.f32 %v396, %v1185
      %v1187 = vpop.f32.mrf.mxu0
      %1188 = vmatprep.mubr.f32.mxu0 %v664
      %1189 = vmatmul.mubr.f32.gmra.mxu0 %v353
      %v1190 = vpop.f32.mrf.mxu0
      %v1191 = vadd.f32 %v396, %v1190
      %v1192 = vpop.f32.mrf.mxu0
      %1193 = vmatprep.mubr.f32.mxu0 %v667
      %1194 = vmatmul.mubr.f32.gmra.mxu0 %v355
      %v1195 = vpop.f32.mrf.mxu0
      %v1196 = vadd.f32 %v396, %v1195
      %v1197 = vpop.f32.mrf.mxu0
      %1198 = vmatprep.mubr.f32.mxu0 %v670
      %1199 = vmatmul.mubr.f32.gmra.mxu0 %v357
      %v1200 = vpop.f32.mrf.mxu0
      %v1201 = vadd.f32 %v396, %v1200
      %v1202 = vpop.f32.mrf.mxu0
      %1203 = vmatprep.mubr.f32.mxu0 %v673
      %1204 = vmatmul.mubr.f32.gmra.mxu0 %v359
      %v1205 = vpop.f32.mrf.mxu0
      %v1206 = vadd.f32 %v396, %v1205
      %v1207 = vpop.f32.mrf.mxu0
      %1208 = vmatprep.mubr.f32.mxu0 %v676
      %1209 = vmatmul.mubr.f32.gmra.mxu0 %v361
      %v1210 = vpop.f32.mrf.mxu0
      %v1211 = vadd.f32 %v396, %v1210
      %v1212 = vpop.f32.mrf.mxu0
      %1213 = vmatprep.mubr.f32.mxu0 %v679
      %1214 = vmatmul.mubr.f32.gmra.mxu0 %v363
      %v1215 = vpop.f32.mrf.mxu0
      %v1216 = vadd.f32 %v396, %v1215
      %v1217 = vpop.f32.mrf.mxu0
      %1218 = vmatprep.mubr.f32.mxu0 %v682
      %1219 = vmatmul.mubr.f32.gmra.mxu0 %v365
      %v1220 = vpop.f32.mrf.mxu0
      %v1221 = vadd.f32 %v396, %v1220
      %v1222 = vpop.f32.mrf.mxu0
      %1223 = vdwg.mxu0
      %vm1224 = vcmask 261120
      %1225 = vst.msk [vmem:[%s175] sm:$0xff] %vm1224, %v751
      %1226 = vst.msk [vmem:[%s175 + $0x8] sm:$0xff] %vm1224, %v756
      %1227 = vst.msk [vmem:[%s175 + $0x10] sm:$0xff] %vm1224, %v761
      %1228 = vst.msk [vmem:[%s175 + $0x18] sm:$0xff] %vm1224, %v766
      %1229 = vst.msk [vmem:[%s175 + $0x20] sm:$0xff] %vm1224, %v771
      %1230 = vst.msk [vmem:[%s175 + $0x28] sm:$0xff] %vm1224, %v776
      %1231 = vst.msk [vmem:[%s175 + $0x30] sm:$0xff] %vm1224, %v781
      %1232 = vst.msk [vmem:[%s175 + $0x38] sm:$0xff] %vm1224, %v786
      %1233 = vst.msk [vmem:[%s175 + $0x40] sm:$0xff] %vm1224, %v791
      %1234 = vst.msk [vmem:[%s175 + $0x48] sm:$0xff] %vm1224, %v796
      %1235 = vst.msk [vmem:[%s175 + $0x50] sm:$0xff] %vm1224, %v801
      %1236 = vst.msk [vmem:[%s175 + $0x58] sm:$0xff] %vm1224, %v806
      %1237 = vst.msk [vmem:[%s175 + $0x60] sm:$0xff] %vm1224, %v811
      %1238 = vst.msk [vmem:[%s175 + $0x68] sm:$0xff] %vm1224, %v816
      %1239 = vst.msk [vmem:[%s175 + $0x70] sm:$0xff] %vm1224, %v821
      %1240 = vst.msk [vmem:[%s175 + $0x78] sm:$0xff] %vm1224, %v826
      %1241 = vst.msk [vmem:[%s175 + $0x80] sm:$0xff] %vm1224, %v831
      %1242 = vst.msk [vmem:[%s175 + $0x88] sm:$0xff] %vm1224, %v836
      %1243 = vst.msk [vmem:[%s175 + $0x90] sm:$0xff] %vm1224, %v841
      %1244 = vst.msk [vmem:[%s175 + $0x98] sm:$0xff] %vm1224, %v846
      %1245 = vst.msk [vmem:[%s175 + $0xa0] sm:$0xff] %vm1224, %v851
      %1246 = vst.msk [vmem:[%s175 + $0xa8] sm:$0xff] %vm1224, %v856
      %1247 = vst.msk [vmem:[%s175 + $0xb0] sm:$0xff] %vm1224, %v861
      %1248 = vst.msk [vmem:[%s175 + $0xb8] sm:$0xff] %vm1224, %v866
      %1249 = vst.msk [vmem:[%s175 + $0xc0] sm:$0xff] %vm1224, %v871
      %1250 = vst.msk [vmem:[%s175 + $0xc8] sm:$0xff] %vm1224, %v876
      %1251 = vst.msk [vmem:[%s175 + $0xd0] sm:$0xff] %vm1224, %v881
      %1252 = vst.msk [vmem:[%s175 + $0xd8] sm:$0xff] %vm1224, %v886
      %1253 = vst.msk [vmem:[%s175 + $0xe0] sm:$0xff] %vm1224, %v891
      %1254 = vst.msk [vmem:[%s175 + $0xe8] sm:$0xff] %vm1224, %v896
      %1255 = vst.msk [vmem:[%s175 + $0xf0] sm:$0xff] %vm1224, %v901
      %1256 = vst.msk [vmem:[%s175 + $0xf8] sm:$0xff] %vm1224, %v906
      %1257 = vst.msk [vmem:[%s175 + $0x100] sm:$0xff] %vm1224, %v911
      %1258 = vst.msk [vmem:[%s175 + $0x108] sm:$0xff] %vm1224, %v916
      %1259 = vst.msk [vmem:[%s175 + $0x110] sm:$0xff] %vm1224, %v921
      %1260 = vst.msk [vmem:[%s175 + $0x118] sm:$0xff] %vm1224, %v926
      %1261 = vst.msk [vmem:[%s175 + $0x120] sm:$0xff] %vm1224, %v931
      %1262 = vst.msk [vmem:[%s175 + $0x128] sm:$0xff] %vm1224, %v936
      %1263 = vst.msk [vmem:[%s175 + $0x130] sm:$0xff] %vm1224, %v941
      %1264 = vst.msk [vmem:[%s175 + $0x138] sm:$0xff] %vm1224, %v946
      %1265 = vst.msk [vmem:[%s175 + $0x140] sm:$0xff] %vm1224, %v951
      %1266 = vst.msk [vmem:[%s175 + $0x148] sm:$0xff] %vm1224, %v956
      %1267 = vst.msk [vmem:[%s175 + $0x150] sm:$0xff] %vm1224, %v961
      %1268 = vst.msk [vmem:[%s175 + $0x158] sm:$0xff] %vm1224, %v966
      %1269 = vst.msk [vmem:[%s175 + $0x160] sm:$0xff] %vm1224, %v971
      %1270 = vst.msk [vmem:[%s175 + $0x168] sm:$0xff] %vm1224, %v976
      %1271 = vst.msk [vmem:[%s175 + $0x170] sm:$0xff] %vm1224, %v981
      %1272 = vst.msk [vmem:[%s175 + $0x178] sm:$0xff] %vm1224, %v986
      %1273 = vst.msk [vmem:[%s175 + $0x180] sm:$0xff] %vm1224, %v991
      %1274 = vst.msk [vmem:[%s175 + $0x188] sm:$0xff] %vm1224, %v996
      %1275 = vst.msk [vmem:[%s175 + $0x190] sm:$0xff] %vm1224, %v1001
      %1276 = vst.msk [vmem:[%s175 + $0x198] sm:$0xff] %vm1224, %v1006
      %1277 = vst.msk [vmem:[%s175 + $0x1a0] sm:$0xff] %vm1224, %v1011
      %1278 = vst.msk [vmem:[%s175 + $0x1a8] sm:$0xff] %vm1224, %v1016
      %1279 = vst.msk [vmem:[%s175 + $0x1b0] sm:$0xff] %vm1224, %v1021
      %1280 = vst.msk [vmem:[%s175 + $0x1b8] sm:$0xff] %vm1224, %v1026
      %1281 = vst.msk [vmem:[%s175 + $0x1c0] sm:$0xff] %vm1224, %v1031
      %1282 = vst.msk [vmem:[%s175 + $0x1c8] sm:$0xff] %vm1224, %v1036
      %1283 = vst.msk [vmem:[%s175 + $0x1d0] sm:$0xff] %vm1224, %v1041
      %1284 = vst.msk [vmem:[%s175 + $0x1d8] sm:$0xff] %vm1224, %v1046
      %1285 = vst.msk [vmem:[%s175 + $0x1e0] sm:$0xff] %vm1224, %v1051
      %1286 = vst.msk [vmem:[%s175 + $0x1e8] sm:$0xff] %vm1224, %v1056
      %1287 = vst.msk [vmem:[%s175 + $0x1f0] sm:$0xff] %vm1224, %v1061
      %1288 = vst.msk [vmem:[%s175 + $0x1f8] sm:$0xff] %vm1224, %v1066
      %1289 = vst.msk [vmem:[%s175 + $0x200] sm:$0xff] %vm1224, %v1071
      %1290 = vst.msk [vmem:[%s175 + $0x208] sm:$0xff] %vm1224, %v1076
      %1291 = vst.msk [vmem:[%s175 + $0x210] sm:$0xff] %vm1224, %v1081
      %1292 = vst.msk [vmem:[%s175 + $0x218] sm:$0xff] %vm1224, %v1086
      %1293 = vst.msk [vmem:[%s175 + $0x220] sm:$0xff] %vm1224, %v1091
      %1294 = vst.msk [vmem:[%s175 + $0x228] sm:$0xff] %vm1224, %v1096
      %1295 = vst.msk [vmem:[%s175 + $0x230] sm:$0xff] %vm1224, %v1101
      %1296 = vst.msk [vmem:[%s175 + $0x238] sm:$0xff] %vm1224, %v1106
      %1297 = vst.msk [vmem:[%s175 + $0x240] sm:$0xff] %vm1224, %v1111
      %1298 = vst.msk [vmem:[%s175 + $0x248] sm:$0xff] %vm1224, %v1116
      %1299 = vst.msk [vmem:[%s175 + $0x250] sm:$0xff] %vm1224, %v1121
      %1300 = vst.msk [vmem:[%s175 + $0x258] sm:$0xff] %vm1224, %v1126
      %1301 = vst.msk [vmem:[%s175 + $0x260] sm:$0xff] %vm1224, %v1131
      %1302 = vst.msk [vmem:[%s175 + $0x268] sm:$0xff] %vm1224, %v1136
      %1303 = vst.msk [vmem:[%s175 + $0x270] sm:$0xff] %vm1224, %v1141
      %1304 = vst.msk [vmem:[%s175 + $0x278] sm:$0xff] %vm1224, %v1146
      %1305 = vst.msk [vmem:[%s175 + $0x280] sm:$0xff] %vm1224, %v1151
      %1306 = vst.msk [vmem:[%s175 + $0x288] sm:$0xff] %vm1224, %v1156
      %1307 = vst.msk [vmem:[%s175 + $0x290] sm:$0xff] %vm1224, %v1161
      %1308 = vst.msk [vmem:[%s175 + $0x298] sm:$0xff] %vm1224, %v1166
      %1309 = vst.msk [vmem:[%s175 + $0x2a0] sm:$0xff] %vm1224, %v1171
      %1310 = vst.msk [vmem:[%s175 + $0x2a8] sm:$0xff] %vm1224, %v1176
      %1311 = vst.msk [vmem:[%s175 + $0x2b0] sm:$0xff] %vm1224, %v1181
      %1312 = vst.msk [vmem:[%s175 + $0x2b8] sm:$0xff] %vm1224, %v1186
      %1313 = vst.msk [vmem:[%s175 + $0x2c0] sm:$0xff] %vm1224, %v1191
      %1314 = vst.msk [vmem:[%s175 + $0x2c8] sm:$0xff] %vm1224, %v1196
      %1315 = vst.msk [vmem:[%s175 + $0x2d0] sm:$0xff] %vm1224, %v1201
      %1316 = vst.msk [vmem:[%s175 + $0x2d8] sm:$0xff] %vm1224, %v1206
      %1317 = vst.msk [vmem:[%s175 + $0x2e0] sm:$0xff] %vm1224, %v1211
      %1318 = vst.msk [vmem:[%s175 + $0x2e8] sm:$0xff] %vm1224, %v1216
      %1319 = vst.msk [vmem:[%s175 + $0x2f0] sm:$0xff] %vm1224, %v1221
      %s1320 = smul.u32 95, %s14
      %p1321 = scmp.lt.s32.totalorder %s1320, 474
      %s1322 = scalar_select %p1321, %s1320, 474
      %s1323 = smul.addr %s1322, 8
      %s1324 = scalar_lea.vmem %s3, %s1323
      // Predicated region
      $region33: #{cnn_forward.6} parent=31 // pred_check
        %p1325 = pneg %p100
      $region34: #{cnn_forward.6} parent=31 // pred_check_branch
        %1327 = sbr.rel (%p1325) target = $region36
      $region35: #{cnn_forward.6} parent=31 // pred_region
        %s1328 = smul.u32 95, %s14
      $region36: #{cnn_forward.6} parent=31 // pred_fallthru
        _
    $region32: #{cnn_forward.6} parent=5 // pred_fallthru
      _
    %p1329 = scmp.le.s32.totalorder 2, %s9
    // Predicated region
    $region37: #{cnn_forward.6} parent=5 // pred_check
      %p1330 = pneg %p1329
    $region38: #{cnn_forward.6} parent=5 // pred_check_branch
      %1332 = sbr.rel (%p1330) target = $region40
    $region39: #{cnn_forward.6} parent=5 // pred_region
      %s1333 = ssub.s32 %s9, 2
      // Predicated region
      $region41: #{cnn_forward.6} parent=39 // pred_check
        %p1334 = pneg %p106
      $region42: #{cnn_forward.6} parent=39 // pred_check_branch
        %1336 = sbr.rel (%p1334) target = $region44
      $region43: #{cnn_forward.6} parent=39 // pred_region
        %s1337 = smul.u32 95, %s15
        %p1338 = scmp.lt.s32.totalorder %s1337, 474
        %s1339 = scalar_select %p1338, %s1337, 474
        %s1340 = smul.addr %s1339, 8
        %s1341 = scalar_lea.vmem %s3, %s1340
      $region44: #{cnn_forward.6} parent=39 // pred_fallthru
        _
    $region40: #{cnn_forward.6} parent=5 // pred_fallthru
      _
  $region6: #{cnn_forward.6} parent=0 // loop_footer
    %s13 = sadd.s32 1, %s9
  $region7: #{cnn_forward.6} parent=0 // loop_footer_branch
    %8 = sbr.rel target = $region3
  $region8: #{cnn_forward.6} parent=0 // loop_exit
    _

// kernel: cnn_forward.7
$region0: #{cnn_forward.7}
  #allocation0 [shape = 'u32[]', space=smem, size = 0x4, offset = 0x4, fixed_abs, tag = 'smem constant byte address 0x4 - core index']
  #allocation1 [shape = 'u32[144,128]{1,0:T(1,128)}', space=vmem, size = 0x12000, scoped, tag = 'internal scratch']
  %s0 = inlined_call_operand.vmem [shape: f32[50,2,19,64], index: 0, kind: input, shape index: {}]
  %s1 = inlined_call_operand.vmem [shape: f32[50,19,32], index: 1, kind: output, shape index: {}]
  %s2 = sld [smem:[#allocation0]]
  $region14: #{cnn_forward.7} parent=0
    _
  %s4 = ssub.s32 1, %s2
  %s5 = scalar_select 0, %s4, %s2
  // Predicated region
  $region2: #{cnn_forward.7} parent=0 // pred_check
    _
  $region3: #{cnn_forward.7} parent=0 // pred_check_branch
    %7 = sbr.rel (0) target = $region5
  $region4: #{cnn_forward.7} parent=0 // pred_region
    _
  $region5: #{cnn_forward.7} parent=0 // pred_fallthru
    _
  %v8 = vld [vmem:[%s0] sm:$0xff]
  %v9 = vld [vmem:[%s0 + $0x8] sm:$0xff]
  %v10 = vld [vmem:[%s0 + $0x10] sm:$0x7]
  %v11 = vld [vmem:[%s0 + $0x18] sm:$0xff]
  %v12 = vld [vmem:[%s0 + $0x20] sm:$0xff]
  %v13 = vld [vmem:[%s0 + $0x28] sm:$0x7]
  %v14 = vld [vmem:[%s0 + $0x30] sm:$0xff]
  %v15 = vld [vmem:[%s0 + $0x38] sm:$0xff]
  %v16 = vld [vmem:[%s0 + $0x40] sm:$0x7]
  %v17 = vld [vmem:[%s0 + $0x48] sm:$0xff]
  %v18 = vld [vmem:[%s0 + $0x50] sm:$0xff]
  %v19 = vld [vmem:[%s0 + $0x58] sm:$0x7]
  %v20 = vld [vmem:[%s0 + $0x60] sm:$0xff]
  %v21 = vld [vmem:[%s0 + $0x68] sm:$0xff]
  %v22 = vld [vmem:[%s0 + $0x70] sm:$0x7]
  %v23 = vld [vmem:[%s0 + $0x78] sm:$0xff]
  %v24 = vld [vmem:[%s0 + $0x80] sm:$0xff]
  %v25 = vld [vmem:[%s0 + $0x88] sm:$0x7]
  %v26 = vld [vmem:[%s0 + $0x90] sm:$0xff]
  %v27 = vld [vmem:[%s0 + $0x98] sm:$0xff]
  %v28 = vld [vmem:[%s0 + $0xa0] sm:$0x7]
  %v29 = vld [vmem:[%s0 + $0xa8] sm:$0xff]
  %v30 = vld [vmem:[%s0 + $0xb0] sm:$0xff]
  %v31 = vld [vmem:[%s0 + $0xb8] sm:$0x7]
  %v32 = vld [vmem:[%s0 + $0xc0] sm:$0xff]
  %v33 = vld [vmem:[%s0 + $0xc8] sm:$0xff]
  %v34 = vld [vmem:[%s0 + $0xd0] sm:$0x7]
  %v35 = vld [vmem:[%s0 + $0xd8] sm:$0xff]
  %v36 = vld [vmem:[%s0 + $0xe0] sm:$0xff]
  %v37 = vld [vmem:[%s0 + $0xe8] sm:$0x7]
  %v38 = vld [vmem:[%s0 + $0xf0] sm:$0xff]
  %v39 = vld [vmem:[%s0 + $0xf8] sm:$0xff]
  %v40 = vld [vmem:[%s0 + $0x100] sm:$0x7]
  %v41 = vld [vmem:[%s0 + $0x108] sm:$0xff]
  %v42 = vld [vmem:[%s0 + $0x110] sm:$0xff]
  %v43 = vld [vmem:[%s0 + $0x118] sm:$0x7]
  %v44 = vld [vmem:[%s0 + $0x120] sm:$0xff]
  %v45 = vld [vmem:[%s0 + $0x128] sm:$0xff]
  %v46 = vld [vmem:[%s0 + $0x130] sm:$0x7]
  %v47 = vld [vmem:[%s0 + $0x138] sm:$0xff]
  %v48 = vld [vmem:[%s0 + $0x140] sm:$0xff]
  %v49 = vld [vmem:[%s0 + $0x148] sm:$0x7]
  %v50 = vld [vmem:[%s0 + $0x150] sm:$0xff]
  %v51 = vld [vmem:[%s0 + $0x158] sm:$0xff]
  %v52 = vld [vmem:[%s0 + $0x160] sm:$0x7]
  %v53 = vld [vmem:[%s0 + $0x168] sm:$0xff]
  %v54 = vld [vmem:[%s0 + $0x170] sm:$0xff]
  %v55 = vld [vmem:[%s0 + $0x178] sm:$0x7]
  %v56 = vld [vmem:[%s0 + $0x180] sm:$0xff]
  %v57 = vld [vmem:[%s0 + $0x188] sm:$0xff]
  %v58 = vld [vmem:[%s0 + $0x190] sm:$0x7]
  %v59 = vld [vmem:[%s0 + $0x198] sm:$0xff]
  %v60 = vld [vmem:[%s0 + $0x1a0] sm:$0xff]
  %v61 = vld [vmem:[%s0 + $0x1a8] sm:$0x7]
  %v62 = vld [vmem:[%s0 + $0x1b0] sm:$0xff]
  %v63 = vld [vmem:[%s0 + $0x1b8] sm:$0xff]
  %v64 = vld [vmem:[%s0 + $0x1c0] sm:$0x7]
  %v65 = vld [vmem:[%s0 + $0x1c8] sm:$0xff]
  %v66 = vld [vmem:[%s0 + $0x1d0] sm:$0xff]
  %v67 = vld [vmem:[%s0 + $0x1d8] sm:$0x7]
  %v68 = vld [vmem:[%s0 + $0x1e0] sm:$0xff]
  %v69 = vld [vmem:[%s0 + $0x1e8] sm:$0xff]
  %v70 = vld [vmem:[%s0 + $0x1f0] sm:$0x7]
  %v71 = vld [vmem:[%s0 + $0x1f8] sm:$0xff]
  %v72 = vld [vmem:[%s0 + $0x200] sm:$0xff]
  %v73 = vld [vmem:[%s0 + $0x208] sm:$0x7]
  %v74 = vld [vmem:[%s0 + $0x210] sm:$0xff]
  %v75 = vld [vmem:[%s0 + $0x218] sm:$0xff]
  %v76 = vld [vmem:[%s0 + $0x220] sm:$0x7]
  %v77 = vld [vmem:[%s0 + $0x228] sm:$0xff]
  %v78 = vld [vmem:[%s0 + $0x230] sm:$0xff]
  %v79 = vld [vmem:[%s0 + $0x238] sm:$0x7]
  %v80 = vld [vmem:[%s0 + $0x240] sm:$0xff]
  %v81 = vld [vmem:[%s0 + $0x248] sm:$0xff]
  %v82 = vld [vmem:[%s0 + $0x250] sm:$0x7]
  %v83 = vld [vmem:[%s0 + $0x258] sm:$0xff]
  %v84 = vld [vmem:[%s0 + $0x260] sm:$0xff]
  %v85 = vld [vmem:[%s0 + $0x268] sm:$0x7]
  %v86 = vld [vmem:[%s0 + $0x270] sm:$0xff]
  %v87 = vld [vmem:[%s0 + $0x278] sm:$0xff]
  %v88 = vld [vmem:[%s0 + $0x280] sm:$0x7]
  %v89 = vld [vmem:[%s0 + $0x288] sm:$0xff]
  %v90 = vld [vmem:[%s0 + $0x290] sm:$0xff]
  %v91 = vld [vmem:[%s0 + $0x298] sm:$0x7]
  %v92 = vld [vmem:[%s0 + $0x2a0] sm:$0xff]
  %v93 = vld [vmem:[%s0 + $0x2a8] sm:$0xff]
  %v94 = vld [vmem:[%s0 + $0x2b0] sm:$0x7]
  %v95 = vld [vmem:[%s0 + $0x2b8] sm:$0xff]
  %v96 = vld [vmem:[%s0 + $0x2c0] sm:$0xff]
  %v97 = vld [vmem:[%s0 + $0x2c8] sm:$0x7]
  %v98 = vld [vmem:[%s0 + $0x2d0] sm:$0xff]
  %v99 = vld [vmem:[%s0 + $0x2d8] sm:$0xff]
  %v100 = vld [vmem:[%s0 + $0x2e0] sm:$0x7]
  %v101 = vld [vmem:[%s0 + $0x2e8] sm:$0xff]
  %v102 = vld [vmem:[%s0 + $0x2f0] sm:$0xff]
  %v103 = vld [vmem:[%s0 + $0x2f8] sm:$0x7]
  %v104 = vld [vmem:[%s0 + $0x300] sm:$0xff]
  %v105 = vld [vmem:[%s0 + $0x308] sm:$0xff]
  %v106 = vld [vmem:[%s0 + $0x310] sm:$0x7]
  %v107 = vld [vmem:[%s0 + $0x318] sm:$0xff]
  %v108 = vld [vmem:[%s0 + $0x320] sm:$0xff]
  %v109 = vld [vmem:[%s0 + $0x328] sm:$0x7]
  %v110 = vld [vmem:[%s0 + $0x330] sm:$0xff]
  %v111 = vld [vmem:[%s0 + $0x338] sm:$0xff]
  %v112 = vld [vmem:[%s0 + $0x340] sm:$0x7]
  %v113 = vld [vmem:[%s0 + $0x348] sm:$0xff]
  %v114 = vld [vmem:[%s0 + $0x350] sm:$0xff]
  %v115 = vld [vmem:[%s0 + $0x358] sm:$0x7]
  %v116 = vld [vmem:[%s0 + $0x360] sm:$0xff]
  %v117 = vld [vmem:[%s0 + $0x368] sm:$0xff]
  %v118 = vld [vmem:[%s0 + $0x370] sm:$0x7]
  %v119 = vld [vmem:[%s0 + $0x378] sm:$0xff]
  %v120 = vld [vmem:[%s0 + $0x380] sm:$0xff]
  %v121 = vld [vmem:[%s0 + $0x388] sm:$0x7]
  %v122 = vld [vmem:[%s0 + $0x390] sm:$0xff]
  %v123 = vld [vmem:[%s0 + $0x398] sm:$0xff]
  %v124 = vld [vmem:[%s0 + $0x3a0] sm:$0x7]
  %v125 = vld [vmem:[%s0 + $0x3a8] sm:$0xff]
  %v126 = vld [vmem:[%s0 + $0x3b0] sm:$0xff]
  %v127 = vld [vmem:[%s0 + $0x3b8] sm:$0x7]
  %v128 = vld [vmem:[%s0 + $0x3c0] sm:$0xff]
  %v129 = vld [vmem:[%s0 + $0x3c8] sm:$0xff]
  %v130 = vld [vmem:[%s0 + $0x3d0] sm:$0x7]
  %v131 = vld [vmem:[%s0 + $0x3d8] sm:$0xff]
  %v132 = vld [vmem:[%s0 + $0x3e0] sm:$0xff]
  %v133 = vld [vmem:[%s0 + $0x3e8] sm:$0x7]
  %v134 = vld [vmem:[%s0 + $0x3f0] sm:$0xff]
  %v135 = vld [vmem:[%s0 + $0x3f8] sm:$0xff]
  %v136 = vld [vmem:[%s0 + $0x400] sm:$0x7]
  %v137 = vld [vmem:[%s0 + $0x408] sm:$0xff]
  %v138 = vld [vmem:[%s0 + $0x410] sm:$0xff]
  %v139 = vld [vmem:[%s0 + $0x418] sm:$0x7]
  %v140 = vld [vmem:[%s0 + $0x420] sm:$0xff]
  %v141 = vld [vmem:[%s0 + $0x428] sm:$0xff]
  %v142 = vld [vmem:[%s0 + $0x430] sm:$0x7]
  %v143 = vld [vmem:[%s0 + $0x438] sm:$0xff]
  %v144 = vld [vmem:[%s0 + $0x440] sm:$0xff]
  %v145 = vld [vmem:[%s0 + $0x448] sm:$0x7]
  %v146 = vld [vmem:[%s0 + $0x450] sm:$0xff]
  %v147 = vld [vmem:[%s0 + $0x458] sm:$0xff]
  %v148 = vld [vmem:[%s0 + $0x460] sm:$0x7]
  %v149 = vld [vmem:[%s0 + $0x468] sm:$0xff]
  %v150 = vld [vmem:[%s0 + $0x470] sm:$0xff]
  %v151 = vld [vmem:[%s0 + $0x478] sm:$0x7]
  %v152 = vld [vmem:[%s0 + $0x480] sm:$0xff]
  %v153 = vld [vmem:[%s0 + $0x488] sm:$0xff]
  %v154 = vld [vmem:[%s0 + $0x490] sm:$0x7]
  %v155 = vld [vmem:[%s0 + $0x498] sm:$0xff]
  %v156 = vld [vmem:[%s0 + $0x4a0] sm:$0xff]
  %v157 = vld [vmem:[%s0 + $0x4a8] sm:$0x7]
  %v158 = vld [vmem:[%s0 + $0x4b0] sm:$0xff]
  %v159 = vld [vmem:[%s0 + $0x4b8] sm:$0xff]
  %v160 = vld [vmem:[%s0 + $0x4c0] sm:$0x7]
  %v161 = vld [vmem:[%s0 + $0x4c8] sm:$0xff]
  %v162 = vld [vmem:[%s0 + $0x4d0] sm:$0xff]
  %v163 = vld [vmem:[%s0 + $0x4d8] sm:$0x7]
  %v164 = vld [vmem:[%s0 + $0x4e0] sm:$0xff]
  %v165 = vld [vmem:[%s0 + $0x4e8] sm:$0xff]
  %v166 = vld [vmem:[%s0 + $0x4f0] sm:$0x7]
  %v167 = vld [vmem:[%s0 + $0x4f8] sm:$0xff]
  %v168 = vld [vmem:[%s0 + $0x500] sm:$0xff]
  %v169 = vld [vmem:[%s0 + $0x508] sm:$0x7]
  %v170 = vld [vmem:[%s0 + $0x510] sm:$0xff]
  %v171 = vld [vmem:[%s0 + $0x518] sm:$0xff]
  %v172 = vld [vmem:[%s0 + $0x520] sm:$0x7]
  %v173 = vld [vmem:[%s0 + $0x528] sm:$0xff]
  %v174 = vld [vmem:[%s0 + $0x530] sm:$0xff]
  %v175 = vld [vmem:[%s0 + $0x538] sm:$0x7]
  %v176 = vld [vmem:[%s0 + $0x540] sm:$0xff]
  %v177 = vld [vmem:[%s0 + $0x548] sm:$0xff]
  %v178 = vld [vmem:[%s0 + $0x550] sm:$0x7]
  %v179 = vld [vmem:[%s0 + $0x558] sm:$0xff]
  %v180 = vld [vmem:[%s0 + $0x560] sm:$0xff]
  %v181 = vld [vmem:[%s0 + $0x568] sm:$0x7]
  %v182 = vld [vmem:[%s0 + $0x570] sm:$0xff]
  %v183 = vld [vmem:[%s0 + $0x578] sm:$0xff]
  %v184 = vld [vmem:[%s0 + $0x580] sm:$0x7]
  %v185 = vld [vmem:[%s0 + $0x588] sm:$0xff]
  %v186 = vld [vmem:[%s0 + $0x590] sm:$0xff]
  %v187 = vld [vmem:[%s0 + $0x598] sm:$0x7]
  %v188 = vld [vmem:[%s0 + $0x5a0] sm:$0xff]
  %v189 = vld [vmem:[%s0 + $0x5a8] sm:$0xff]
  %v190 = vld [vmem:[%s0 + $0x5b0] sm:$0x7]
  %v191 = vld [vmem:[%s0 + $0x5b8] sm:$0xff]
  %v192 = vld [vmem:[%s0 + $0x5c0] sm:$0xff]
  %v193 = vld [vmem:[%s0 + $0x5c8] sm:$0x7]
  %v194 = vld [vmem:[%s0 + $0x5d0] sm:$0xff]
  %v195 = vld [vmem:[%s0 + $0x5d8] sm:$0xff]
  %v196 = vld [vmem:[%s0 + $0x5e0] sm:$0x7]
  %v197 = vld [vmem:[%s0 + $0x5e8] sm:$0xff]
  %v198 = vld [vmem:[%s0 + $0x5f0] sm:$0xff]
  %v199 = vld [vmem:[%s0 + $0x5f8] sm:$0x7]
  %v200 = vld [vmem:[%s0 + $0x600] sm:$0xff]
  %v201 = vld [vmem:[%s0 + $0x608] sm:$0xff]
  %v202 = vld [vmem:[%s0 + $0x610] sm:$0x7]
  %v203 = vld [vmem:[%s0 + $0x618] sm:$0xff]
  %v204 = vld [vmem:[%s0 + $0x620] sm:$0xff]
  %v205 = vld [vmem:[%s0 + $0x628] sm:$0x7]
  %v206 = vld [vmem:[%s0 + $0x630] sm:$0xff]
  %v207 = vld [vmem:[%s0 + $0x638] sm:$0xff]
  %v208 = vld [vmem:[%s0 + $0x640] sm:$0x7]
  %v209 = vld [vmem:[%s0 + $0x648] sm:$0xff]
  %v210 = vld [vmem:[%s0 + $0x650] sm:$0xff]
  %v211 = vld [vmem:[%s0 + $0x658] sm:$0x7]
  %v212 = vld [vmem:[%s0 + $0x660] sm:$0xff]
  %v213 = vld [vmem:[%s0 + $0x668] sm:$0xff]
  %v214 = vld [vmem:[%s0 + $0x670] sm:$0x7]
  %v215 = vld [vmem:[%s0 + $0x678] sm:$0xff]
  %v216 = vld [vmem:[%s0 + $0x680] sm:$0xff]
  %v217 = vld [vmem:[%s0 + $0x688] sm:$0x7]
  %v218 = vld [vmem:[%s0 + $0x690] sm:$0xff]
  %v219 = vld [vmem:[%s0 + $0x698] sm:$0xff]
  %v220 = vld [vmem:[%s0 + $0x6a0] sm:$0x7]
  %v221 = vld [vmem:[%s0 + $0x6a8] sm:$0xff]
  %v222 = vld [vmem:[%s0 + $0x6b0] sm:$0xff]
  %v223 = vld [vmem:[%s0 + $0x6b8] sm:$0x7]
  %v224 = vld [vmem:[%s0 + $0x6c0] sm:$0xff]
  %v225 = vld [vmem:[%s0 + $0x6c8] sm:$0xff]
  %v226 = vld [vmem:[%s0 + $0x6d0] sm:$0x7]
  %v227 = vld [vmem:[%s0 + $0x6d8] sm:$0xff]
  %v228 = vld [vmem:[%s0 + $0x6e0] sm:$0xff]
  %v229 = vld [vmem:[%s0 + $0x6e8] sm:$0x7]
  %v230 = vld [vmem:[%s0 + $0x6f0] sm:$0xff]
  %v231 = vld [vmem:[%s0 + $0x6f8] sm:$0xff]
  %v232 = vld [vmem:[%s0 + $0x700] sm:$0x7]
  %v233 = vld [vmem:[%s0 + $0x708] sm:$0xff]
  %v234 = vld [vmem:[%s0 + $0x710] sm:$0xff]
  %v235 = vld [vmem:[%s0 + $0x718] sm:$0x7]
  %v236 = vld [vmem:[%s0 + $0x720] sm:$0xff]
  %v237 = vld [vmem:[%s0 + $0x728] sm:$0xff]
  %v238 = vld [vmem:[%s0 + $0x730] sm:$0x7]
  %v239 = vld [vmem:[%s0 + $0x738] sm:$0xff]
  %v240 = vld [vmem:[%s0 + $0x740] sm:$0xff]
  %v241 = vld [vmem:[%s0 + $0x748] sm:$0x7]
  %v242 = vld [vmem:[%s0 + $0x750] sm:$0xff]
  %v243 = vld [vmem:[%s0 + $0x758] sm:$0xff]
  %v244 = vld [vmem:[%s0 + $0x760] sm:$0x7]
  %v245 = vld [vmem:[%s0 + $0x768] sm:$0xff]
  %v246 = vld [vmem:[%s0 + $0x770] sm:$0xff]
  %v247 = vld [vmem:[%s0 + $0x778] sm:$0x7]
  %v248 = vld [vmem:[%s0 + $0x780] sm:$0xff]
  %v249 = vld [vmem:[%s0 + $0x788] sm:$0xff]
  %v250 = vld [vmem:[%s0 + $0x790] sm:$0x7]
  %v251 = vld [vmem:[%s0 + $0x798] sm:$0xff]
  %v252 = vld [vmem:[%s0 + $0x7a0] sm:$0xff]
  %v253 = vld [vmem:[%s0 + $0x7a8] sm:$0x7]
  %v254 = vld [vmem:[%s0 + $0x7b0] sm:$0xff]
  %v255 = vld [vmem:[%s0 + $0x7b8] sm:$0xff]
  %v256 = vld [vmem:[%s0 + $0x7c0] sm:$0x7]
  %v257 = vld [vmem:[%s0 + $0x7c8] sm:$0xff]
  %v258 = vld [vmem:[%s0 + $0x7d0] sm:$0xff]
  %v259 = vld [vmem:[%s0 + $0x7d8] sm:$0x7]
  %v260 = vld [vmem:[%s0 + $0x7e0] sm:$0xff]
  %v261 = vld [vmem:[%s0 + $0x7e8] sm:$0xff]
  %v262 = vld [vmem:[%s0 + $0x7f0] sm:$0x7]
  %v263 = vld [vmem:[%s0 + $0x7f8] sm:$0xff]
  %v264 = vld [vmem:[%s0 + $0x800] sm:$0xff]
  %v265 = vld [vmem:[%s0 + $0x808] sm:$0x7]
  %v266 = vld [vmem:[%s0 + $0x810] sm:$0xff]
  %v267 = vld [vmem:[%s0 + $0x818] sm:$0xff]
  %v268 = vld [vmem:[%s0 + $0x820] sm:$0x7]
  %v269 = vld [vmem:[%s0 + $0x828] sm:$0xff]
  %v270 = vld [vmem:[%s0 + $0x830] sm:$0xff]
  %v271 = vld [vmem:[%s0 + $0x838] sm:$0x7]
  %v272 = vld [vmem:[%s0 + $0x840] sm:$0xff]
  %v273 = vld [vmem:[%s0 + $0x848] sm:$0xff]
  %v274 = vld [vmem:[%s0 + $0x850] sm:$0x7]
  %v275 = vld [vmem:[%s0 + $0x858] sm:$0xff]
  %v276 = vld [vmem:[%s0 + $0x860] sm:$0xff]
  %v277 = vld [vmem:[%s0 + $0x868] sm:$0x7]
  %v278 = vld [vmem:[%s0 + $0x870] sm:$0xff]
  %v279 = vld [vmem:[%s0 + $0x878] sm:$0xff]
  %v280 = vld [vmem:[%s0 + $0x880] sm:$0x7]
  %v281 = vld [vmem:[%s0 + $0x888] sm:$0xff]
  %v282 = vld [vmem:[%s0 + $0x890] sm:$0xff]
  %v283 = vld [vmem:[%s0 + $0x898] sm:$0x7]
  %v284 = vld [vmem:[%s0 + $0x8a0] sm:$0xff]
  %v285 = vld [vmem:[%s0 + $0x8a8] sm:$0xff]
  %v286 = vld [vmem:[%s0 + $0x8b0] sm:$0x7]
  %v287 = vld [vmem:[%s0 + $0x8b8] sm:$0xff]
  %v288 = vld [vmem:[%s0 + $0x8c0] sm:$0xff]
  %v289 = vld [vmem:[%s0 + $0x8c8] sm:$0x7]
  %v290 = vld [vmem:[%s0 + $0x8d0] sm:$0xff]
  %v291 = vld [vmem:[%s0 + $0x8d8] sm:$0xff]
  %v292 = vld [vmem:[%s0 + $0x8e0] sm:$0x7]
  %v293 = vld [vmem:[%s0 + $0x8e8] sm:$0xff]
  %v294 = vld [vmem:[%s0 + $0x8f0] sm:$0xff]
  %v295 = vld [vmem:[%s0 + $0x8f8] sm:$0x7]
  %v296 = vld [vmem:[%s0 + $0x900] sm:$0xff]
  %v297 = vld [vmem:[%s0 + $0x908] sm:$0xff]
  %v298 = vld [vmem:[%s0 + $0x910] sm:$0x7]
  %v299 = vld [vmem:[%s0 + $0x918] sm:$0xff]
  %v300 = vld [vmem:[%s0 + $0x920] sm:$0xff]
  %v301 = vld [vmem:[%s0 + $0x928] sm:$0x7]
  %v302 = vld [vmem:[%s0 + $0x930] sm:$0xff]
  %v303 = vld [vmem:[%s0 + $0x938] sm:$0xff]
  %v304 = vld [vmem:[%s0 + $0x940] sm:$0x7]
  %v305 = vld [vmem:[%s0 + $0x948] sm:$0xff]
  %v306 = vld [vmem:[%s0 + $0x950] sm:$0xff]
  %v307 = vld [vmem:[%s0 + $0x958] sm:$0x7]
  %v308 = vmax.f32 %v8, %v11
  %v309 = vmax.f32 %v9, %v12
  %v310 = vmax.f32 %v10, %v13
  %v311 = vmax.f32 %v14, %v17
  %v312 = vmax.f32 %v15, %v18
  %v313 = vmax.f32 %v16, %v19
  %v314 = vmax.f32 %v20, %v23
  %v315 = vmax.f32 %v21, %v24
  %v316 = vmax.f32 %v22, %v25
  %v317 = vmax.f32 %v26, %v29
  %v318 = vmax.f32 %v27, %v30
  %v319 = vmax.f32 %v28, %v31
  %v320 = vmax.f32 %v32, %v35
  %v321 = vmax.f32 %v33, %v36
  %v322 = vmax.f32 %v34, %v37
  %v323 = vmax.f32 %v38, %v41
  %v324 = vmax.f32 %v39, %v42
  %v325 = vmax.f32 %v40, %v43
  %v326 = vmax.f32 %v44, %v47
  %v327 = vmax.f32 %v45, %v48
  %v328 = vmax.f32 %v46, %v49
  %v329 = vmax.f32 %v50, %v53
  %v330 = vmax.f32 %v51, %v54
  %v331 = vmax.f32 %v52, %v55
  %v332 = vmax.f32 %v56, %v59
  %v333 = vmax.f32 %v57, %v60
  %v334 = vmax.f32 %v58, %v61
  %v335 = vmax.f32 %v62, %v65
  %v336 = vmax.f32 %v63, %v66
  %v337 = vmax.f32 %v64, %v67
  %v338 = vmax.f32 %v68, %v71
  %v339 = vmax.f32 %v69, %v72
  %v340 = vmax.f32 %v70, %v73
  %v341 = vmax.f32 %v74, %v77
  %v342 = vmax.f32 %v75, %v78
  %v343 = vmax.f32 %v76, %v79
  %v344 = vmax.f32 %v80, %v83
  %v345 = vmax.f32 %v81, %v84
  %v346 = vmax.f32 %v82, %v85
  %v347 = vmax.f32 %v86, %v89
  %v348 = vmax.f32 %v87, %v90
  %v349 = vmax.f32 %v88, %v91
  %v350 = vmax.f32 %v92, %v95
  %v351 = vmax.f32 %v93, %v96
  %v352 = vmax.f32 %v94, %v97
  %v353 = vmax.f32 %v98, %v101
  %v354 = vmax.f32 %v99, %v102
  %v355 = vmax.f32 %v100, %v103
  %v356 = vmax.f32 %v104, %v107
  %v357 = vmax.f32 %v105, %v108
  %v358 = vmax.f32 %v106, %v109
  %v359 = vmax.f32 %v110, %v113
  %v360 = vmax.f32 %v111, %v114
  %v361 = vmax.f32 %v112, %v115
  %v362 = vmax.f32 %v116, %v119
  %v363 = vmax.f32 %v117, %v120
  %v364 = vmax.f32 %v118, %v121
  %v365 = vmax.f32 %v122, %v125
  %v366 = vmax.f32 %v123, %v126
  %v367 = vmax.f32 %v124, %v127
  %v368 = vmax.f32 %v128, %v131
  %v369 = vmax.f32 %v129, %v132
  %v370 = vmax.f32 %v130, %v133
  %v371 = vmax.f32 %v134, %v137
  %v372 = vmax.f32 %v135, %v138
  %v373 = vmax.f32 %v136, %v139
  %v374 = vmax.f32 %v140, %v143
  %v375 = vmax.f32 %v141, %v144
  %v376 = vmax.f32 %v142, %v145
  %v377 = vmax.f32 %v146, %v149
  %v378 = vmax.f32 %v147, %v150
  %v379 = vmax.f32 %v148, %v151
  %v380 = vmax.f32 %v152, %v155
  %v381 = vmax.f32 %v153, %v156
  %v382 = vmax.f32 %v154, %v157
  %v383 = vmax.f32 %v158, %v161
  %v384 = vmax.f32 %v159, %v162
  %v385 = vmax.f32 %v160, %v163
  %v386 = vmax.f32 %v164, %v167
  %v387 = vmax.f32 %v165, %v168
  %v388 = vmax.f32 %v166, %v169
  %v389 = vmax.f32 %v170, %v173
  %v390 = vmax.f32 %v171, %v174
  %v391 = vmax.f32 %v172, %v175
  %v392 = vmax.f32 %v176, %v179
  %v393 = vmax.f32 %v177, %v180
  %v394 = vmax.f32 %v178, %v181
  %v395 = vmax.f32 %v182, %v185
  %v396 = vmax.f32 %v183, %v186
  %v397 = vmax.f32 %v184, %v187
  %v398 = vmax.f32 %v188, %v191
  %v399 = vmax.f32 %v189, %v192
  %v400 = vmax.f32 %v190, %v193
  %v401 = vmax.f32 %v194, %v197
  %v402 = vmax.f32 %v195, %v198
  %v403 = vmax.f32 %v196, %v199
  %v404 = vmax.f32 %v200, %v203
  %v405 = vmax.f32 %v201, %v204
  %v406 = vmax.f32 %v202, %v205
  %v407 = vmax.f32 %v206, %v209
  %v408 = vmax.f32 %v207, %v210
  %v409 = vmax.f32 %v208, %v211
  %v410 = vmax.f32 %v212, %v215
  %v411 = vmax.f32 %v213, %v216
  %v412 = vmax.f32 %v214, %v217
  %v413 = vmax.f32 %v218, %v221
  %v414 = vmax.f32 %v219, %v222
  %v415 = vmax.f32 %v220, %v223
  %v416 = vmax.f32 %v224, %v227
  %v417 = vmax.f32 %v225, %v228
  %v418 = vmax.f32 %v226, %v229
  %v419 = vmax.f32 %v230, %v233
  %v420 = vmax.f32 %v231, %v234
  %v421 = vmax.f32 %v232, %v235
  %v422 = vmax.f32 %v236, %v239
  %v423 = vmax.f32 %v237, %v240
  %v424 = vmax.f32 %v238, %v241
  %v425 = vmax.f32 %v242, %v245
  %v426 = vmax.f32 %v243, %v246
  %v427 = vmax.f32 %v244, %v247
  %v428 = vmax.f32 %v248, %v251
  %v429 = vmax.f32 %v249, %v252
  %v430 = vmax.f32 %v250, %v253
  %v431 = vmax.f32 %v254, %v257
  %v432 = vmax.f32 %v255, %v258
  %v433 = vmax.f32 %v256, %v259
  %v434 = vmax.f32 %v260, %v263
  %v435 = vmax.f32 %v261, %v264
  %v436 = vmax.f32 %v262, %v265
  %v437 = vmax.f32 %v266, %v269
  %v438 = vmax.f32 %v267, %v270
  %v439 = vmax.f32 %v268, %v271
  %v440 = vmax.f32 %v272, %v275
  %v441 = vmax.f32 %v273, %v276
  %v442 = vmax.f32 %v274, %v277
  %v443 = vmax.f32 %v278, %v281
  %v444 = vmax.f32 %v279, %v282
  %v445 = vmax.f32 %v280, %v283
  %v446 = vmax.f32 %v284, %v287
  %v447 = vmax.f32 %v285, %v288
  %v448 = vmax.f32 %v286, %v289
  %v449 = vmax.f32 %v290, %v293
  %v450 = vmax.f32 %v291, %v294
  %v451 = vmax.f32 %v292, %v295
  %v452 = vmax.f32 %v296, %v299
  %v453 = vmax.f32 %v297, %v300
  %v454 = vmax.f32 %v298, %v301
  %v455 = vmax.f32 %v302, %v305
  %v456 = vmax.f32 %v303, %v306
  %v457 = vmax.f32 %v304, %v307
  %608 = vrot.lane.b32.xlu0 %v308, 96
  %v609 = vpop.permute.xlu0 %608
  %610 = vrot.lane.b32.xlu0 %v309, 96
  %v611 = vpop.permute.xlu0 %610
  %612 = vrot.lane.b32.xlu0 %v310, 96
  %v613 = vpop.permute.xlu0 %612
  %614 = vrot.lane.b32.xlu0 %v311, 96
  %v615 = vpop.permute.xlu0 %614
  %616 = vrot.lane.b32.xlu0 %v312, 96
  %v617 = vpop.permute.xlu0 %616
  %618 = vrot.lane.b32.xlu0 %v313, 96
  %v619 = vpop.permute.xlu0 %618
  %620 = vrot.lane.b32.xlu0 %v314, 96
  %v621 = vpop.permute.xlu0 %620
  %622 = vrot.lane.b32.xlu0 %v315, 96
  %v623 = vpop.permute.xlu0 %622
  %624 = vrot.lane.b32.xlu0 %v316, 96
  %v625 = vpop.permute.xlu0 %624
  %626 = vrot.lane.b32.xlu0 %v317, 96
  %v627 = vpop.permute.xlu0 %626
  %628 = vrot.lane.b32.xlu0 %v318, 96
  %v629 = vpop.permute.xlu0 %628
  %630 = vrot.lane.b32.xlu0 %v319, 96
  %v631 = vpop.permute.xlu0 %630
  %632 = vrot.lane.b32.xlu0 %v320, 96
  %v633 = vpop.permute.xlu0 %632
  %634 = vrot.lane.b32.xlu0 %v321, 96
  %v635 = vpop.permute.xlu0 %634
  %636 = vrot.lane.b32.xlu0 %v322, 96
  %v637 = vpop.permute.xlu0 %636
  %638 = vrot.lane.b32.xlu0 %v323, 96
  %v639 = vpop.permute.xlu0 %638
  %640 = vrot.lane.b32.xlu0 %v324, 96
  %v641 = vpop.permute.xlu0 %640
  %642 = vrot.lane.b32.xlu0 %v325, 96
  %v643 = vpop.permute.xlu0 %642
  %644 = vrot.lane.b32.xlu0 %v326, 96
  %v645 = vpop.permute.xlu0 %644
  %646 = vrot.lane.b32.xlu0 %v327, 96
  %v647 = vpop.permute.xlu0 %646
  %648 = vrot.lane.b32.xlu0 %v328, 96
  %v649 = vpop.permute.xlu0 %648
  %650 = vrot.lane.b32.xlu0 %v329, 96
  %v651 = vpop.permute.xlu0 %650
  %652 = vrot.lane.b32.xlu0 %v330, 96
  %v653 = vpop.permute.xlu0 %652
  %654 = vrot.lane.b32.xlu0 %v331, 96
  %v655 = vpop.permute.xlu0 %654
  %656 = vrot.lane.b32.xlu0 %v332, 96
  %v657 = vpop.permute.xlu0 %656
  %658 = vrot.lane.b32.xlu0 %v333, 96
  %v659 = vpop.permute.xlu0 %658
  %660 = vrot.lane.b32.xlu0 %v334, 96
  %v661 = vpop.permute.xlu0 %660
  %662 = vrot.lane.b32.xlu0 %v335, 96
  %v663 = vpop.permute.xlu0 %662
  %664 = vrot.lane.b32.xlu0 %v336, 96
  %v665 = vpop.permute.xlu0 %664
  %666 = vrot.lane.b32.xlu0 %v337, 96
  %v667 = vpop.permute.xlu0 %666
  %668 = vrot.lane.b32.xlu0 %v338, 96
  %v669 = vpop.permute.xlu0 %668
  %670 = vrot.lane.b32.xlu0 %v339, 96
  %v671 = vpop.permute.xlu0 %670
  %672 = vrot.lane.b32.xlu0 %v340, 96
  %v673 = vpop.permute.xlu0 %672
  %674 = vrot.lane.b32.xlu0 %v341, 96
  %v675 = vpop.permute.xlu0 %674
  %676 = vrot.lane.b32.xlu0 %v342, 96
  %v677 = vpop.permute.xlu0 %676
  %678 = vrot.lane.b32.xlu0 %v343, 96
  %v679 = vpop.permute.xlu0 %678
  %680 = vrot.lane.b32.xlu0 %v344, 96
  %v681 = vpop.permute.xlu0 %680
  %682 = vrot.lane.b32.xlu0 %v345, 96
  %v683 = vpop.permute.xlu0 %682
  %684 = vrot.lane.b32.xlu0 %v346, 96
  %v685 = vpop.permute.xlu0 %684
  %686 = vrot.lane.b32.xlu0 %v347, 96
  %v687 = vpop.permute.xlu0 %686
  %688 = vrot.lane.b32.xlu0 %v348, 96
  %v689 = vpop.permute.xlu0 %688
  %690 = vrot.lane.b32.xlu0 %v349, 96
  %v691 = vpop.permute.xlu0 %690
  %692 = vrot.lane.b32.xlu0 %v350, 96
  %v693 = vpop.permute.xlu0 %692
  %694 = vrot.lane.b32.xlu0 %v351, 96
  %v695 = vpop.permute.xlu0 %694
  %696 = vrot.lane.b32.xlu0 %v352, 96
  %v697 = vpop.permute.xlu0 %696
  %698 = vrot.lane.b32.xlu0 %v353, 96
  %v699 = vpop.permute.xlu0 %698
  %700 = vrot.lane.b32.xlu0 %v354, 96
  %v701 = vpop.permute.xlu0 %700
  %702 = vrot.lane.b32.xlu0 %v355, 96
  %v703 = vpop.permute.xlu0 %702
  %704 = vrot.lane.b32.xlu0 %v356, 96
  %v705 = vpop.permute.xlu0 %704
  %706 = vrot.lane.b32.xlu0 %v357, 96
  %v707 = vpop.permute.xlu0 %706
  %708 = vrot.lane.b32.xlu0 %v358, 96
  %v709 = vpop.permute.xlu0 %708
  %710 = vrot.lane.b32.xlu0 %v359, 96
  %v711 = vpop.permute.xlu0 %710
  %712 = vrot.lane.b32.xlu0 %v360, 96
  %v713 = vpop.permute.xlu0 %712
  %714 = vrot.lane.b32.xlu0 %v361, 96
  %v715 = vpop.permute.xlu0 %714
  %716 = vrot.lane.b32.xlu0 %v362, 96
  %v717 = vpop.permute.xlu0 %716
  %718 = vrot.lane.b32.xlu0 %v363, 96
  %v719 = vpop.permute.xlu0 %718
  %720 = vrot.lane.b32.xlu0 %v364, 96
  %v721 = vpop.permute.xlu0 %720
  %722 = vrot.lane.b32.xlu0 %v365, 96
  %v723 = vpop.permute.xlu0 %722
  %724 = vrot.lane.b32.xlu0 %v366, 96
  %v725 = vpop.permute.xlu0 %724
  %726 = vrot.lane.b32.xlu0 %v367, 96
  %v727 = vpop.permute.xlu0 %726
  %728 = vrot.lane.b32.xlu0 %v368, 96
  %v729 = vpop.permute.xlu0 %728
  %730 = vrot.lane.b32.xlu0 %v369, 96
  %v731 = vpop.permute.xlu0 %730
  %732 = vrot.lane.b32.xlu0 %v370, 96
  %v733 = vpop.permute.xlu0 %732
  %734 = vrot.lane.b32.xlu0 %v371, 96
  %v735 = vpop.permute.xlu0 %734
  %736 = vrot.lane.b32.xlu0 %v372, 96
  %v737 = vpop.permute.xlu0 %736
  %738 = vrot.lane.b32.xlu0 %v373, 96
  %v739 = vpop.permute.xlu0 %738
  %740 = vrot.lane.b32.xlu0 %v374, 96
  %v741 = vpop.permute.xlu0 %740
  %742 = vrot.lane.b32.xlu0 %v375, 96
  %v743 = vpop.permute.xlu0 %742
  %744 = vrot.lane.b32.xlu0 %v376, 96
  %v745 = vpop.permute.xlu0 %744
  %746 = vrot.lane.b32.xlu0 %v377, 96
  %v747 = vpop.permute.xlu0 %746
  %748 = vrot.lane.b32.xlu0 %v378, 96
  %v749 = vpop.permute.xlu0 %748
  %750 = vrot.lane.b32.xlu0 %v379, 96
  %v751 = vpop.permute.xlu0 %750
  %752 = vrot.lane.b32.xlu0 %v380, 96
  %v753 = vpop.permute.xlu0 %752
  %754 = vrot.lane.b32.xlu0 %v381, 96
  %v755 = vpop.permute.xlu0 %754
  %756 = vrot.lane.b32.xlu0 %v382, 96
  %v757 = vpop.permute.xlu0 %756
  %758 = vrot.lane.b32.xlu0 %v383, 96
  %v759 = vpop.permute.xlu0 %758
  %760 = vrot.lane.b32.xlu0 %v384, 96
  %v761 = vpop.permute.xlu0 %760
  %762 = vrot.lane.b32.xlu0 %v385, 96
  %v763 = vpop.permute.xlu0 %762
  %764 = vrot.lane.b32.xlu0 %v386, 96
  %v765 = vpop.permute.xlu0 %764
  %766 = vrot.lane.b32.xlu0 %v387, 96
  %v767 = vpop.permute.xlu0 %766
  %768 = vrot.lane.b32.xlu0 %v388, 96
  %v769 = vpop.permute.xlu0 %768
  %770 = vrot.lane.b32.xlu0 %v389, 96
  %v771 = vpop.permute.xlu0 %770
  %772 = vrot.lane.b32.xlu0 %v390, 96
  %v773 = vpop.permute.xlu0 %772
  %774 = vrot.lane.b32.xlu0 %v391, 96
  %v775 = vpop.permute.xlu0 %774
  %776 = vrot.lane.b32.xlu0 %v392, 96
  %v777 = vpop.permute.xlu0 %776
  %778 = vrot.lane.b32.xlu0 %v393, 96
  %v779 = vpop.permute.xlu0 %778
  %780 = vrot.lane.b32.xlu0 %v394, 96
  %v781 = vpop.permute.xlu0 %780
  %782 = vrot.lane.b32.xlu0 %v395, 96
  %v783 = vpop.permute.xlu0 %782
  %784 = vrot.lane.b32.xlu0 %v396, 96
  %v785 = vpop.permute.xlu0 %784
  %786 = vrot.lane.b32.xlu0 %v397, 96
  %v787 = vpop.permute.xlu0 %786
  %788 = vrot.lane.b32.xlu0 %v398, 96
  %v789 = vpop.permute.xlu0 %788
  %790 = vrot.lane.b32.xlu0 %v399, 96
  %v791 = vpop.permute.xlu0 %790
  %792 = vrot.lane.b32.xlu0 %v400, 96
  %v793 = vpop.permute.xlu0 %792
  %794 = vrot.lane.b32.xlu0 %v401, 96
  %v795 = vpop.permute.xlu0 %794
  %796 = vrot.lane.b32.xlu0 %v402, 96
  %v797 = vpop.permute.xlu0 %796
  %798 = vrot.lane.b32.xlu0 %v403, 96
  %v799 = vpop.permute.xlu0 %798
  %800 = vrot.lane.b32.xlu0 %v404, 96
  %v801 = vpop.permute.xlu0 %800
  %802 = vrot.lane.b32.xlu0 %v405, 96
  %v803 = vpop.permute.xlu0 %802
  %804 = vrot.lane.b32.xlu0 %v406, 96
  %v805 = vpop.permute.xlu0 %804
  %806 = vrot.lane.b32.xlu0 %v407, 96
  %v807 = vpop.permute.xlu0 %806
  %808 = vrot.lane.b32.xlu0 %v408, 96
  %v809 = vpop.permute.xlu0 %808
  %810 = vrot.lane.b32.xlu0 %v409, 96
  %v811 = vpop.permute.xlu0 %810
  %812 = vrot.lane.b32.xlu0 %v410, 96
  %v813 = vpop.permute.xlu0 %812
  %814 = vrot.lane.b32.xlu0 %v411, 96
  %v815 = vpop.permute.xlu0 %814
  %816 = vrot.lane.b32.xlu0 %v412, 96
  %v817 = vpop.permute.xlu0 %816
  %818 = vrot.lane.b32.xlu0 %v413, 96
  %v819 = vpop.permute.xlu0 %818
  %820 = vrot.lane.b32.xlu0 %v414, 96
  %v821 = vpop.permute.xlu0 %820
  %822 = vrot.lane.b32.xlu0 %v415, 96
  %v823 = vpop.permute.xlu0 %822
  %824 = vrot.lane.b32.xlu0 %v416, 96
  %v825 = vpop.permute.xlu0 %824
  %826 = vrot.lane.b32.xlu0 %v417, 96
  %v827 = vpop.permute.xlu0 %826
  %828 = vrot.lane.b32.xlu0 %v418, 96
  %v829 = vpop.permute.xlu0 %828
  %830 = vrot.lane.b32.xlu0 %v419, 96
  %v831 = vpop.permute.xlu0 %830
  %832 = vrot.lane.b32.xlu0 %v420, 96
  %v833 = vpop.permute.xlu0 %832
  %834 = vrot.lane.b32.xlu0 %v421, 96
  %v835 = vpop.permute.xlu0 %834
  %836 = vrot.lane.b32.xlu0 %v422, 96
  %v837 = vpop.permute.xlu0 %836
  %838 = vrot.lane.b32.xlu0 %v423, 96
  %v839 = vpop.permute.xlu0 %838
  %840 = vrot.lane.b32.xlu0 %v424, 96
  %v841 = vpop.permute.xlu0 %840
  %842 = vrot.lane.b32.xlu0 %v425, 96
  %v843 = vpop.permute.xlu0 %842
  %844 = vrot.lane.b32.xlu0 %v426, 96
  %v845 = vpop.permute.xlu0 %844
  %846 = vrot.lane.b32.xlu0 %v427, 96
  %v847 = vpop.permute.xlu0 %846
  %848 = vrot.lane.b32.xlu0 %v428, 96
  %v849 = vpop.permute.xlu0 %848
  %850 = vrot.lane.b32.xlu0 %v429, 96
  %v851 = vpop.permute.xlu0 %850
  %852 = vrot.lane.b32.xlu0 %v430, 96
  %v853 = vpop.permute.xlu0 %852
  %854 = vrot.lane.b32.xlu0 %v431, 96
  %v855 = vpop.permute.xlu0 %854
  %856 = vrot.lane.b32.xlu0 %v432, 96
  %v857 = vpop.permute.xlu0 %856
  %858 = vrot.lane.b32.xlu0 %v433, 96
  %v859 = vpop.permute.xlu0 %858
  %860 = vrot.lane.b32.xlu0 %v434, 96
  %v861 = vpop.permute.xlu0 %860
  %862 = vrot.lane.b32.xlu0 %v435, 96
  %v863 = vpop.permute.xlu0 %862
  %864 = vrot.lane.b32.xlu0 %v436, 96
  %v865 = vpop.permute.xlu0 %864
  %866 = vrot.lane.b32.xlu0 %v437, 96
  %v867 = vpop.permute.xlu0 %866
  %868 = vrot.lane.b32.xlu0 %v438, 96
  %v869 = vpop.permute.xlu0 %868
  %870 = vrot.lane.b32.xlu0 %v439, 96
  %v871 = vpop.permute.xlu0 %870
  %872 = vrot.lane.b32.xlu0 %v440, 96
  %v873 = vpop.permute.xlu0 %872
  %874 = vrot.lane.b32.xlu0 %v441, 96
  %v875 = vpop.permute.xlu0 %874
  %876 = vrot.lane.b32.xlu0 %v442, 96
  %v877 = vpop.permute.xlu0 %876
  %878 = vrot.lane.b32.xlu0 %v443, 96
  %v879 = vpop.permute.xlu0 %878
  %880 = vrot.lane.b32.xlu0 %v444, 96
  %v881 = vpop.permute.xlu0 %880
  %882 = vrot.lane.b32.xlu0 %v445, 96
  %v883 = vpop.permute.xlu0 %882
  %884 = vrot.lane.b32.xlu0 %v446, 96
  %v885 = vpop.permute.xlu0 %884
  %886 = vrot.lane.b32.xlu0 %v447, 96
  %v887 = vpop.permute.xlu0 %886
  %888 = vrot.lane.b32.xlu0 %v448, 96
  %v889 = vpop.permute.xlu0 %888
  %890 = vrot.lane.b32.xlu0 %v449, 96
  %v891 = vpop.permute.xlu0 %890
  %892 = vrot.lane.b32.xlu0 %v450, 96
  %v893 = vpop.permute.xlu0 %892
  %894 = vrot.lane.b32.xlu0 %v451, 96
  %v895 = vpop.permute.xlu0 %894
  %896 = vrot.lane.b32.xlu0 %v452, 96
  %v897 = vpop.permute.xlu0 %896
  %898 = vrot.lane.b32.xlu0 %v453, 96
  %v899 = vpop.permute.xlu0 %898
  %900 = vrot.lane.b32.xlu0 %v454, 96
  %v901 = vpop.permute.xlu0 %900
  %902 = vrot.lane.b32.xlu0 %v455, 96
  %v903 = vpop.permute.xlu0 %902
  %904 = vrot.lane.b32.xlu0 %v456, 96
  %v905 = vpop.permute.xlu0 %904
  %906 = vrot.lane.b32.xlu0 %v457, 96
  %v907 = vpop.permute.xlu0 %906
  %v1058 = vmax.f32 %v308, %v609
  %v1059 = vmax.f32 %v309, %v611
  %v1060 = vmax.f32 %v310, %v613
  %v1061 = vmax.f32 %v311, %v615
  %v1062 = vmax.f32 %v312, %v617
  %v1063 = vmax.f32 %v313, %v619
  %v1064 = vmax.f32 %v314, %v621
  %v1065 = vmax.f32 %v315, %v623
  %v1066 = vmax.f32 %v316, %v625
  %v1067 = vmax.f32 %v317, %v627
  %v1068 = vmax.f32 %v318, %v629
  %v1069 = vmax.f32 %v319, %v631
  %v1070 = vmax.f32 %v320, %v633
  %v1071 = vmax.f32 %v321, %v635
  %v1072 = vmax.f32 %v322, %v637
  %v1073 = vmax.f32 %v323, %v639
  %v1074 = vmax.f32 %v324, %v641
  %v1075 = vmax.f32 %v325, %v643
  %v1076 = vmax.f32 %v326, %v645
  %v1077 = vmax.f32 %v327, %v647
  %v1078 = vmax.f32 %v328, %v649
  %v1079 = vmax.f32 %v329, %v651
  %v1080 = vmax.f32 %v330, %v653
  %v1081 = vmax.f32 %v331, %v655
  %v1082 = vmax.f32 %v332, %v657
  %v1083 = vmax.f32 %v333, %v659
  %v1084 = vmax.f32 %v334, %v661
  %v1085 = vmax.f32 %v335, %v663
  %v1086 = vmax.f32 %v336, %v665
  %v1087 = vmax.f32 %v337, %v667
  %v1088 = vmax.f32 %v338, %v669
  %v1089 = vmax.f32 %v339, %v671
  %v1090 = vmax.f32 %v340, %v673
  %v1091 = vmax.f32 %v341, %v675
  %v1092 = vmax.f32 %v342, %v677
  %v1093 = vmax.f32 %v343, %v679
  %v1094 = vmax.f32 %v344, %v681
  %v1095 = vmax.f32 %v345, %v683
  %v1096 = vmax.f32 %v346, %v685
  %v1097 = vmax.f32 %v347, %v687
  %v1098 = vmax.f32 %v348, %v689
  %v1099 = vmax.f32 %v349, %v691
  %v1100 = vmax.f32 %v350, %v693
  %v1101 = vmax.f32 %v351, %v695
  %v1102 = vmax.f32 %v352, %v697
  %v1103 = vmax.f32 %v353, %v699
  %v1104 = vmax.f32 %v354, %v701
  %v1105 = vmax.f32 %v355, %v703
  %v1106 = vmax.f32 %v356, %v705
  %v1107 = vmax.f32 %v357, %v707
  %v1108 = vmax.f32 %v358, %v709
  %v1109 = vmax.f32 %v359, %v711
  %v1110 = vmax.f32 %v360, %v713
  %v1111 = vmax.f32 %v361, %v715
  %v1112 = vmax.f32 %v362, %v717
  %v1113 = vmax.f32 %v363, %v719
  %v1114 = vmax.f32 %v364, %v721
  %v1115 = vmax.f32 %v365, %v723
  %v1116 = vmax.f32 %v366, %v725
  %v1117 = vmax.f32 %v367, %v727
  %v1118 = vmax.f32 %v368, %v729
  %v1119 = vmax.f32 %v369, %v731
  %v1120 = vmax.f32 %v370, %v733
  %v1121 = vmax.f32 %v371, %v735
  %v1122 = vmax.f32 %v372, %v737
  %v1123 = vmax.f32 %v373, %v739
  %v1124 = vmax.f32 %v374, %v741
  %v1125 = vmax.f32 %v375, %v743
  %v1126 = vmax.f32 %v376, %v745
  %v1127 = vmax.f32 %v377, %v747
  %v1128 = vmax.f32 %v378, %v749
  %v1129 = vmax.f32 %v379, %v751
  %v1130 = vmax.f32 %v380, %v753
  %v1131 = vmax.f32 %v381, %v755
  %v1132 = vmax.f32 %v382, %v757
  %v1133 = vmax.f32 %v383, %v759
  %v1134 = vmax.f32 %v384, %v761
  %v1135 = vmax.f32 %v385, %v763
  %v1136 = vmax.f32 %v386, %v765
  %v1137 = vmax.f32 %v387, %v767
  %v1138 = vmax.f32 %v388, %v769
  %v1139 = vmax.f32 %v389, %v771
  %v1140 = vmax.f32 %v390, %v773
  %v1141 = vmax.f32 %v391, %v775
  %v1142 = vmax.f32 %v392, %v777
  %v1143 = vmax.f32 %v393, %v779
  %v1144 = vmax.f32 %v394, %v781
  %v1145 = vmax.f32 %v395, %v783
  %v1146 = vmax.f32 %v396, %v785
  %v1147 = vmax.f32 %v397, %v787
  %v1148 = vmax.f32 %v398, %v789
  %v1149 = vmax.f32 %v399, %v791
  %v1150 = vmax.f32 %v400, %v793
  %v1151 = vmax.f32 %v401, %v795
  %v1152 = vmax.f32 %v402, %v797
  %v1153 = vmax.f32 %v403, %v799
  %v1154 = vmax.f32 %v404, %v801
  %v1155 = vmax.f32 %v405, %v803
  %v1156 = vmax.f32 %v406, %v805
  %v1157 = vmax.f32 %v407, %v807
  %v1158 = vmax.f32 %v408, %v809
  %v1159 = vmax.f32 %v409, %v811
  %v1160 = vmax.f32 %v410, %v813
  %v1161 = vmax.f32 %v411, %v815
  %v1162 = vmax.f32 %v412, %v817
  %v1163 = vmax.f32 %v413, %v819
  %v1164 = vmax.f32 %v414, %v821
  %v1165 = vmax.f32 %v415, %v823
  %v1166 = vmax.f32 %v416, %v825
  %v1167 = vmax.f32 %v417, %v827
  %v1168 = vmax.f32 %v418, %v829
  %v1169 = vmax.f32 %v419, %v831
  %v1170 = vmax.f32 %v420, %v833
  %v1171 = vmax.f32 %v421, %v835
  %v1172 = vmax.f32 %v422, %v837
  %v1173 = vmax.f32 %v423, %v839
  %v1174 = vmax.f32 %v424, %v841
  %v1175 = vmax.f32 %v425, %v843
  %v1176 = vmax.f32 %v426, %v845
  %v1177 = vmax.f32 %v427, %v847
  %v1178 = vmax.f32 %v428, %v849
  %v1179 = vmax.f32 %v429, %v851
  %v1180 = vmax.f32 %v430, %v853
  %v1181 = vmax.f32 %v431, %v855
  %v1182 = vmax.f32 %v432, %v857
  %v1183 = vmax.f32 %v433, %v859
  %v1184 = vmax.f32 %v434, %v861
  %v1185 = vmax.f32 %v435, %v863
  %v1186 = vmax.f32 %v436, %v865
  %v1187 = vmax.f32 %v437, %v867
  %v1188 = vmax.f32 %v438, %v869
  %v1189 = vmax.f32 %v439, %v871
  %v1190 = vmax.f32 %v440, %v873
  %v1191 = vmax.f32 %v441, %v875
  %v1192 = vmax.f32 %v442, %v877
  %v1193 = vmax.f32 %v443, %v879
  %v1194 = vmax.f32 %v444, %v881
  %v1195 = vmax.f32 %v445, %v883
  %v1196 = vmax.f32 %v446, %v885
  %v1197 = vmax.f32 %v447, %v887
  %v1198 = vmax.f32 %v448, %v889
  %v1199 = vmax.f32 %v449, %v891
  %v1200 = vmax.f32 %v450, %v893
  %v1201 = vmax.f32 %v451, %v895
  %v1202 = vmax.f32 %v452, %v897
  %v1203 = vmax.f32 %v453, %v899
  %v1204 = vmax.f32 %v454, %v901
  %v1205 = vmax.f32 %v455, %v903
  %v1206 = vmax.f32 %v456, %v905
  %v1207 = vmax.f32 %v457, %v907
  %v1208 = vmax.f32 %v1058, 0.0
  %v1209 = vmax.f32 %v1059, 0.0
  %v1210 = vmax.f32 %v1060, 0.0
  %v1211 = vmax.f32 %v1061, 0.0
  %v1212 = vmax.f32 %v1062, 0.0
  %v1213 = vmax.f32 %v1063, 0.0
  %v1214 = vmax.f32 %v1064, 0.0
  %v1215 = vmax.f32 %v1065, 0.0
  %v1216 = vmax.f32 %v1066, 0.0
  %v1217 = vmax.f32 %v1067, 0.0
  %v1218 = vmax.f32 %v1068, 0.0
  %v1219 = vmax.f32 %v1069, 0.0
  %v1220 = vmax.f32 %v1070, 0.0
  %v1221 = vmax.f32 %v1071, 0.0
  %v1222 = vmax.f32 %v1072, 0.0
  %v1223 = vmax.f32 %v1073, 0.0
  %v1224 = vmax.f32 %v1074, 0.0
  %v1225 = vmax.f32 %v1075, 0.0
  %v1226 = vmax.f32 %v1076, 0.0
  %v1227 = vmax.f32 %v1077, 0.0
  %v1228 = vmax.f32 %v1078, 0.0
  %v1229 = vmax.f32 %v1079, 0.0
  %v1230 = vmax.f32 %v1080, 0.0
  %v1231 = vmax.f32 %v1081, 0.0
  %v1232 = vmax.f32 %v1082, 0.0
  %v1233 = vmax.f32 %v1083, 0.0
  %v1234 = vmax.f32 %v1084, 0.0
  %v1235 = vmax.f32 %v1085, 0.0
  %v1236 = vmax.f32 %v1086, 0.0
  %v1237 = vmax.f32 %v1087, 0.0
  %v1238 = vmax.f32 %v1088, 0.0
  %v1239 = vmax.f32 %v1089, 0.0
  %v1240 = vmax.f32 %v1090, 0.0
  %v1241 = vmax.f32 %v1091, 0.0
  %v1242 = vmax.f32 %v1092, 0.0
  %v1243 = vmax.f32 %v1093, 0.0
  %v1244 = vmax.f32 %v1094, 0.0
  %v1245 = vmax.f32 %v1095, 0.0
  %v1246 = vmax.f32 %v1096, 0.0
  %v1247 = vmax.f32 %v1097, 0.0
  %v1248 = vmax.f32 %v1098, 0.0
  %v1249 = vmax.f32 %v1099, 0.0
  %v1250 = vmax.f32 %v1100, 0.0
  %v1251 = vmax.f32 %v1101, 0.0
  %v1252 = vmax.f32 %v1102, 0.0
  %v1253 = vmax.f32 %v1103, 0.0
  %v1254 = vmax.f32 %v1104, 0.0
  %v1255 = vmax.f32 %v1105, 0.0
  %v1256 = vmax.f32 %v1106, 0.0
  %v1257 = vmax.f32 %v1107, 0.0
  %v1258 = vmax.f32 %v1108, 0.0
  %v1259 = vmax.f32 %v1109, 0.0
  %v1260 = vmax.f32 %v1110, 0.0
  %v1261 = vmax.f32 %v1111, 0.0
  %v1262 = vmax.f32 %v1112, 0.0
  %v1263 = vmax.f32 %v1113, 0.0
  %v1264 = vmax.f32 %v1114, 0.0
  %v1265 = vmax.f32 %v1115, 0.0
  %v1266 = vmax.f32 %v1116, 0.0
  %v1267 = vmax.f32 %v1117, 0.0
  %v1268 = vmax.f32 %v1118, 0.0
  %v1269 = vmax.f32 %v1119, 0.0
  %v1270 = vmax.f32 %v1120, 0.0
  %v1271 = vmax.f32 %v1121, 0.0
  %v1272 = vmax.f32 %v1122, 0.0
  %v1273 = vmax.f32 %v1123, 0.0
  %v1274 = vmax.f32 %v1124, 0.0
  %v1275 = vmax.f32 %v1125, 0.0
  %v1276 = vmax.f32 %v1126, 0.0
  %v1277 = vmax.f32 %v1127, 0.0
  %v1278 = vmax.f32 %v1128, 0.0
  %v1279 = vmax.f32 %v1129, 0.0
  %v1280 = vmax.f32 %v1130, 0.0
  %v1281 = vmax.f32 %v1131, 0.0
  %v1282 = vmax.f32 %v1132, 0.0
  %v1283 = vmax.f32 %v1133, 0.0
  %v1284 = vmax.f32 %v1134, 0.0
  %v1285 = vmax.f32 %v1135, 0.0
  %v1286 = vmax.f32 %v1136, 0.0
  %v1287 = vmax.f32 %v1137, 0.0
  %v1288 = vmax.f32 %v1138, 0.0
  %v1289 = vmax.f32 %v1139, 0.0
  %v1290 = vmax.f32 %v1140, 0.0
  %v1291 = vmax.f32 %v1141, 0.0
  %v1292 = vmax.f32 %v1142, 0.0
  %v1293 = vmax.f32 %v1143, 0.0
  %v1294 = vmax.f32 %v1144, 0.0
  %v1295 = vmax.f32 %v1145, 0.0
  %v1296 = vmax.f32 %v1146, 0.0
  %v1297 = vmax.f32 %v1147, 0.0
  %v1298 = vmax.f32 %v1148, 0.0
  %v1299 = vmax.f32 %v1149, 0.0
  %v1300 = vmax.f32 %v1150, 0.0
  %v1301 = vmax.f32 %v1151, 0.0
  %v1302 = vmax.f32 %v1152, 0.0
  %v1303 = vmax.f32 %v1153, 0.0
  %v1304 = vmax.f32 %v1154, 0.0
  %v1305 = vmax.f32 %v1155, 0.0
  %v1306 = vmax.f32 %v1156, 0.0
  %v1307 = vmax.f32 %v1157, 0.0
  %v1308 = vmax.f32 %v1158, 0.0
  %v1309 = vmax.f32 %v1159, 0.0
  %v1310 = vmax.f32 %v1160, 0.0
  %v1311 = vmax.f32 %v1161, 0.0
  %v1312 = vmax.f32 %v1162, 0.0
  %v1313 = vmax.f32 %v1163, 0.0
  %v1314 = vmax.f32 %v1164, 0.0
  %v1315 = vmax.f32 %v1165, 0.0
  %v1316 = vmax.f32 %v1166, 0.0
  %v1317 = vmax.f32 %v1167, 0.0
  %v1318 = vmax.f32 %v1168, 0.0
  %v1319 = vmax.f32 %v1169, 0.0
  %v1320 = vmax.f32 %v1170, 0.0
  %v1321 = vmax.f32 %v1171, 0.0
  %v1322 = vmax.f32 %v1172, 0.0
  %v1323 = vmax.f32 %v1173, 0.0
  %v1324 = vmax.f32 %v1174, 0.0
  %v1325 = vmax.f32 %v1175, 0.0
  %v1326 = vmax.f32 %v1176, 0.0
  %v1327 = vmax.f32 %v1177, 0.0
  %v1328 = vmax.f32 %v1178, 0.0
  %v1329 = vmax.f32 %v1179, 0.0
  %v1330 = vmax.f32 %v1180, 0.0
  %v1331 = vmax.f32 %v1181, 0.0
  %v1332 = vmax.f32 %v1182, 0.0
  %v1333 = vmax.f32 %v1183, 0.0
  %v1334 = vmax.f32 %v1184, 0.0
  %v1335 = vmax.f32 %v1185, 0.0
  %v1336 = vmax.f32 %v1186, 0.0
  %v1337 = vmax.f32 %v1187, 0.0
  %v1338 = vmax.f32 %v1188, 0.0
  %v1339 = vmax.f32 %v1189, 0.0
  %v1340 = vmax.f32 %v1190, 0.0
  %v1341 = vmax.f32 %v1191, 0.0
  %v1342 = vmax.f32 %v1192, 0.0
  %v1343 = vmax.f32 %v1193, 0.0
  %v1344 = vmax.f32 %v1194, 0.0
  %v1345 = vmax.f32 %v1195, 0.0
  %v1346 = vmax.f32 %v1196, 0.0
  %v1347 = vmax.f32 %v1197, 0.0
  %v1348 = vmax.f32 %v1198, 0.0
  %v1349 = vmax.f32 %v1199, 0.0
  %v1350 = vmax.f32 %v1200, 0.0
  %v1351 = vmax.f32 %v1201, 0.0
  %v1352 = vmax.f32 %v1202, 0.0
  %v1353 = vmax.f32 %v1203, 0.0
  %v1354 = vmax.f32 %v1204, 0.0
  %v1355 = vmax.f32 %v1205, 0.0
  %v1356 = vmax.f32 %v1206, 0.0
  %v1357 = vmax.f32 %v1207, 0.0
  %vm1358 = vcmask 261120
  %1359 = vst.msk [vmem:[%s1] sm:$0xff] %vm1358, %v1208
  %1360 = vst.msk [vmem:[%s1 + $0x8] sm:$0xff] %vm1358, %v1209
  %vm1361 = vcmask 256000
  %1362 = vst.msk [vmem:[%s1 + $0x10] sm:$0x7] %vm1361, %v1210
  %1363 = vst.msk [vmem:[%s1 + $0x18] sm:$0xff] %vm1358, %v1211
  %1364 = vst.msk [vmem:[%s1 + $0x20] sm:$0xff] %vm1358, %v1212
  %1365 = vst.msk [vmem:[%s1 + $0x28] sm:$0x7] %vm1361, %v1213
  %1366 = vst.msk [vmem:[%s1 + $0x30] sm:$0xff] %vm1358, %v1214
  %1367 = vst.msk [vmem:[%s1 + $0x38] sm:$0xff] %vm1358, %v1215
  %1368 = vst.msk [vmem:[%s1 + $0x40] sm:$0x7] %vm1361, %v1216
  %1369 = vst.msk [vmem:[%s1 + $0x48] sm:$0xff] %vm1358, %v1217
  %1370 = vst.msk [vmem:[%s1 + $0x50] sm:$0xff] %vm1358, %v1218
  %1371 = vst.msk [vmem:[%s1 + $0x58] sm:$0x7] %vm1361, %v1219
  %1372 = vst.msk [vmem:[%s1 + $0x60] sm:$0xff] %vm1358, %v1220
  %1373 = vst.msk [vmem:[%s1 + $0x68] sm:$0xff] %vm1358, %v1221
  %1374 = vst.msk [vmem:[%s1 + $0x70] sm:$0x7] %vm1361, %v1222
  %1375 = vst.msk [vmem:[%s1 + $0x78] sm:$0xff] %vm1358, %v1223
  %1376 = vst.msk [vmem:[%s1 + $0x80] sm:$0xff] %vm1358, %v1224
  %1377 = vst.msk [vmem:[%s1 + $0x88] sm:$0x7] %vm1361, %v1225
  %1378 = vst.msk [vmem:[%s1 + $0x90] sm:$0xff] %vm1358, %v1226
  %1379 = vst.msk [vmem:[%s1 + $0x98] sm:$0xff] %vm1358, %v1227
  %1380 = vst.msk [vmem:[%s1 + $0xa0] sm:$0x7] %vm1361, %v1228
  %1381 = vst.msk [vmem:[%s1 + $0xa8] sm:$0xff] %vm1358, %v1229
  %1382 = vst.msk [vmem:[%s1 + $0xb0] sm:$0xff] %vm1358, %v1230
  %1383 = vst.msk [vmem:[%s1 + $0xb8] sm:$0x7] %vm1361, %v1231
  %1384 = vst.msk [vmem:[%s1 + $0xc0] sm:$0xff] %vm1358, %v1232
  %1385 = vst.msk [vmem:[%s1 + $0xc8] sm:$0xff] %vm1358, %v1233
  %1386 = vst.msk [vmem:[%s1 + $0xd0] sm:$0x7] %vm1361, %v1234
  %1387 = vst.msk [vmem:[%s1 + $0xd8] sm:$0xff] %vm1358, %v1235
  %1388 = vst.msk [vmem:[%s1 + $0xe0] sm:$0xff] %vm1358, %v1236
  %1389 = vst.msk [vmem:[%s1 + $0xe8] sm:$0x7] %vm1361, %v1237
  %1390 = vst.msk [vmem:[%s1 + $0xf0] sm:$0xff] %vm1358, %v1238
  %1391 = vst.msk [vmem:[%s1 + $0xf8] sm:$0xff] %vm1358, %v1239
  %1392 = vst.msk [vmem:[%s1 + $0x100] sm:$0x7] %vm1361, %v1240
  %1393 = vst.msk [vmem:[%s1 + $0x108] sm:$0xff] %vm1358, %v1241
  %1394 = vst.msk [vmem:[%s1 + $0x110] sm:$0xff] %vm1358, %v1242
  %1395 = vst.msk [vmem:[%s1 + $0x118] sm:$0x7] %vm1361, %v1243
  %1396 = vst.msk [vmem:[%s1 + $0x120] sm:$0xff] %vm1358, %v1244
  %1397 = vst.msk [vmem:[%s1 + $0x128] sm:$0xff] %vm1358, %v1245
  %1398 = vst.msk [vmem:[%s1 + $0x130] sm:$0x7] %vm1361, %v1246
  %1399 = vst.msk [vmem:[%s1 + $0x138] sm:$0xff] %vm1358, %v1247
  %1400 = vst.msk [vmem:[%s1 + $0x140] sm:$0xff] %vm1358, %v1248
  %1401 = vst.msk [vmem:[%s1 + $0x148] sm:$0x7] %vm1361, %v1249
  %1402 = vst.msk [vmem:[%s1 + $0x150] sm:$0xff] %vm1358, %v1250
  %1403 = vst.msk [vmem:[%s1 + $0x158] sm:$0xff] %vm1358, %v1251
  %1404 = vst.msk [vmem:[%s1 + $0x160] sm:$0x7] %vm1361, %v1252
  %1405 = vst.msk [vmem:[%s1 + $0x168] sm:$0xff] %vm1358, %v1253
  %1406 = vst.msk [vmem:[%s1 + $0x170] sm:$0xff] %vm1358, %v1254
  %1407 = vst.msk [vmem:[%s1 + $0x178] sm:$0x7] %vm1361, %v1255
  %1408 = vst.msk [vmem:[%s1 + $0x180] sm:$0xff] %vm1358, %v1256
  %1409 = vst.msk [vmem:[%s1 + $0x188] sm:$0xff] %vm1358, %v1257
  %1410 = vst.msk [vmem:[%s1 + $0x190] sm:$0x7] %vm1361, %v1258
  %1411 = vst.msk [vmem:[%s1 + $0x198] sm:$0xff] %vm1358, %v1259
  %1412 = vst.msk [vmem:[%s1 + $0x1a0] sm:$0xff] %vm1358, %v1260
  %1413 = vst.msk [vmem:[%s1 + $0x1a8] sm:$0x7] %vm1361, %v1261
  %1414 = vst.msk [vmem:[%s1 + $0x1b0] sm:$0xff] %vm1358, %v1262
  %1415 = vst.msk [vmem:[%s1 + $0x1b8] sm:$0xff] %vm1358, %v1263
  %1416 = vst.msk [vmem:[%s1 + $0x1c0] sm:$0x7] %vm1361, %v1264
  %1417 = vst.msk [vmem:[%s1 + $0x1c8] sm:$0xff] %vm1358, %v1265
  %1418 = vst.msk [vmem:[%s1 + $0x1d0] sm:$0xff] %vm1358, %v1266
  %1419 = vst.msk [vmem:[%s1 + $0x1d8] sm:$0x7] %vm1361, %v1267
  %1420 = vst.msk [vmem:[%s1 + $0x1e0] sm:$0xff] %vm1358, %v1268
  %1421 = vst.msk [vmem:[%s1 + $0x1e8] sm:$0xff] %vm1358, %v1269
  %1422 = vst.msk [vmem:[%s1 + $0x1f0] sm:$0x7] %vm1361, %v1270
  %1423 = vst.msk [vmem:[%s1 + $0x1f8] sm:$0xff] %vm1358, %v1271
  %1424 = vst.msk [vmem:[%s1 + $0x200] sm:$0xff] %vm1358, %v1272
  %1425 = vst.msk [vmem:[%s1 + $0x208] sm:$0x7] %vm1361, %v1273
  %1426 = vst.msk [vmem:[%s1 + $0x210] sm:$0xff] %vm1358, %v1274
  %1427 = vst.msk [vmem:[%s1 + $0x218] sm:$0xff] %vm1358, %v1275
  %1428 = vst.msk [vmem:[%s1 + $0x220] sm:$0x7] %vm1361, %v1276
  %1429 = vst.msk [vmem:[%s1 + $0x228] sm:$0xff] %vm1358, %v1277
  %1430 = vst.msk [vmem:[%s1 + $0x230] sm:$0xff] %vm1358, %v1278
  %1431 = vst.msk [vmem:[%s1 + $0x238] sm:$0x7] %vm1361, %v1279
  %1432 = vst.msk [vmem:[%s1 + $0x240] sm:$0xff] %vm1358, %v1280
  %1433 = vst.msk [vmem:[%s1 + $0x248] sm:$0xff] %vm1358, %v1281
  %1434 = vst.msk [vmem:[%s1 + $0x250] sm:$0x7] %vm1361, %v1282
  %1435 = vst.msk [vmem:[%s1 + $0x258] sm:$0xff] %vm1358, %v1283
  %1436 = vst.msk [vmem:[%s1 + $0x260] sm:$0xff] %vm1358, %v1284
  %1437 = vst.msk [vmem:[%s1 + $0x268] sm:$0x7] %vm1361, %v1285
  %1438 = vst.msk [vmem:[%s1 + $0x270] sm:$0xff] %vm1358, %v1286
  %1439 = vst.msk [vmem:[%s1 + $0x278] sm:$0xff] %vm1358, %v1287
  %1440 = vst.msk [vmem:[%s1 + $0x280] sm:$0x7] %vm1361, %v1288
  %1441 = vst.msk [vmem:[%s1 + $0x288] sm:$0xff] %vm1358, %v1289
  %1442 = vst.msk [vmem:[%s1 + $0x290] sm:$0xff] %vm1358, %v1290
  %1443 = vst.msk [vmem:[%s1 + $0x298] sm:$0x7] %vm1361, %v1291
  %1444 = vst.msk [vmem:[%s1 + $0x2a0] sm:$0xff] %vm1358, %v1292
  %1445 = vst.msk [vmem:[%s1 + $0x2a8] sm:$0xff] %vm1358, %v1293
  %1446 = vst.msk [vmem:[%s1 + $0x2b0] sm:$0x7] %vm1361, %v1294
  %1447 = vst.msk [vmem:[%s1 + $0x2b8] sm:$0xff] %vm1358, %v1295
  %1448 = vst.msk [vmem:[%s1 + $0x2c0] sm:$0xff] %vm1358, %v1296
  %1449 = vst.msk [vmem:[%s1 + $0x2c8] sm:$0x7] %vm1361, %v1297
  %1450 = vst.msk [vmem:[%s1 + $0x2d0] sm:$0xff] %vm1358, %v1298
  %1451 = vst.msk [vmem:[%s1 + $0x2d8] sm:$0xff] %vm1358, %v1299
  %1452 = vst.msk [vmem:[%s1 + $0x2e0] sm:$0x7] %vm1361, %v1300
  %1453 = vst.msk [vmem:[%s1 + $0x2e8] sm:$0xff] %vm1358, %v1301
  %1454 = vst.msk [vmem:[%s1 + $0x2f0] sm:$0xff] %vm1358, %v1302
  %1455 = vst.msk [vmem:[%s1 + $0x2f8] sm:$0x7] %vm1361, %v1303
  %1456 = vst.msk [vmem:[%s1 + $0x300] sm:$0xff] %vm1358, %v1304
  %1457 = vst.msk [vmem:[%s1 + $0x308] sm:$0xff] %vm1358, %v1305
  %1458 = vst.msk [vmem:[%s1 + $0x310] sm:$0x7] %vm1361, %v1306
  %1459 = vst.msk [vmem:[%s1 + $0x318] sm:$0xff] %vm1358, %v1307
  %1460 = vst.msk [vmem:[%s1 + $0x320] sm:$0xff] %vm1358, %v1308
  %1461 = vst.msk [vmem:[%s1 + $0x328] sm:$0x7] %vm1361, %v1309
  %1462 = vst.msk [vmem:[%s1 + $0x330] sm:$0xff] %vm1358, %v1310
  %1463 = vst.msk [vmem:[%s1 + $0x338] sm:$0xff] %vm1358, %v1311
  %1464 = vst.msk [vmem:[%s1 + $0x340] sm:$0x7] %vm1361, %v1312
  %1465 = vst.msk [vmem:[%s1 + $0x348] sm:$0xff] %vm1358, %v1313
  %1466 = vst.msk [vmem:[%s1 + $0x350] sm:$0xff] %vm1358, %v1314
  %1467 = vst.msk [vmem:[%s1 + $0x358] sm:$0x7] %vm1361, %v1315
  %1468 = vst.msk [vmem:[%s1 + $0x360] sm:$0xff] %vm1358, %v1316
  %1469 = vst.msk [vmem:[%s1 + $0x368] sm:$0xff] %vm1358, %v1317
  %1470 = vst.msk [vmem:[%s1 + $0x370] sm:$0x7] %vm1361, %v1318
  %1471 = vst.msk [vmem:[%s1 + $0x378] sm:$0xff] %vm1358, %v1319
  %1472 = vst.msk [vmem:[%s1 + $0x380] sm:$0xff] %vm1358, %v1320
  %1473 = vst.msk [vmem:[%s1 + $0x388] sm:$0x7] %vm1361, %v1321
  %1474 = vst.msk [vmem:[%s1 + $0x390] sm:$0xff] %vm1358, %v1322
  %1475 = vst.msk [vmem:[%s1 + $0x398] sm:$0xff] %vm1358, %v1323
  %1476 = vst.msk [vmem:[%s1 + $0x3a0] sm:$0x7] %vm1361, %v1324
  %1477 = vst.msk [vmem:[%s1 + $0x3a8] sm:$0xff] %vm1358, %v1325
  %1478 = vst.msk [vmem:[%s1 + $0x3b0] sm:$0xff] %vm1358, %v1326
  %1479 = vst.msk [vmem:[%s1 + $0x3b8] sm:$0x7] %vm1361, %v1327
  %1480 = vst.msk [vmem:[%s1 + $0x3c0] sm:$0xff] %vm1358, %v1328
  %1481 = vst.msk [vmem:[%s1 + $0x3c8] sm:$0xff] %vm1358, %v1329
  %1482 = vst.msk [vmem:[%s1 + $0x3d0] sm:$0x7] %vm1361, %v1330
  %1483 = vst.msk [vmem:[%s1 + $0x3d8] sm:$0xff] %vm1358, %v1331
  %1484 = vst.msk [vmem:[%s1 + $0x3e0] sm:$0xff] %vm1358, %v1332
  %1485 = vst.msk [vmem:[%s1 + $0x3e8] sm:$0x7] %vm1361, %v1333
  %1486 = vst.msk [vmem:[%s1 + $0x3f0] sm:$0xff] %vm1358, %v1334
  %1487 = vst.msk [vmem:[%s1 + $0x3f8] sm:$0xff] %vm1358, %v1335
  %1488 = vst.msk [vmem:[%s1 + $0x400] sm:$0x7] %vm1361, %v1336
  %1489 = vst.msk [vmem:[%s1 + $0x408] sm:$0xff] %vm1358, %v1337
  %1490 = vst.msk [vmem:[%s1 + $0x410] sm:$0xff] %vm1358, %v1338
  %1491 = vst.msk [vmem:[%s1 + $0x418] sm:$0x7] %vm1361, %v1339
  %1492 = vst.msk [vmem:[%s1 + $0x420] sm:$0xff] %vm1358, %v1340
  %1493 = vst.msk [vmem:[%s1 + $0x428] sm:$0xff] %vm1358, %v1341
  %1494 = vst.msk [vmem:[%s1 + $0x430] sm:$0x7] %vm1361, %v1342
  %1495 = vst.msk [vmem:[%s1 + $0x438] sm:$0xff] %vm1358, %v1343
  %1496 = vst.msk [vmem:[%s1 + $0x440] sm:$0xff] %vm1358, %v1344
  %1497 = vst.msk [vmem:[%s1 + $0x448] sm:$0x7] %vm1361, %v1345
  %1498 = vst.msk [vmem:[%s1 + $0x450] sm:$0xff] %vm1358, %v1346
  %1499 = vst.msk [vmem:[%s1 + $0x458] sm:$0xff] %vm1358, %v1347
  %1500 = vst.msk [vmem:[%s1 + $0x460] sm:$0x7] %vm1361, %v1348
  %1501 = vst.msk [vmem:[%s1 + $0x468] sm:$0xff] %vm1358, %v1349
  %1502 = vst.msk [vmem:[%s1 + $0x470] sm:$0xff] %vm1358, %v1350
  %1503 = vst.msk [vmem:[%s1 + $0x478] sm:$0x7] %vm1361, %v1351
  %1504 = vst.msk [vmem:[%s1 + $0x480] sm:$0xff] %vm1358, %v1352
  %1505 = vst.msk [vmem:[%s1 + $0x488] sm:$0xff] %vm1358, %v1353
  %1506 = vst.msk [vmem:[%s1 + $0x490] sm:$0x7] %vm1361, %v1354
  %1507 = vst.msk [vmem:[%s1 + $0x498] sm:$0xff] %vm1358, %v1355
  %1508 = vst.msk [vmem:[%s1 + $0x4a0] sm:$0xff] %vm1358, %v1356
  %1509 = vst.msk [vmem:[%s1 + $0x4a8] sm:$0x7] %vm1361, %v1357
  // Predicated region
  $region6: #{cnn_forward.7} parent=0 // pred_check
    _
  $region7: #{cnn_forward.7} parent=0 // pred_check_branch
    %1511 = sbr.rel (0) target = $region9
  $region8: #{cnn_forward.7} parent=0 // pred_region
    _
  $region9: #{cnn_forward.7} parent=0 // pred_fallthru
    _
  // Predicated region
  $region10: #{cnn_forward.7} parent=0 // pred_check
    _
  $region11: #{cnn_forward.7} parent=0 // pred_check_branch
    %1513 = sbr.rel (0) target = $region13
  $region12: #{cnn_forward.7} parent=0 // pred_region
    _
  $region13: #{cnn_forward.7} parent=0 // pred_fallthru
    _

// kernel: cnn_forward.9
$region0: #{cnn_forward.9}
  #allocation0 [shape = 'u32[]', space=smem, size = 0x4, offset = 0x4, fixed_abs, tag = 'smem constant byte address 0x4 - core index']
  #allocation1 [shape = 'u32[144,128]{1,0:T(1,128)}', space=vmem, size = 0x12000, scoped, tag = 'internal scratch']
  %s0 = inlined_call_operand.vmem [shape: f32[10,2,4,128], index: 0, kind: input, shape index: {}]
  %s1 = inlined_call_operand.vmem [shape: f32[10,4,64], index: 1, kind: output, shape index: {}]
  %s2 = sld [smem:[#allocation0]]
  $region14: #{cnn_forward.9} parent=0
    _
  %s4 = ssub.s32 1, %s2
  %s5 = scalar_select 0, %s4, %s2
  // Predicated region
  $region2: #{cnn_forward.9} parent=0 // pred_check
    _
  $region3: #{cnn_forward.9} parent=0 // pred_check_branch
    %7 = sbr.rel (0) target = $region5
  $region4: #{cnn_forward.9} parent=0 // pred_region
    _
  $region5: #{cnn_forward.9} parent=0 // pred_fallthru
    _
  %v8 = vld [vmem:[%s0] sm:$0xf]
  %v9 = vld [vmem:[%s0 + $0x4] sm:$0xf]
  %v10 = vld [vmem:[%s0 + $0x8] sm:$0xf]
  %v11 = vld [vmem:[%s0 + $0xc] sm:$0xf]
  %v12 = vld [vmem:[%s0 + $0x10] sm:$0xf]
  %v13 = vld [vmem:[%s0 + $0x14] sm:$0xf]
  %v14 = vld [vmem:[%s0 + $0x18] sm:$0xf]
  %v15 = vld [vmem:[%s0 + $0x1c] sm:$0xf]
  %v16 = vld [vmem:[%s0 + $0x20] sm:$0xf]
  %v17 = vld [vmem:[%s0 + $0x24] sm:$0xf]
  %v18 = vld [vmem:[%s0 + $0x28] sm:$0xf]
  %v19 = vld [vmem:[%s0 + $0x2c] sm:$0xf]
  %v20 = vld [vmem:[%s0 + $0x30] sm:$0xf]
  %v21 = vld [vmem:[%s0 + $0x34] sm:$0xf]
  %v22 = vld [vmem:[%s0 + $0x38] sm:$0xf]
  %v23 = vld [vmem:[%s0 + $0x3c] sm:$0xf]
  %v24 = vld [vmem:[%s0 + $0x40] sm:$0xf]
  %v25 = vld [vmem:[%s0 + $0x44] sm:$0xf]
  %v26 = vld [vmem:[%s0 + $0x48] sm:$0xf]
  %v27 = vld [vmem:[%s0 + $0x4c] sm:$0xf]
  %v28 = vmax.f32 %v8, %v9
  %v29 = vmax.f32 %v10, %v11
  %v30 = vmax.f32 %v12, %v13
  %v31 = vmax.f32 %v14, %v15
  %v32 = vmax.f32 %v16, %v17
  %v33 = vmax.f32 %v18, %v19
  %v34 = vmax.f32 %v20, %v21
  %v35 = vmax.f32 %v22, %v23
  %v36 = vmax.f32 %v24, %v25
  %v37 = vmax.f32 %v26, %v27
  %48 = vrot.lane.b32.xlu0 %v28, 64
  %v49 = vpop.permute.xlu0 %48
  %50 = vrot.lane.b32.xlu0 %v29, 64
  %v51 = vpop.permute.xlu0 %50
  %52 = vrot.lane.b32.xlu0 %v30, 64
  %v53 = vpop.permute.xlu0 %52
  %54 = vrot.lane.b32.xlu0 %v31, 64
  %v55 = vpop.permute.xlu0 %54
  %56 = vrot.lane.b32.xlu0 %v32, 64
  %v57 = vpop.permute.xlu0 %56
  %58 = vrot.lane.b32.xlu0 %v33, 64
  %v59 = vpop.permute.xlu0 %58
  %60 = vrot.lane.b32.xlu0 %v34, 64
  %v61 = vpop.permute.xlu0 %60
  %62 = vrot.lane.b32.xlu0 %v35, 64
  %v63 = vpop.permute.xlu0 %62
  %64 = vrot.lane.b32.xlu0 %v36, 64
  %v65 = vpop.permute.xlu0 %64
  %66 = vrot.lane.b32.xlu0 %v37, 64
  %v67 = vpop.permute.xlu0 %66
  %v78 = vmax.f32 %v28, %v49
  %v79 = vmax.f32 %v29, %v51
  %v80 = vmax.f32 %v30, %v53
  %v81 = vmax.f32 %v31, %v55
  %v82 = vmax.f32 %v32, %v57
  %v83 = vmax.f32 %v33, %v59
  %v84 = vmax.f32 %v34, %v61
  %v85 = vmax.f32 %v35, %v63
  %v86 = vmax.f32 %v36, %v65
  %v87 = vmax.f32 %v37, %v67
  %v88 = vmax.f32 %v78, 0.0
  %v89 = vmax.f32 %v79, 0.0
  %v90 = vmax.f32 %v80, 0.0
  %v91 = vmax.f32 %v81, 0.0
  %v92 = vmax.f32 %v82, 0.0
  %v93 = vmax.f32 %v83, 0.0
  %v94 = vmax.f32 %v84, 0.0
  %v95 = vmax.f32 %v85, 0.0
  %v96 = vmax.f32 %v86, 0.0
  %v97 = vmax.f32 %v87, 0.0
  %vm98 = vcmask 519168
  %99 = vst.msk [vmem:[%s1] sm:$0xf] %vm98, %v88
  %100 = vst.msk [vmem:[%s1 + $0x4] sm:$0xf] %vm98, %v89
  %101 = vst.msk [vmem:[%s1 + $0x8] sm:$0xf] %vm98, %v90
  %102 = vst.msk [vmem:[%s1 + $0xc] sm:$0xf] %vm98, %v91
  %103 = vst.msk [vmem:[%s1 + $0x10] sm:$0xf] %vm98, %v92
  %104 = vst.msk [vmem:[%s1 + $0x14] sm:$0xf] %vm98, %v93
  %105 = vst.msk [vmem:[%s1 + $0x18] sm:$0xf] %vm98, %v94
  %106 = vst.msk [vmem:[%s1 + $0x1c] sm:$0xf] %vm98, %v95
  %107 = vst.msk [vmem:[%s1 + $0x20] sm:$0xf] %vm98, %v96
  %108 = vst.msk [vmem:[%s1 + $0x24] sm:$0xf] %vm98, %v97
  // Predicated region
  $region6: #{cnn_forward.9} parent=0 // pred_check
    _
  $region7: #{cnn_forward.9} parent=0 // pred_check_branch
    %110 = sbr.rel (0) target = $region9
  $region8: #{cnn_forward.9} parent=0 // pred_region
    _
  $region9: #{cnn_forward.9} parent=0 // pred_fallthru
    _
  // Predicated region
  $region10: #{cnn_forward.9} parent=0 // pred_check
    _
  $region11: #{cnn_forward.9} parent=0 // pred_check_branch
    %112 = sbr.rel (0) target = $region13
  $region12: #{cnn_forward.9} parent=0 // pred_region
    _
  $region13: #{cnn_forward.9} parent=0 // pred_fallthru
    _

// kernel: cnn_forward.8
$region0: #{cnn_forward.8}
  #allocation0 [shape = 'u32[]', space=smem, size = 0x4, offset = 0x4, fixed_abs, tag = 'smem constant byte address 0x4 - core index']
  #allocation1 [shape = 'u32[144,128]{1,0:T(1,128)}', space=vmem, size = 0x12000, scoped, tag = 'internal scratch']
  %s0 = inlined_call_operand.vmem [shape: f32[160,512], index: 0, kind: input, shape index: {}]
  %s1 = inlined_call_operand.vmem [shape: f32[512,64], index: 1, kind: input, shape index: {}]
  %s2 = inlined_call_operand.vmem [shape: f32[1,64], index: 2, kind: input, shape index: {}]
  %s3 = inlined_call_operand.vmem [shape: f32[160,64], index: 3, kind: output, shape index: {}]
  %s4 = sld [smem:[#allocation0]]
  $region22: #{cnn_forward.8} parent=0
    _
  %s6 = ssub.s32 1, %s4
  %s7 = scalar_select 0, %s6, %s4
  // Predicated region
  $region2: #{cnn_forward.8} parent=0 // pred_check
    _
  $region3: #{cnn_forward.8} parent=0 // pred_check_branch
    %9 = sbr.rel (0) target = $region5
  $region4: #{cnn_forward.8} parent=0 // pred_region
    _
  $region5: #{cnn_forward.8} parent=0 // pred_fallthru
    _
  // Predicated region
  $region6: #{cnn_forward.8} parent=0 // pred_check
    _
  $region7: #{cnn_forward.8} parent=0 // pred_check_branch
    %11 = sbr.rel (0) target = $region9
  $region8: #{cnn_forward.8} parent=0 // pred_region
    _
  $region9: #{cnn_forward.8} parent=0 // pred_fallthru
    _
  // Predicated region
  $region10: #{cnn_forward.8} parent=0 // pred_check
    _
  $region11: #{cnn_forward.8} parent=0 // pred_check_branch
    %13 = sbr.rel (0) target = $region13
  $region12: #{cnn_forward.8} parent=0 // pred_region
    _
  $region13: #{cnn_forward.8} parent=0 // pred_fallthru
    _
  %v14 = vld [vmem:[%s0] sm:$0xff]
  %v15 = vld [vmem:[%s0 + $0x8] sm:$0xff]
  %v16 = vld [vmem:[%s0 + $0x10] sm:$0xff]
  %v17 = vld [vmem:[%s0 + $0x18] sm:$0xff]
  %v18 = vld [vmem:[%s0 + $0x20] sm:$0xff]
  %v19 = vld [vmem:[%s0 + $0x28] sm:$0xff]
  %v20 = vld [vmem:[%s0 + $0x30] sm:$0xff]
  %v21 = vld [vmem:[%s0 + $0x38] sm:$0xff]
  %v22 = vld [vmem:[%s0 + $0x40] sm:$0xff]
  %v23 = vld [vmem:[%s0 + $0x48] sm:$0xff]
  %v24 = vld [vmem:[%s0 + $0x50] sm:$0xff]
  %v25 = vld [vmem:[%s0 + $0x58] sm:$0xff]
  %v26 = vld [vmem:[%s0 + $0x60] sm:$0xff]
  %v27 = vld [vmem:[%s0 + $0x68] sm:$0xff]
  %v28 = vld [vmem:[%s0 + $0x70] sm:$0xff]
  %v29 = vld [vmem:[%s0 + $0x78] sm:$0xff]
  %v30 = vld [vmem:[%s0 + $0x80] sm:$0xff]
  %v31 = vld [vmem:[%s0 + $0x88] sm:$0xff]
  %v32 = vld [vmem:[%s0 + $0x90] sm:$0xff]
  %v33 = vld [vmem:[%s0 + $0x98] sm:$0xff]
  %v34 = vld [vmem:[%s0 + $0xa0] sm:$0xff]
  %v35 = vld [vmem:[%s0 + $0xa8] sm:$0xff]
  %v36 = vld [vmem:[%s0 + $0xb0] sm:$0xff]
  %v37 = vld [vmem:[%s0 + $0xb8] sm:$0xff]
  %v38 = vld [vmem:[%s0 + $0xc0] sm:$0xff]
  %v39 = vld [vmem:[%s0 + $0xc8] sm:$0xff]
  %v40 = vld [vmem:[%s0 + $0xd0] sm:$0xff]
  %v41 = vld [vmem:[%s0 + $0xd8] sm:$0xff]
  %v42 = vld [vmem:[%s0 + $0xe0] sm:$0xff]
  %v43 = vld [vmem:[%s0 + $0xe8] sm:$0xff]
  %v44 = vld [vmem:[%s0 + $0xf0] sm:$0xff]
  %v45 = vld [vmem:[%s0 + $0xf8] sm:$0xff]
  %v46 = vld [vmem:[%s0 + $0x100] sm:$0xff]
  %v47 = vld [vmem:[%s0 + $0x108] sm:$0xff]
  %v48 = vld [vmem:[%s0 + $0x110] sm:$0xff]
  %v49 = vld [vmem:[%s0 + $0x118] sm:$0xff]
  %v50 = vld [vmem:[%s0 + $0x120] sm:$0xff]
  %v51 = vld [vmem:[%s0 + $0x128] sm:$0xff]
  %v52 = vld [vmem:[%s0 + $0x130] sm:$0xff]
  %v53 = vld [vmem:[%s0 + $0x138] sm:$0xff]
  %v54 = vld [vmem:[%s0 + $0x140] sm:$0xff]
  %v55 = vld [vmem:[%s0 + $0x148] sm:$0xff]
  %v56 = vld [vmem:[%s0 + $0x150] sm:$0xff]
  %v57 = vld [vmem:[%s0 + $0x158] sm:$0xff]
  %v58 = vld [vmem:[%s0 + $0x160] sm:$0xff]
  %v59 = vld [vmem:[%s0 + $0x168] sm:$0xff]
  %v60 = vld [vmem:[%s0 + $0x170] sm:$0xff]
  %v61 = vld [vmem:[%s0 + $0x178] sm:$0xff]
  %v62 = vld [vmem:[%s0 + $0x180] sm:$0xff]
  %v63 = vld [vmem:[%s0 + $0x188] sm:$0xff]
  %v64 = vld [vmem:[%s0 + $0x190] sm:$0xff]
  %v65 = vld [vmem:[%s0 + $0x198] sm:$0xff]
  %v66 = vld [vmem:[%s0 + $0x1a0] sm:$0xff]
  %v67 = vld [vmem:[%s0 + $0x1a8] sm:$0xff]
  %v68 = vld [vmem:[%s0 + $0x1b0] sm:$0xff]
  %v69 = vld [vmem:[%s0 + $0x1b8] sm:$0xff]
  %v70 = vld [vmem:[%s0 + $0x1c0] sm:$0xff]
  %v71 = vld [vmem:[%s0 + $0x1c8] sm:$0xff]
  %v72 = vld [vmem:[%s0 + $0x1d0] sm:$0xff]
  %v73 = vld [vmem:[%s0 + $0x1d8] sm:$0xff]
  %v74 = vld [vmem:[%s0 + $0x1e0] sm:$0xff]
  %v75 = vld [vmem:[%s0 + $0x1e8] sm:$0xff]
  %v76 = vld [vmem:[%s0 + $0x1f0] sm:$0xff]
  %v77 = vld [vmem:[%s0 + $0x1f8] sm:$0xff]
  %v78 = vld [vmem:[%s0 + $0x200] sm:$0xff]
  %v79 = vld [vmem:[%s0 + $0x208] sm:$0xff]
  %v80 = vld [vmem:[%s0 + $0x210] sm:$0xff]
  %v81 = vld [vmem:[%s0 + $0x218] sm:$0xff]
  %v82 = vld [vmem:[%s0 + $0x220] sm:$0xff]
  %v83 = vld [vmem:[%s0 + $0x228] sm:$0xff]
  %v84 = vld [vmem:[%s0 + $0x230] sm:$0xff]
  %v85 = vld [vmem:[%s0 + $0x238] sm:$0xff]
  %v86 = vld [vmem:[%s0 + $0x240] sm:$0xff]
  %v87 = vld [vmem:[%s0 + $0x248] sm:$0xff]
  %v88 = vld [vmem:[%s0 + $0x250] sm:$0xff]
  %v89 = vld [vmem:[%s0 + $0x258] sm:$0xff]
  %v90 = vld [vmem:[%s0 + $0x260] sm:$0xff]
  %v91 = vld [vmem:[%s0 + $0x268] sm:$0xff]
  %v92 = vld [vmem:[%s0 + $0x270] sm:$0xff]
  %v93 = vld [vmem:[%s0 + $0x278] sm:$0xff]
  %v94 = vld [vmem:[%s1] sm:$0xff]
  %v95 = vld [vmem:[%s1 + $0x8] sm:$0xff]
  %v96 = vld [vmem:[%s1 + $0x10] sm:$0xff]
  %v97 = vld [vmem:[%s1 + $0x18] sm:$0xff]
  %v98 = vld [vmem:[%s1 + $0x20] sm:$0xff]
  %v99 = vld [vmem:[%s1 + $0x28] sm:$0xff]
  %v100 = vld [vmem:[%s1 + $0x30] sm:$0xff]
  %v101 = vld [vmem:[%s1 + $0x38] sm:$0xff]
  %v102 = vld [vmem:[%s1 + $0x40] sm:$0xff]
  %v103 = vld [vmem:[%s1 + $0x48] sm:$0xff]
  %v104 = vld [vmem:[%s1 + $0x50] sm:$0xff]
  %v105 = vld [vmem:[%s1 + $0x58] sm:$0xff]
  %v106 = vld [vmem:[%s1 + $0x60] sm:$0xff]
  %v107 = vld [vmem:[%s1 + $0x68] sm:$0xff]
  %v108 = vld [vmem:[%s1 + $0x70] sm:$0xff]
  %v109 = vld [vmem:[%s1 + $0x78] sm:$0xff]
  %v110 = vld [vmem:[%s1 + $0x80] sm:$0xff]
  %v111 = vld [vmem:[%s1 + $0x88] sm:$0xff]
  %v112 = vld [vmem:[%s1 + $0x90] sm:$0xff]
  %v113 = vld [vmem:[%s1 + $0x98] sm:$0xff]
  %v114 = vld [vmem:[%s1 + $0xa0] sm:$0xff]
  %v115 = vld [vmem:[%s1 + $0xa8] sm:$0xff]
  %v116 = vld [vmem:[%s1 + $0xb0] sm:$0xff]
  %v117 = vld [vmem:[%s1 + $0xb8] sm:$0xff]
  %v118 = vld [vmem:[%s1 + $0xc0] sm:$0xff]
  %v119 = vld [vmem:[%s1 + $0xc8] sm:$0xff]
  %v120 = vld [vmem:[%s1 + $0xd0] sm:$0xff]
  %v121 = vld [vmem:[%s1 + $0xd8] sm:$0xff]
  %v122 = vld [vmem:[%s1 + $0xe0] sm:$0xff]
  %v123 = vld [vmem:[%s1 + $0xe8] sm:$0xff]
  %v124 = vld [vmem:[%s1 + $0xf0] sm:$0xff]
  %v125 = vld [vmem:[%s1 + $0xf8] sm:$0xff]
  %v126 = vld [vmem:[%s1 + $0x100] sm:$0xff]
  %v127 = vld [vmem:[%s1 + $0x108] sm:$0xff]
  %v128 = vld [vmem:[%s1 + $0x110] sm:$0xff]
  %v129 = vld [vmem:[%s1 + $0x118] sm:$0xff]
  %v130 = vld [vmem:[%s1 + $0x120] sm:$0xff]
  %v131 = vld [vmem:[%s1 + $0x128] sm:$0xff]
  %v132 = vld [vmem:[%s1 + $0x130] sm:$0xff]
  %v133 = vld [vmem:[%s1 + $0x138] sm:$0xff]
  %v134 = vld [vmem:[%s1 + $0x140] sm:$0xff]
  %v135 = vld [vmem:[%s1 + $0x148] sm:$0xff]
  %v136 = vld [vmem:[%s1 + $0x150] sm:$0xff]
  %v137 = vld [vmem:[%s1 + $0x158] sm:$0xff]
  %v138 = vld [vmem:[%s1 + $0x160] sm:$0xff]
  %v139 = vld [vmem:[%s1 + $0x168] sm:$0xff]
  %v140 = vld [vmem:[%s1 + $0x170] sm:$0xff]
  %v141 = vld [vmem:[%s1 + $0x178] sm:$0xff]
  %v142 = vld [vmem:[%s1 + $0x180] sm:$0xff]
  %v143 = vld [vmem:[%s1 + $0x188] sm:$0xff]
  %v144 = vld [vmem:[%s1 + $0x190] sm:$0xff]
  %v145 = vld [vmem:[%s1 + $0x198] sm:$0xff]
  %v146 = vld [vmem:[%s1 + $0x1a0] sm:$0xff]
  %v147 = vld [vmem:[%s1 + $0x1a8] sm:$0xff]
  %v148 = vld [vmem:[%s1 + $0x1b0] sm:$0xff]
  %v149 = vld [vmem:[%s1 + $0x1b8] sm:$0xff]
  %v150 = vld [vmem:[%s1 + $0x1c0] sm:$0xff]
  %v151 = vld [vmem:[%s1 + $0x1c8] sm:$0xff]
  %v152 = vld [vmem:[%s1 + $0x1d0] sm:$0xff]
  %v153 = vld [vmem:[%s1 + $0x1d8] sm:$0xff]
  %v154 = vld [vmem:[%s1 + $0x1e0] sm:$0xff]
  %v155 = vld [vmem:[%s1 + $0x1e8] sm:$0xff]
  %v156 = vld [vmem:[%s1 + $0x1f0] sm:$0xff]
  %v157 = vld [vmem:[%s1 + $0x1f8] sm:$0xff]
  %v158 = vld [vmem:[%s2] sm:$0x1]
  %v160 = vlaneseq
  %v161 = vshrl.u32 %v160, 7
  %v162 = vsub.s32 0, %v161
  %v163 = vrot.slane %v158, %v162
  %165 = vmatprep.subr.mxu0 0.0
  %166 = vmatpush1.msra.mxu0 %v109
  %167 = vmatprep.subr.mxu0 0.0
  %168 = vmatpush1.msra.mxu0 %v108
  %169 = vmatprep.subr.mxu0 0.0
  %170 = vmatpush1.msra.mxu0 %v107
  %171 = vmatprep.subr.mxu0 0.0
  %172 = vmatpush1.msra.mxu0 %v106
  %173 = vmatprep.subr.mxu0 0.0
  %174 = vmatpush1.msra.mxu0 %v105
  %175 = vmatprep.subr.mxu0 0.0
  %176 = vmatpush1.msra.mxu0 %v104
  %177 = vmatprep.subr.mxu0 0.0
  %178 = vmatpush1.msra.mxu0 %v103
  %179 = vmatprep.subr.mxu0 0.0
  %180 = vmatpush1.msra.mxu0 %v102
  %181 = vmatprep.subr.mxu0 0.0
  %182 = vmatpush1.msra.mxu0 %v101
  %183 = vmatprep.subr.mxu0 0.0
  %184 = vmatpush1.msra.mxu0 %v100
  %185 = vmatprep.subr.mxu0 0.0
  %186 = vmatpush1.msra.mxu0 %v99
  %187 = vmatprep.subr.mxu0 0.0
  %188 = vmatpush1.msra.mxu0 %v98
  %189 = vmatprep.subr.mxu0 0.0
  %190 = vmatpush1.msra.mxu0 %v97
  %191 = vmatprep.subr.mxu0 0.0
  %192 = vmatpush1.msra.mxu0 %v96
  %193 = vmatprep.subr.mxu0 0.0
  %194 = vmatpush1.msra.mxu0 %v95
  %195 = vmatprep.subr.mxu0 0.0
  %196 = vmatpush1.msra.mxu0 %v94
  %197 = vmatprep.subr.mxu0 0.0
  %198 = vmatpush2.msra.mxu0 %v125
  %199 = vmatprep.subr.mxu0 0.0
  %200 = vmatpush2.msra.mxu0 %v124
  %201 = vmatprep.subr.mxu0 0.0
  %202 = vmatpush2.msra.mxu0 %v123
  %203 = vmatprep.subr.mxu0 0.0
  %204 = vmatpush2.msra.mxu0 %v122
  %205 = vmatprep.subr.mxu0 0.0
  %206 = vmatpush2.msra.mxu0 %v121
  %207 = vmatprep.subr.mxu0 0.0
  %208 = vmatpush2.msra.mxu0 %v120
  %209 = vmatprep.subr.mxu0 0.0
  %210 = vmatpush2.msra.mxu0 %v119
  %211 = vmatprep.subr.mxu0 0.0
  %212 = vmatpush2.msra.mxu0 %v118
  %213 = vmatprep.subr.mxu0 0.0
  %214 = vmatpush2.msra.mxu0 %v117
  %215 = vmatprep.subr.mxu0 0.0
  %216 = vmatpush2.msra.mxu0 %v116
  %217 = vmatprep.subr.mxu0 0.0
  %218 = vmatpush2.msra.mxu0 %v115
  %219 = vmatprep.subr.mxu0 0.0
  %220 = vmatpush2.msra.mxu0 %v114
  %221 = vmatprep.subr.mxu0 0.0
  %222 = vmatpush2.msra.mxu0 %v113
  %223 = vmatprep.subr.mxu0 0.0
  %224 = vmatpush2.msra.mxu0 %v112
  %225 = vmatprep.subr.mxu0 0.0
  %226 = vmatpush2.msra.mxu0 %v111
  %227 = vmatprep.subr.mxu0 0.0
  %228 = vmatpush2.msra.mxu0 %v110
  %229 = vmatprep.mubr.f32.mxu0 %v15
  %230 = vmatmul.mubr.f32.gmra.mxu0 %v14
  %v231 = vpop.f32.mrf.mxu0
  %v232 = vadd.f32 %v163, %v231
  %v233 = vpop.f32.mrf.mxu0
  %234 = vmatprep.mubr.f32.mxu0 %v19
  %235 = vmatmul.mubr.f32.gmra.mxu0 %v18
  %v236 = vpop.f32.mrf.mxu0
  %v237 = vadd.f32 %v163, %v236
  %v238 = vpop.f32.mrf.mxu0
  %239 = vmatprep.mubr.f32.mxu0 %v23
  %240 = vmatmul.mubr.f32.gmra.mxu0 %v22
  %v241 = vpop.f32.mrf.mxu0
  %v242 = vadd.f32 %v163, %v241
  %v243 = vpop.f32.mrf.mxu0
  %244 = vmatprep.mubr.f32.mxu0 %v27
  %245 = vmatmul.mubr.f32.gmra.mxu0 %v26
  %v246 = vpop.f32.mrf.mxu0
  %v247 = vadd.f32 %v163, %v246
  %v248 = vpop.f32.mrf.mxu0
  %249 = vmatprep.mubr.f32.mxu0 %v31
  %250 = vmatmul.mubr.f32.gmra.mxu0 %v30
  %v251 = vpop.f32.mrf.mxu0
  %v252 = vadd.f32 %v163, %v251
  %v253 = vpop.f32.mrf.mxu0
  %254 = vmatprep.mubr.f32.mxu0 %v35
  %255 = vmatmul.mubr.f32.gmra.mxu0 %v34
  %v256 = vpop.f32.mrf.mxu0
  %v257 = vadd.f32 %v163, %v256
  %v258 = vpop.f32.mrf.mxu0
  %259 = vmatprep.mubr.f32.mxu0 %v39
  %260 = vmatmul.mubr.f32.gmra.mxu0 %v38
  %v261 = vpop.f32.mrf.mxu0
  %v262 = vadd.f32 %v163, %v261
  %v263 = vpop.f32.mrf.mxu0
  %264 = vmatprep.mubr.f32.mxu0 %v43
  %265 = vmatmul.mubr.f32.gmra.mxu0 %v42
  %v266 = vpop.f32.mrf.mxu0
  %v267 = vadd.f32 %v163, %v266
  %v268 = vpop.f32.mrf.mxu0
  %269 = vmatprep.mubr.f32.mxu0 %v47
  %270 = vmatmul.mubr.f32.gmra.mxu0 %v46
  %v271 = vpop.f32.mrf.mxu0
  %v272 = vadd.f32 %v163, %v271
  %v273 = vpop.f32.mrf.mxu0
  %274 = vmatprep.mubr.f32.mxu0 %v51
  %275 = vmatmul.mubr.f32.gmra.mxu0 %v50
  %v276 = vpop.f32.mrf.mxu0
  %v277 = vadd.f32 %v163, %v276
  %v278 = vpop.f32.mrf.mxu0
  %279 = vmatprep.mubr.f32.mxu0 %v55
  %280 = vmatmul.mubr.f32.gmra.mxu0 %v54
  %v281 = vpop.f32.mrf.mxu0
  %v282 = vadd.f32 %v163, %v281
  %v283 = vpop.f32.mrf.mxu0
  %284 = vmatprep.mubr.f32.mxu0 %v59
  %285 = vmatmul.mubr.f32.gmra.mxu0 %v58
  %v286 = vpop.f32.mrf.mxu0
  %v287 = vadd.f32 %v163, %v286
  %v288 = vpop.f32.mrf.mxu0
  %289 = vmatprep.mubr.f32.mxu0 %v63
  %290 = vmatmul.mubr.f32.gmra.mxu0 %v62
  %v291 = vpop.f32.mrf.mxu0
  %v292 = vadd.f32 %v163, %v291
  %v293 = vpop.f32.mrf.mxu0
  %294 = vmatprep.mubr.f32.mxu0 %v67
  %295 = vmatmul.mubr.f32.gmra.mxu0 %v66
  %v296 = vpop.f32.mrf.mxu0
  %v297 = vadd.f32 %v163, %v296
  %v298 = vpop.f32.mrf.mxu0
  %299 = vmatprep.mubr.f32.mxu0 %v71
  %300 = vmatmul.mubr.f32.gmra.mxu0 %v70
  %v301 = vpop.f32.mrf.mxu0
  %v302 = vadd.f32 %v163, %v301
  %v303 = vpop.f32.mrf.mxu0
  %304 = vmatprep.mubr.f32.mxu0 %v75
  %305 = vmatmul.mubr.f32.gmra.mxu0 %v74
  %v306 = vpop.f32.mrf.mxu0
  %v307 = vadd.f32 %v163, %v306
  %v308 = vpop.f32.mrf.mxu0
  %309 = vmatprep.mubr.f32.mxu0 %v79
  %310 = vmatmul.mubr.f32.gmra.mxu0 %v78
  %v311 = vpop.f32.mrf.mxu0
  %v312 = vadd.f32 %v163, %v311
  %v313 = vpop.f32.mrf.mxu0
  %314 = vmatprep.mubr.f32.mxu0 %v83
  %315 = vmatmul.mubr.f32.gmra.mxu0 %v82
  %v316 = vpop.f32.mrf.mxu0
  %v317 = vadd.f32 %v163, %v316
  %v318 = vpop.f32.mrf.mxu0
  %319 = vmatprep.mubr.f32.mxu0 %v87
  %320 = vmatmul.mubr.f32.gmra.mxu0 %v86
  %v321 = vpop.f32.mrf.mxu0
  %v322 = vadd.f32 %v163, %v321
  %v323 = vpop.f32.mrf.mxu0
  %324 = vmatprep.mubr.f32.mxu0 %v91
  %325 = vmatmul.mubr.f32.gmra.mxu0 %v90
  %v326 = vpop.f32.mrf.mxu0
  %v327 = vadd.f32 %v163, %v326
  %v328 = vpop.f32.mrf.mxu0
  %329 = vdwg.mxu0
  %330 = vmatprep.subr.mxu0 0.0
  %331 = vmatpush1.msra.mxu0 %v141
  %332 = vmatprep.subr.mxu0 0.0
  %333 = vmatpush1.msra.mxu0 %v140
  %334 = vmatprep.subr.mxu0 0.0
  %335 = vmatpush1.msra.mxu0 %v139
  %336 = vmatprep.subr.mxu0 0.0
  %337 = vmatpush1.msra.mxu0 %v138
  %338 = vmatprep.subr.mxu0 0.0
  %339 = vmatpush1.msra.mxu0 %v137
  %340 = vmatprep.subr.mxu0 0.0
  %341 = vmatpush1.msra.mxu0 %v136
  %342 = vmatprep.subr.mxu0 0.0
  %343 = vmatpush1.msra.mxu0 %v135
  %344 = vmatprep.subr.mxu0 0.0
  %345 = vmatpush1.msra.mxu0 %v134
  %346 = vmatprep.subr.mxu0 0.0
  %347 = vmatpush1.msra.mxu0 %v133
  %348 = vmatprep.subr.mxu0 0.0
  %349 = vmatpush1.msra.mxu0 %v132
  %350 = vmatprep.subr.mxu0 0.0
  %351 = vmatpush1.msra.mxu0 %v131
  %352 = vmatprep.subr.mxu0 0.0
  %353 = vmatpush1.msra.mxu0 %v130
  %354 = vmatprep.subr.mxu0 0.0
  %355 = vmatpush1.msra.mxu0 %v129
  %356 = vmatprep.subr.mxu0 0.0
  %357 = vmatpush1.msra.mxu0 %v128
  %358 = vmatprep.subr.mxu0 0.0
  %359 = vmatpush1.msra.mxu0 %v127
  %360 = vmatprep.subr.mxu0 0.0
  %361 = vmatpush1.msra.mxu0 %v126
  %362 = vmatprep.subr.mxu0 0.0
  %363 = vmatpush2.msra.mxu0 %v157
  %364 = vmatprep.subr.mxu0 0.0
  %365 = vmatpush2.msra.mxu0 %v156
  %366 = vmatprep.subr.mxu0 0.0
  %367 = vmatpush2.msra.mxu0 %v155
  %368 = vmatprep.subr.mxu0 0.0
  %369 = vmatpush2.msra.mxu0 %v154
  %370 = vmatprep.subr.mxu0 0.0
  %371 = vmatpush2.msra.mxu0 %v153
  %372 = vmatprep.subr.mxu0 0.0
  %373 = vmatpush2.msra.mxu0 %v152
  %374 = vmatprep.subr.mxu0 0.0
  %375 = vmatpush2.msra.mxu0 %v151
  %376 = vmatprep.subr.mxu0 0.0
  %377 = vmatpush2.msra.mxu0 %v150
  %378 = vmatprep.subr.mxu0 0.0
  %379 = vmatpush2.msra.mxu0 %v149
  %380 = vmatprep.subr.mxu0 0.0
  %381 = vmatpush2.msra.mxu0 %v148
  %382 = vmatprep.subr.mxu0 0.0
  %383 = vmatpush2.msra.mxu0 %v147
  %384 = vmatprep.subr.mxu0 0.0
  %385 = vmatpush2.msra.mxu0 %v146
  %386 = vmatprep.subr.mxu0 0.0
  %387 = vmatpush2.msra.mxu0 %v145
  %388 = vmatprep.subr.mxu0 0.0
  %389 = vmatpush2.msra.mxu0 %v144
  %390 = vmatprep.subr.mxu0 0.0
  %391 = vmatpush2.msra.mxu0 %v143
  %392 = vmatprep.subr.mxu0 0.0
  %393 = vmatpush2.msra.mxu0 %v142
  %394 = vmatprep.mubr.f32.mxu0 %v17
  %395 = vmatmul.mubr.f32.gmra.mxu0 %v16
  %v396 = vpop.f32.mrf.mxu0
  %v397 = vadd.f32 %v232, %v396
  %v398 = vpop.f32.mrf.mxu0
  %399 = vmatprep.mubr.f32.mxu0 %v21
  %400 = vmatmul.mubr.f32.gmra.mxu0 %v20
  %v401 = vpop.f32.mrf.mxu0
  %v402 = vadd.f32 %v237, %v401
  %v403 = vpop.f32.mrf.mxu0
  %404 = vmatprep.mubr.f32.mxu0 %v25
  %405 = vmatmul.mubr.f32.gmra.mxu0 %v24
  %v406 = vpop.f32.mrf.mxu0
  %v407 = vadd.f32 %v242, %v406
  %v408 = vpop.f32.mrf.mxu0
  %409 = vmatprep.mubr.f32.mxu0 %v29
  %410 = vmatmul.mubr.f32.gmra.mxu0 %v28
  %v411 = vpop.f32.mrf.mxu0
  %v412 = vadd.f32 %v247, %v411
  %v413 = vpop.f32.mrf.mxu0
  %414 = vmatprep.mubr.f32.mxu0 %v33
  %415 = vmatmul.mubr.f32.gmra.mxu0 %v32
  %v416 = vpop.f32.mrf.mxu0
  %v417 = vadd.f32 %v252, %v416
  %v418 = vpop.f32.mrf.mxu0
  %419 = vmatprep.mubr.f32.mxu0 %v37
  %420 = vmatmul.mubr.f32.gmra.mxu0 %v36
  %v421 = vpop.f32.mrf.mxu0
  %v422 = vadd.f32 %v257, %v421
  %v423 = vpop.f32.mrf.mxu0
  %424 = vmatprep.mubr.f32.mxu0 %v41
  %425 = vmatmul.mubr.f32.gmra.mxu0 %v40
  %v426 = vpop.f32.mrf.mxu0
  %v427 = vadd.f32 %v262, %v426
  %v428 = vpop.f32.mrf.mxu0
  %429 = vmatprep.mubr.f32.mxu0 %v45
  %430 = vmatmul.mubr.f32.gmra.mxu0 %v44
  %v431 = vpop.f32.mrf.mxu0
  %v432 = vadd.f32 %v267, %v431
  %v433 = vpop.f32.mrf.mxu0
  %434 = vmatprep.mubr.f32.mxu0 %v49
  %435 = vmatmul.mubr.f32.gmra.mxu0 %v48
  %v436 = vpop.f32.mrf.mxu0
  %v437 = vadd.f32 %v272, %v436
  %v438 = vpop.f32.mrf.mxu0
  %439 = vmatprep.mubr.f32.mxu0 %v53
  %440 = vmatmul.mubr.f32.gmra.mxu0 %v52
  %v441 = vpop.f32.mrf.mxu0
  %v442 = vadd.f32 %v277, %v441
  %v443 = vpop.f32.mrf.mxu0
  %444 = vmatprep.mubr.f32.mxu0 %v57
  %445 = vmatmul.mubr.f32.gmra.mxu0 %v56
  %v446 = vpop.f32.mrf.mxu0
  %v447 = vadd.f32 %v282, %v446
  %v448 = vpop.f32.mrf.mxu0
  %449 = vmatprep.mubr.f32.mxu0 %v61
  %450 = vmatmul.mubr.f32.gmra.mxu0 %v60
  %v451 = vpop.f32.mrf.mxu0
  %v452 = vadd.f32 %v287, %v451
  %v453 = vpop.f32.mrf.mxu0
  %454 = vmatprep.mubr.f32.mxu0 %v65
  %455 = vmatmul.mubr.f32.gmra.mxu0 %v64
  %v456 = vpop.f32.mrf.mxu0
  %v457 = vadd.f32 %v292, %v456
  %v458 = vpop.f32.mrf.mxu0
  %459 = vmatprep.mubr.f32.mxu0 %v69
  %460 = vmatmul.mubr.f32.gmra.mxu0 %v68
  %v461 = vpop.f32.mrf.mxu0
  %v462 = vadd.f32 %v297, %v461
  %v463 = vpop.f32.mrf.mxu0
  %464 = vmatprep.mubr.f32.mxu0 %v73
  %465 = vmatmul.mubr.f32.gmra.mxu0 %v72
  %v466 = vpop.f32.mrf.mxu0
  %v467 = vadd.f32 %v302, %v466
  %v468 = vpop.f32.mrf.mxu0
  %469 = vmatprep.mubr.f32.mxu0 %v77
  %470 = vmatmul.mubr.f32.gmra.mxu0 %v76
  %v471 = vpop.f32.mrf.mxu0
  %v472 = vadd.f32 %v307, %v471
  %v473 = vpop.f32.mrf.mxu0
  %474 = vmatprep.mubr.f32.mxu0 %v81
  %475 = vmatmul.mubr.f32.gmra.mxu0 %v80
  %v476 = vpop.f32.mrf.mxu0
  %v477 = vadd.f32 %v312, %v476
  %v478 = vpop.f32.mrf.mxu0
  %479 = vmatprep.mubr.f32.mxu0 %v85
  %480 = vmatmul.mubr.f32.gmra.mxu0 %v84
  %v481 = vpop.f32.mrf.mxu0
  %v482 = vadd.f32 %v317, %v481
  %v483 = vpop.f32.mrf.mxu0
  %484 = vmatprep.mubr.f32.mxu0 %v89
  %485 = vmatmul.mubr.f32.gmra.mxu0 %v88
  %v486 = vpop.f32.mrf.mxu0
  %v487 = vadd.f32 %v322, %v486
  %v488 = vpop.f32.mrf.mxu0
  %489 = vmatprep.mubr.f32.mxu0 %v93
  %490 = vmatmul.mubr.f32.gmra.mxu0 %v92
  %v491 = vpop.f32.mrf.mxu0
  %v492 = vadd.f32 %v327, %v491
  %v493 = vpop.f32.mrf.mxu0
  %494 = vdwg.mxu0
  %vm495 = vcmask 523264
  %496 = vst.msk [vmem:[%s3] sm:$0xff] %vm495, %v397
  %497 = vst.msk [vmem:[%s3 + $0x8] sm:$0xff] %vm495, %v402
  %498 = vst.msk [vmem:[%s3 + $0x10] sm:$0xff] %vm495, %v407
  %499 = vst.msk [vmem:[%s3 + $0x18] sm:$0xff] %vm495, %v412
  %500 = vst.msk [vmem:[%s3 + $0x20] sm:$0xff] %vm495, %v417
  %501 = vst.msk [vmem:[%s3 + $0x28] sm:$0xff] %vm495, %v422
  %502 = vst.msk [vmem:[%s3 + $0x30] sm:$0xff] %vm495, %v427
  %503 = vst.msk [vmem:[%s3 + $0x38] sm:$0xff] %vm495, %v432
  %504 = vst.msk [vmem:[%s3 + $0x40] sm:$0xff] %vm495, %v437
  %505 = vst.msk [vmem:[%s3 + $0x48] sm:$0xff] %vm495, %v442
  %506 = vst.msk [vmem:[%s3 + $0x50] sm:$0xff] %vm495, %v447
  %507 = vst.msk [vmem:[%s3 + $0x58] sm:$0xff] %vm495, %v452
  %508 = vst.msk [vmem:[%s3 + $0x60] sm:$0xff] %vm495, %v457
  %509 = vst.msk [vmem:[%s3 + $0x68] sm:$0xff] %vm495, %v462
  %510 = vst.msk [vmem:[%s3 + $0x70] sm:$0xff] %vm495, %v467
  %511 = vst.msk [vmem:[%s3 + $0x78] sm:$0xff] %vm495, %v472
  %512 = vst.msk [vmem:[%s3 + $0x80] sm:$0xff] %vm495, %v477
  %513 = vst.msk [vmem:[%s3 + $0x88] sm:$0xff] %vm495, %v482
  %514 = vst.msk [vmem:[%s3 + $0x90] sm:$0xff] %vm495, %v487
  %515 = vst.msk [vmem:[%s3 + $0x98] sm:$0xff] %vm495, %v492
  // Predicated region
  $region14: #{cnn_forward.8} parent=0 // pred_check
    _
  $region15: #{cnn_forward.8} parent=0 // pred_check_branch
    %517 = sbr.rel (0) target = $region17
  $region16: #{cnn_forward.8} parent=0 // pred_region
    _
  $region17: #{cnn_forward.8} parent=0 // pred_fallthru
    _
  // Predicated region
  $region18: #{cnn_forward.8} parent=0 // pred_check
    _
  $region19: #{cnn_forward.8} parent=0 // pred_check_branch
    %519 = sbr.rel (0) target = $region21
  $region20: #{cnn_forward.8} parent=0 // pred_region
    _
  $region21: #{cnn_forward.8} parent=0 // pred_fallthru
    _

// kernel: cnn_forward.10
$region0: #{cnn_forward.10}
  #allocation0 [shape = 'u32[]', space=smem, size = 0x4, offset = 0x4, fixed_abs, tag = 'smem constant byte address 0x4 - core index']
  #allocation1 [shape = 'u32[144,128]{1,0:T(1,128)}', space=vmem, size = 0x12000, scoped, tag = 'internal scratch']
  %s0 = inlined_call_operand.vmem [shape: f32[12,576], index: 0, kind: input, shape index: {}]
  %s1 = inlined_call_operand.vmem [shape: f32[576,64], index: 1, kind: input, shape index: {}]
  %s2 = inlined_call_operand.vmem [shape: f32[1,64], index: 2, kind: input, shape index: {}]
  %s3 = inlined_call_operand.vmem [shape: f32[12,64], index: 3, kind: output, shape index: {}]
  %s4 = sld [smem:[#allocation0]]
  $region22: #{cnn_forward.10} parent=0
    _
  %s6 = ssub.s32 1, %s4
  %s7 = scalar_select 0, %s6, %s4
  // Predicated region
  $region2: #{cnn_forward.10} parent=0 // pred_check
    _
  $region3: #{cnn_forward.10} parent=0 // pred_check_branch
    %9 = sbr.rel (0) target = $region5
  $region4: #{cnn_forward.10} parent=0 // pred_region
    _
  $region5: #{cnn_forward.10} parent=0 // pred_fallthru
    _
  // Predicated region
  $region6: #{cnn_forward.10} parent=0 // pred_check
    _
  $region7: #{cnn_forward.10} parent=0 // pred_check_branch
    %11 = sbr.rel (0) target = $region9
  $region8: #{cnn_forward.10} parent=0 // pred_region
    _
  $region9: #{cnn_forward.10} parent=0 // pred_fallthru
    _
  // Predicated region
  $region10: #{cnn_forward.10} parent=0 // pred_check
    _
  $region11: #{cnn_forward.10} parent=0 // pred_check_branch
    %13 = sbr.rel (0) target = $region13
  $region12: #{cnn_forward.10} parent=0 // pred_region
    _
  $region13: #{cnn_forward.10} parent=0 // pred_fallthru
    _
  %v14 = vld [vmem:[%s0] sm:$0xff]
  %v15 = vld [vmem:[%s0 + $0x8] sm:$0xff]
  %v16 = vld [vmem:[%s0 + $0x10] sm:$0xff]
  %v17 = vld [vmem:[%s0 + $0x18] sm:$0xff]
  %v18 = vld [vmem:[%s0 + $0x20] sm:$0xff]
  %v19 = vld [vmem:[%s0 + $0x28] sm:$0xf]
  %v20 = vld [vmem:[%s0 + $0x30] sm:$0xf]
  %v21 = vld [vmem:[%s0 + $0x38] sm:$0xf]
  %v22 = vld [vmem:[%s0 + $0x40] sm:$0xf]
  %v23 = vld [vmem:[%s0 + $0x48] sm:$0xf]
  %v24 = vld [vmem:[%s1] sm:$0xff]
  %v25 = vld [vmem:[%s1 + $0x8] sm:$0xff]
  %v26 = vld [vmem:[%s1 + $0x10] sm:$0xff]
  %v27 = vld [vmem:[%s1 + $0x18] sm:$0xff]
  %v28 = vld [vmem:[%s1 + $0x20] sm:$0xff]
  %v29 = vld [vmem:[%s1 + $0x28] sm:$0xff]
  %v30 = vld [vmem:[%s1 + $0x30] sm:$0xff]
  %v31 = vld [vmem:[%s1 + $0x38] sm:$0xff]
  %v32 = vld [vmem:[%s1 + $0x40] sm:$0xff]
  %v33 = vld [vmem:[%s1 + $0x48] sm:$0xff]
  %v34 = vld [vmem:[%s1 + $0x50] sm:$0xff]
  %v35 = vld [vmem:[%s1 + $0x58] sm:$0xff]
  %v36 = vld [vmem:[%s1 + $0x60] sm:$0xff]
  %v37 = vld [vmem:[%s1 + $0x68] sm:$0xff]
  %v38 = vld [vmem:[%s1 + $0x70] sm:$0xff]
  %v39 = vld [vmem:[%s1 + $0x78] sm:$0xff]
  %v40 = vld [vmem:[%s1 + $0x80] sm:$0xff]
  %v41 = vld [vmem:[%s1 + $0x88] sm:$0xff]
  %v42 = vld [vmem:[%s1 + $0x90] sm:$0xff]
  %v43 = vld [vmem:[%s1 + $0x98] sm:$0xff]
  %v44 = vld [vmem:[%s1 + $0xa0] sm:$0xff]
  %v45 = vld [vmem:[%s1 + $0xa8] sm:$0xff]
  %v46 = vld [vmem:[%s1 + $0xb0] sm:$0xff]
  %v47 = vld [vmem:[%s1 + $0xb8] sm:$0xff]
  %v48 = vld [vmem:[%s1 + $0xc0] sm:$0xff]
  %v49 = vld [vmem:[%s1 + $0xc8] sm:$0xff]
  %v50 = vld [vmem:[%s1 + $0xd0] sm:$0xff]
  %v51 = vld [vmem:[%s1 + $0xd8] sm:$0xff]
  %v52 = vld [vmem:[%s1 + $0xe0] sm:$0xff]
  %v53 = vld [vmem:[%s1 + $0xe8] sm:$0xff]
  %v54 = vld [vmem:[%s1 + $0xf0] sm:$0xff]
  %v55 = vld [vmem:[%s1 + $0xf8] sm:$0xff]
  %v56 = vld [vmem:[%s1 + $0x100] sm:$0xff]
  %v57 = vld [vmem:[%s1 + $0x108] sm:$0xff]
  %v58 = vld [vmem:[%s1 + $0x110] sm:$0xff]
  %v59 = vld [vmem:[%s1 + $0x118] sm:$0xff]
  %v60 = vld [vmem:[%s1 + $0x120] sm:$0xff]
  %v61 = vld [vmem:[%s1 + $0x128] sm:$0xff]
  %v62 = vld [vmem:[%s1 + $0x130] sm:$0xff]
  %v63 = vld [vmem:[%s1 + $0x138] sm:$0xff]
  %v64 = vld [vmem:[%s1 + $0x140] sm:$0xff]
  %v65 = vld [vmem:[%s1 + $0x148] sm:$0xff]
  %v66 = vld [vmem:[%s1 + $0x150] sm:$0xff]
  %v67 = vld [vmem:[%s1 + $0x158] sm:$0xff]
  %v68 = vld [vmem:[%s1 + $0x160] sm:$0xff]
  %v69 = vld [vmem:[%s1 + $0x168] sm:$0xff]
  %v70 = vld [vmem:[%s1 + $0x170] sm:$0xff]
  %v71 = vld [vmem:[%s1 + $0x178] sm:$0xff]
  %v72 = vld [vmem:[%s1 + $0x180] sm:$0xff]
  %v73 = vld [vmem:[%s1 + $0x188] sm:$0xff]
  %v74 = vld [vmem:[%s1 + $0x190] sm:$0xff]
  %v75 = vld [vmem:[%s1 + $0x198] sm:$0xff]
  %v76 = vld [vmem:[%s1 + $0x1a0] sm:$0xff]
  %v77 = vld [vmem:[%s1 + $0x1a8] sm:$0xff]
  %v78 = vld [vmem:[%s1 + $0x1b0] sm:$0xff]
  %v79 = vld [vmem:[%s1 + $0x1b8] sm:$0xff]
  %v80 = vld [vmem:[%s1 + $0x1c0] sm:$0xff]
  %v81 = vld [vmem:[%s1 + $0x1c8] sm:$0xff]
  %v82 = vld [vmem:[%s1 + $0x1d0] sm:$0xff]
  %v83 = vld [vmem:[%s1 + $0x1d8] sm:$0xff]
  %v84 = vld [vmem:[%s1 + $0x1e0] sm:$0xff]
  %v85 = vld [vmem:[%s1 + $0x1e8] sm:$0xff]
  %v86 = vld [vmem:[%s1 + $0x1f0] sm:$0xff]
  %v87 = vld [vmem:[%s1 + $0x1f8] sm:$0xff]
  %v88 = vld [vmem:[%s1 + $0x200] sm:$0xff]
  %v89 = vld [vmem:[%s1 + $0x208] sm:$0xff]
  %v90 = vld [vmem:[%s1 + $0x210] sm:$0xff]
  %v91 = vld [vmem:[%s1 + $0x218] sm:$0xff]
  %v92 = vld [vmem:[%s1 + $0x220] sm:$0xff]
  %v93 = vld [vmem:[%s1 + $0x228] sm:$0xff]
  %v94 = vld [vmem:[%s1 + $0x230] sm:$0xff]
  %v95 = vld [vmem:[%s1 + $0x238] sm:$0xff]
  %v96 = vld [vmem:[%s2] sm:$0x1]
  %v98 = vlaneseq
  %v99 = vshrl.u32 %v98, 7
  %v100 = vsub.s32 0, %v99
  %v101 = vrot.slane %v96, %v100
  %vm103 = vcmask 523264
  %v105 = vsel %vm103, %v18, 0
  %v108 = vsel %vm103, %v23, 0
  %110 = vmatprep.subr.mxu0 0.0
  %111 = vmatpush1.msra.mxu0 %v39
  %112 = vmatprep.subr.mxu0 0.0
  %113 = vmatpush1.msra.mxu0 %v38
  %114 = vmatprep.subr.mxu0 0.0
  %115 = vmatpush1.msra.mxu0 %v37
  %116 = vmatprep.subr.mxu0 0.0
  %117 = vmatpush1.msra.mxu0 %v36
  %118 = vmatprep.subr.mxu0 0.0
  %119 = vmatpush1.msra.mxu0 %v35
  %120 = vmatprep.subr.mxu0 0.0
  %121 = vmatpush1.msra.mxu0 %v34
  %122 = vmatprep.subr.mxu0 0.0
  %123 = vmatpush1.msra.mxu0 %v33
  %124 = vmatprep.subr.mxu0 0.0
  %125 = vmatpush1.msra.mxu0 %v32
  %126 = vmatprep.subr.mxu0 0.0
  %127 = vmatpush1.msra.mxu0 %v31
  %128 = vmatprep.subr.mxu0 0.0
  %129 = vmatpush1.msra.mxu0 %v30
  %130 = vmatprep.subr.mxu0 0.0
  %131 = vmatpush1.msra.mxu0 %v29
  %132 = vmatprep.subr.mxu0 0.0
  %133 = vmatpush1.msra.mxu0 %v28
  %134 = vmatprep.subr.mxu0 0.0
  %135 = vmatpush1.msra.mxu0 %v27
  %136 = vmatprep.subr.mxu0 0.0
  %137 = vmatpush1.msra.mxu0 %v26
  %138 = vmatprep.subr.mxu0 0.0
  %139 = vmatpush1.msra.mxu0 %v25
  %140 = vmatprep.subr.mxu0 0.0
  %141 = vmatpush1.msra.mxu0 %v24
  %142 = vmatprep.subr.mxu0 0.0
  %143 = vmatpush2.msra.mxu0 %v55
  %144 = vmatprep.subr.mxu0 0.0
  %145 = vmatpush2.msra.mxu0 %v54
  %146 = vmatprep.subr.mxu0 0.0
  %147 = vmatpush2.msra.mxu0 %v53
  %148 = vmatprep.subr.mxu0 0.0
  %149 = vmatpush2.msra.mxu0 %v52
  %150 = vmatprep.subr.mxu0 0.0
  %151 = vmatpush2.msra.mxu0 %v51
  %152 = vmatprep.subr.mxu0 0.0
  %153 = vmatpush2.msra.mxu0 %v50
  %154 = vmatprep.subr.mxu0 0.0
  %155 = vmatpush2.msra.mxu0 %v49
  %156 = vmatprep.subr.mxu0 0.0
  %157 = vmatpush2.msra.mxu0 %v48
  %158 = vmatprep.subr.mxu0 0.0
  %159 = vmatpush2.msra.mxu0 %v47
  %160 = vmatprep.subr.mxu0 0.0
  %161 = vmatpush2.msra.mxu0 %v46
  %162 = vmatprep.subr.mxu0 0.0
  %163 = vmatpush2.msra.mxu0 %v45
  %164 = vmatprep.subr.mxu0 0.0
  %165 = vmatpush2.msra.mxu0 %v44
  %166 = vmatprep.subr.mxu0 0.0
  %167 = vmatpush2.msra.mxu0 %v43
  %168 = vmatprep.subr.mxu0 0.0
  %169 = vmatpush2.msra.mxu0 %v42
  %170 = vmatprep.subr.mxu0 0.0
  %171 = vmatpush2.msra.mxu0 %v41
  %172 = vmatprep.subr.mxu0 0.0
  %173 = vmatpush2.msra.mxu0 %v40
  %174 = vmatprep.mubr.f32.mxu0 %v15
  %175 = vmatmul.mubr.f32.gmra.mxu0 %v14
  %v176 = vpop.f32.mrf.mxu0
  %v177 = vadd.f32 %v101, %v176
  %v178 = vpop.f32.mrf.mxu0
  %179 = vmatprep.mubr.f32.mxu0 %v20
  %180 = vmatmul.mubr.f32.gmra.mxu0 %v19
  %v181 = vpop.f32.mrf.mxu0
  %v182 = vadd.f32 %v101, %v181
  %v183 = vpop.f32.mrf.mxu0
  %184 = vdwg.mxu0
  %185 = vmatprep.subr.mxu0 0.0
  %186 = vmatpush1.msra.mxu0 %v71
  %187 = vmatprep.subr.mxu0 0.0
  %188 = vmatpush1.msra.mxu0 %v70
  %189 = vmatprep.subr.mxu0 0.0
  %190 = vmatpush1.msra.mxu0 %v69
  %191 = vmatprep.subr.mxu0 0.0
  %192 = vmatpush1.msra.mxu0 %v68
  %193 = vmatprep.subr.mxu0 0.0
  %194 = vmatpush1.msra.mxu0 %v67
  %195 = vmatprep.subr.mxu0 0.0
  %196 = vmatpush1.msra.mxu0 %v66
  %197 = vmatprep.subr.mxu0 0.0
  %198 = vmatpush1.msra.mxu0 %v65
  %199 = vmatprep.subr.mxu0 0.0
  %200 = vmatpush1.msra.mxu0 %v64
  %201 = vmatprep.subr.mxu0 0.0
  %202 = vmatpush1.msra.mxu0 %v63
  %203 = vmatprep.subr.mxu0 0.0
  %204 = vmatpush1.msra.mxu0 %v62
  %205 = vmatprep.subr.mxu0 0.0
  %206 = vmatpush1.msra.mxu0 %v61
  %207 = vmatprep.subr.mxu0 0.0
  %208 = vmatpush1.msra.mxu0 %v60
  %209 = vmatprep.subr.mxu0 0.0
  %210 = vmatpush1.msra.mxu0 %v59
  %211 = vmatprep.subr.mxu0 0.0
  %212 = vmatpush1.msra.mxu0 %v58
  %213 = vmatprep.subr.mxu0 0.0
  %214 = vmatpush1.msra.mxu0 %v57
  %215 = vmatprep.subr.mxu0 0.0
  %216 = vmatpush1.msra.mxu0 %v56
  %217 = vmatprep.subr.mxu0 0.0
  %218 = vmatpush2.msra.mxu0 %v87
  %219 = vmatprep.subr.mxu0 0.0
  %220 = vmatpush2.msra.mxu0 %v86
  %221 = vmatprep.subr.mxu0 0.0
  %222 = vmatpush2.msra.mxu0 %v85
  %223 = vmatprep.subr.mxu0 0.0
  %224 = vmatpush2.msra.mxu0 %v84
  %225 = vmatprep.subr.mxu0 0.0
  %226 = vmatpush2.msra.mxu0 %v83
  %227 = vmatprep.subr.mxu0 0.0
  %228 = vmatpush2.msra.mxu0 %v82
  %229 = vmatprep.subr.mxu0 0.0
  %230 = vmatpush2.msra.mxu0 %v81
  %231 = vmatprep.subr.mxu0 0.0
  %232 = vmatpush2.msra.mxu0 %v80
  %233 = vmatprep.subr.mxu0 0.0
  %234 = vmatpush2.msra.mxu0 %v79
  %235 = vmatprep.subr.mxu0 0.0
  %236 = vmatpush2.msra.mxu0 %v78
  %237 = vmatprep.subr.mxu0 0.0
  %238 = vmatpush2.msra.mxu0 %v77
  %239 = vmatprep.subr.mxu0 0.0
  %240 = vmatpush2.msra.mxu0 %v76
  %241 = vmatprep.subr.mxu0 0.0
  %242 = vmatpush2.msra.mxu0 %v75
  %243 = vmatprep.subr.mxu0 0.0
  %244 = vmatpush2.msra.mxu0 %v74
  %245 = vmatprep.subr.mxu0 0.0
  %246 = vmatpush2.msra.mxu0 %v73
  %247 = vmatprep.subr.mxu0 0.0
  %248 = vmatpush2.msra.mxu0 %v72
  %249 = vmatprep.mubr.f32.mxu0 %v17
  %250 = vmatmul.mubr.f32.gmra.mxu0 %v16
  %v251 = vpop.f32.mrf.mxu0
  %v252 = vadd.f32 %v177, %v251
  %v253 = vpop.f32.mrf.mxu0
  %254 = vmatprep.mubr.f32.mxu0 %v22
  %255 = vmatmul.mubr.f32.gmra.mxu0 %v21
  %v256 = vpop.f32.mrf.mxu0
  %v257 = vadd.f32 %v182, %v256
  %v258 = vpop.f32.mrf.mxu0
  %259 = vdwg.mxu0
  %260 = vmatprep.subr.mxu0 0.0
  %261 = vmatpush1.msra.mxu0 0.0
  %262 = vmatprep.subr.mxu0 0.0
  %263 = vmatpush1.msra.mxu0 0.0
  %264 = vmatprep.subr.mxu0 0.0
  %265 = vmatpush1.msra.mxu0 0.0
  %266 = vmatprep.subr.mxu0 0.0
  %267 = vmatpush1.msra.mxu0 0.0
  %268 = vmatprep.subr.mxu0 0.0
  %269 = vmatpush1.msra.mxu0 0.0
  %270 = vmatprep.subr.mxu0 0.0
  %271 = vmatpush1.msra.mxu0 0.0
  %272 = vmatprep.subr.mxu0 0.0
  %273 = vmatpush1.msra.mxu0 0.0
  %274 = vmatprep.subr.mxu0 0.0
  %275 = vmatpush1.msra.mxu0 0.0
  %276 = vmatprep.subr.mxu0 0.0
  %277 = vmatpush1.msra.mxu0 %v95
  %278 = vmatprep.subr.mxu0 0.0
  %279 = vmatpush1.msra.mxu0 %v94
  %280 = vmatprep.subr.mxu0 0.0
  %281 = vmatpush1.msra.mxu0 %v93
  %282 = vmatprep.subr.mxu0 0.0
  %283 = vmatpush1.msra.mxu0 %v92
  %284 = vmatprep.subr.mxu0 0.0
  %285 = vmatpush1.msra.mxu0 %v91
  %286 = vmatprep.subr.mxu0 0.0
  %287 = vmatpush1.msra.mxu0 %v90
  %288 = vmatprep.subr.mxu0 0.0
  %289 = vmatpush1.msra.mxu0 %v89
  %290 = vmatprep.subr.mxu0 0.0
  %291 = vmatpush1.msra.mxu0 %v88
  %292 = vmatprep.subr.mxu0 0.0
  %293 = vmatpush2.msra.mxu0 0.0
  %294 = vmatprep.subr.mxu0 0.0
  %295 = vmatpush2.msra.mxu0 0.0
  %296 = vmatprep.subr.mxu0 0.0
  %297 = vmatpush2.msra.mxu0 0.0
  %298 = vmatprep.subr.mxu0 0.0
  %299 = vmatpush2.msra.mxu0 0.0
  %300 = vmatprep.subr.mxu0 0.0
  %301 = vmatpush2.msra.mxu0 0.0
  %302 = vmatprep.subr.mxu0 0.0
  %303 = vmatpush2.msra.mxu0 0.0
  %304 = vmatprep.subr.mxu0 0.0
  %305 = vmatpush2.msra.mxu0 0.0
  %306 = vmatprep.subr.mxu0 0.0
  %307 = vmatpush2.msra.mxu0 0.0
  %308 = vmatprep.subr.mxu0 0.0
  %309 = vmatpush2.msra.mxu0 0.0
  %310 = vmatprep.subr.mxu0 0.0
  %311 = vmatpush2.msra.mxu0 0.0
  %312 = vmatprep.subr.mxu0 0.0
  %313 = vmatpush2.msra.mxu0 0.0
  %314 = vmatprep.subr.mxu0 0.0
  %315 = vmatpush2.msra.mxu0 0.0
  %316 = vmatprep.subr.mxu0 0.0
  %317 = vmatpush2.msra.mxu0 0.0
  %318 = vmatprep.subr.mxu0 0.0
  %319 = vmatpush2.msra.mxu0 0.0
  %320 = vmatprep.subr.mxu0 0.0
  %321 = vmatpush2.msra.mxu0 0.0
  %322 = vmatprep.subr.mxu0 0.0
  %323 = vmatpush2.msra.mxu0 0.0
  %324 = vmatprep.mubr.f32.mxu0 0.0
  %325 = vmatmul.mubr.f32.gmra.mxu0 %v105
  %v326 = vpop.f32.mrf.mxu0
  %v327 = vadd.f32 %v252, %v326
  %v328 = vpop.f32.mrf.mxu0
  %329 = vmatprep.mubr.f32.mxu0 0.0
  %330 = vmatmul.mubr.f32.gmra.mxu0 %v108
  %v331 = vpop.f32.mrf.mxu0
  %v332 = vadd.f32 %v257, %v331
  %v333 = vpop.f32.mrf.mxu0
  %334 = vdwg.mxu0
  %v335 = vmax.f32 %v327, 0.0
  %v336 = vmax.f32 %v332, 0.0
  %337 = vst.msk [vmem:[%s3] sm:$0xff] %vm103, %v335
  %vm338 = vcmask 519168
  %339 = vst.msk [vmem:[%s3 + $0x8] sm:$0xf] %vm338, %v336
  // Predicated region
  $region14: #{cnn_forward.10} parent=0 // pred_check
    _
  $region15: #{cnn_forward.10} parent=0 // pred_check_branch
    %341 = sbr.rel (0) target = $region17
  $region16: #{cnn_forward.10} parent=0 // pred_region
    _
  $region17: #{cnn_forward.10} parent=0 // pred_fallthru
    _
  // Predicated region
  $region18: #{cnn_forward.10} parent=0 // pred_check
    _
  $region19: #{cnn_forward.10} parent=0 // pred_check_branch
    %343 = sbr.rel (0) target = $region21
  $region20: #{cnn_forward.10} parent=0 // pred_region
    _
  $region21: #{cnn_forward.10} parent=0 // pred_fallthru
    _

// kernel: cnn_forward.11
$region0: #{cnn_forward.11}
  #allocation0 [shape = 'u32[]', space=smem, size = 0x4, offset = 0x4, fixed_abs, tag = 'smem constant byte address 0x4 - core index']
  #allocation1 [shape = 'u32[144,128]{1,0:T(1,128)}', space=vmem, size = 0x12000, scoped, tag = 'internal scratch']
  %s0 = inlined_call_operand.vmem [shape: f32[2,384], index: 0, kind: input, shape index: {}]
  %s1 = inlined_call_operand.vmem [shape: f32[384,128], index: 1, kind: input, shape index: {}]
  %s2 = inlined_call_operand.vmem [shape: f32[1,128], index: 2, kind: input, shape index: {}]
  %s3 = inlined_call_operand.vmem [shape: f32[128,128], index: 3, kind: input, shape index: {}]
  %s4 = inlined_call_operand.vmem [shape: f32[1,128], index: 4, kind: input, shape index: {}]
  %s5 = inlined_call_operand.vmem [shape: f32[128,6], index: 5, kind: input, shape index: {}]
  %s6 = inlined_call_operand.vmem [shape: f32[1,6], index: 6, kind: input, shape index: {}]
  %s7 = inlined_call_operand.hbm [shape: f32[2,6], index: 7, kind: output, shape index: {}]
  %s8 = sld [smem:[#allocation0]]
  $region38: #{cnn_forward.11} parent=0
    _
  %s10 = ssub.s32 1, %s8
  %s11 = scalar_select 0, %s10, %s8
  $region1: #{cnn_forward.11} parent=0
    #allocation2 [shape = 'u8[1024]{0}', space=vmem, size = 0x400, scoped, tag = 'output window, operand 0, single buffered']
    #allocation3 [shape = 's32[1]{0}', space=sflag, size = 0x4, scoped, tag = 'scoped memory for cnn_forward.11']
    %12 = vsyncpa [#allocation3], 0
    // Predicated region
    $region2: #{cnn_forward.11} parent=1 // pred_check
      _
    $region3: #{cnn_forward.11} parent=1 // pred_check_branch
      %14 = sbr.rel (0) target = $region5
    $region4: #{cnn_forward.11} parent=1 // pred_region
      _
    $region5: #{cnn_forward.11} parent=1 // pred_fallthru
      _
    // Predicated region
    $region6: #{cnn_forward.11} parent=1 // pred_check
      _
    $region7: #{cnn_forward.11} parent=1 // pred_check_branch
      %16 = sbr.rel (0) target = $region9
    $region8: #{cnn_forward.11} parent=1 // pred_region
      _
    $region9: #{cnn_forward.11} parent=1 // pred_fallthru
      _
    // Predicated region
    $region10: #{cnn_forward.11} parent=1 // pred_check
      _
    $region11: #{cnn_forward.11} parent=1 // pred_check_branch
      %18 = sbr.rel (0) target = $region13
    $region12: #{cnn_forward.11} parent=1 // pred_region
      _
    $region13: #{cnn_forward.11} parent=1 // pred_fallthru
      _
    // Predicated region
    $region14: #{cnn_forward.11} parent=1 // pred_check
      _
    $region15: #{cnn_forward.11} parent=1 // pred_check_branch
      %20 = sbr.rel (0) target = $region17
    $region16: #{cnn_forward.11} parent=1 // pred_region
      _
    $region17: #{cnn_forward.11} parent=1 // pred_fallthru
      _
    // Predicated region
    $region18: #{cnn_forward.11} parent=1 // pred_check
      _
    $region19: #{cnn_forward.11} parent=1 // pred_check_branch
      %22 = sbr.rel (0) target = $region21
    $region20: #{cnn_forward.11} parent=1 // pred_region
      _
    $region21: #{cnn_forward.11} parent=1 // pred_fallthru
      _
    // Predicated region
    $region22: #{cnn_forward.11} parent=1 // pred_check
      _
    $region23: #{cnn_forward.11} parent=1 // pred_check_branch
      %24 = sbr.rel (0) target = $region25
    $region24: #{cnn_forward.11} parent=1 // pred_region
      _
    $region25: #{cnn_forward.11} parent=1 // pred_fallthru
      _
    // Predicated region
    $region26: #{cnn_forward.11} parent=1 // pred_check
      _
    $region27: #{cnn_forward.11} parent=1 // pred_check_branch
      %26 = sbr.rel (0) target = $region29
    $region28: #{cnn_forward.11} parent=1 // pred_region
      _
    $region29: #{cnn_forward.11} parent=1 // pred_fallthru
      _
    %v27 = vld [vmem:[%s0] sm:$0x3f]
    %v28 = vld [vmem:[%s1] sm:$0xff]
    %v29 = vld [vmem:[%s1 + $0x8] sm:$0xff]
    %v30 = vld [vmem:[%s1 + $0x10] sm:$0xff]
    %v31 = vld [vmem:[%s1 + $0x18] sm:$0xff]
    %v32 = vld [vmem:[%s1 + $0x20] sm:$0xff]
    %v33 = vld [vmem:[%s1 + $0x28] sm:$0xff]
    %v34 = vld [vmem:[%s1 + $0x30] sm:$0xff]
    %v35 = vld [vmem:[%s1 + $0x38] sm:$0xff]
    %v36 = vld [vmem:[%s1 + $0x40] sm:$0xff]
    %v37 = vld [vmem:[%s1 + $0x48] sm:$0xff]
    %v38 = vld [vmem:[%s1 + $0x50] sm:$0xff]
    %v39 = vld [vmem:[%s1 + $0x58] sm:$0xff]
    %v40 = vld [vmem:[%s1 + $0x60] sm:$0xff]
    %v41 = vld [vmem:[%s1 + $0x68] sm:$0xff]
    %v42 = vld [vmem:[%s1 + $0x70] sm:$0xff]
    %v43 = vld [vmem:[%s1 + $0x78] sm:$0xff]
    %v44 = vld [vmem:[%s1 + $0x80] sm:$0xff]
    %v45 = vld [vmem:[%s1 + $0x88] sm:$0xff]
    %v46 = vld [vmem:[%s1 + $0x90] sm:$0xff]
    %v47 = vld [vmem:[%s1 + $0x98] sm:$0xff]
    %v48 = vld [vmem:[%s1 + $0xa0] sm:$0xff]
    %v49 = vld [vmem:[%s1 + $0xa8] sm:$0xff]
    %v50 = vld [vmem:[%s1 + $0xb0] sm:$0xff]
    %v51 = vld [vmem:[%s1 + $0xb8] sm:$0xff]
    %v52 = vld [vmem:[%s1 + $0xc0] sm:$0xff]
    %v53 = vld [vmem:[%s1 + $0xc8] sm:$0xff]
    %v54 = vld [vmem:[%s1 + $0xd0] sm:$0xff]
    %v55 = vld [vmem:[%s1 + $0xd8] sm:$0xff]
    %v56 = vld [vmem:[%s1 + $0xe0] sm:$0xff]
    %v57 = vld [vmem:[%s1 + $0xe8] sm:$0xff]
    %v58 = vld [vmem:[%s1 + $0xf0] sm:$0xff]
    %v59 = vld [vmem:[%s1 + $0xf8] sm:$0xff]
    %v60 = vld [vmem:[%s1 + $0x100] sm:$0xff]
    %v61 = vld [vmem:[%s1 + $0x108] sm:$0xff]
    %v62 = vld [vmem:[%s1 + $0x110] sm:$0xff]
    %v63 = vld [vmem:[%s1 + $0x118] sm:$0xff]
    %v64 = vld [vmem:[%s1 + $0x120] sm:$0xff]
    %v65 = vld [vmem:[%s1 + $0x128] sm:$0xff]
    %v66 = vld [vmem:[%s1 + $0x130] sm:$0xff]
    %v67 = vld [vmem:[%s1 + $0x138] sm:$0xff]
    %v68 = vld [vmem:[%s1 + $0x140] sm:$0xff]
    %v69 = vld [vmem:[%s1 + $0x148] sm:$0xff]
    %v70 = vld [vmem:[%s1 + $0x150] sm:$0xff]
    %v71 = vld [vmem:[%s1 + $0x158] sm:$0xff]
    %v72 = vld [vmem:[%s1 + $0x160] sm:$0xff]
    %v73 = vld [vmem:[%s1 + $0x168] sm:$0xff]
    %v74 = vld [vmem:[%s1 + $0x170] sm:$0xff]
    %v75 = vld [vmem:[%s1 + $0x178] sm:$0xff]
    %v76 = vld [vmem:[%s2] sm:$0x1]
    %v78 = vlaneseq
    %v79 = vshrl.u32 %v78, 7
    %v80 = vsub.s32 0, %v79
    %v81 = vrot.slane %v76, %v80
    %v84 = vcombine.high %v27, %v27
    %v86 = vunpack.c.l.s4 1983009808
    %v87 = vunpack.c.0.s8 %v86
    %v88 = vlaneseq
    %v89 = vshrl.u32 %v88, 7
    %v90 = vsub.s32 %v87, %v89
    %v91 = vrot.slane %v27, %v90
    %v93 = vunpack.c.l.s4 1983009808
    %v94 = vunpack.c.0.s8 %v93
    %v95 = vlaneseq
    %v96 = vshrl.u32 %v95, 7
    %v97 = vsub.s32 %v94, %v96
    %v98 = vrot.slane %v84, %v97
    %v99 = vcombine.high %v91, %v91
    %103 = vmatprep.subr.mxu0 0.0
    %104 = vmatpush1.msra.mxu0 %v43
    %105 = vmatprep.subr.mxu0 0.0
    %106 = vmatpush1.msra.mxu0 %v42
    %107 = vmatprep.subr.mxu0 0.0
    %108 = vmatpush1.msra.mxu0 %v41
    %109 = vmatprep.subr.mxu0 0.0
    %110 = vmatpush1.msra.mxu0 %v40
    %111 = vmatprep.subr.mxu0 0.0
    %112 = vmatpush1.msra.mxu0 %v39
    %113 = vmatprep.subr.mxu0 0.0
    %114 = vmatpush1.msra.mxu0 %v38
    %115 = vmatprep.subr.mxu0 0.0
    %116 = vmatpush1.msra.mxu0 %v37
    %117 = vmatprep.subr.mxu0 0.0
    %118 = vmatpush1.msra.mxu0 %v36
    %119 = vmatprep.subr.mxu0 0.0
    %120 = vmatpush1.msra.mxu0 %v35
    %121 = vmatprep.subr.mxu0 0.0
    %122 = vmatpush1.msra.mxu0 %v34
    %123 = vmatprep.subr.mxu0 0.0
    %124 = vmatpush1.msra.mxu0 %v33
    %125 = vmatprep.subr.mxu0 0.0
    %126 = vmatpush1.msra.mxu0 %v32
    %127 = vmatprep.subr.mxu0 0.0
    %128 = vmatpush1.msra.mxu0 %v31
    %129 = vmatprep.subr.mxu0 0.0
    %130 = vmatpush1.msra.mxu0 %v30
    %131 = vmatprep.subr.mxu0 0.0
    %132 = vmatpush1.msra.mxu0 %v29
    %133 = vmatprep.subr.mxu0 0.0
    %134 = vmatpush1.msra.mxu0 %v28
    %135 = vmatprep.subr.mxu0 0.0
    %136 = vmatpush2.msra.mxu0 %v59
    %137 = vmatprep.subr.mxu0 0.0
    %138 = vmatpush2.msra.mxu0 %v58
    %139 = vmatprep.subr.mxu0 0.0
    %140 = vmatpush2.msra.mxu0 %v57
    %141 = vmatprep.subr.mxu0 0.0
    %142 = vmatpush2.msra.mxu0 %v56
    %143 = vmatprep.subr.mxu0 0.0
    %144 = vmatpush2.msra.mxu0 %v55
    %145 = vmatprep.subr.mxu0 0.0
    %146 = vmatpush2.msra.mxu0 %v54
    %147 = vmatprep.subr.mxu0 0.0
    %148 = vmatpush2.msra.mxu0 %v53
    %149 = vmatprep.subr.mxu0 0.0
    %150 = vmatpush2.msra.mxu0 %v52
    %151 = vmatprep.subr.mxu0 0.0
    %152 = vmatpush2.msra.mxu0 %v51
    %153 = vmatprep.subr.mxu0 0.0
    %154 = vmatpush2.msra.mxu0 %v50
    %155 = vmatprep.subr.mxu0 0.0
    %156 = vmatpush2.msra.mxu0 %v49
    %157 = vmatprep.subr.mxu0 0.0
    %158 = vmatpush2.msra.mxu0 %v48
    %159 = vmatprep.subr.mxu0 0.0
    %160 = vmatpush2.msra.mxu0 %v47
    %161 = vmatprep.subr.mxu0 0.0
    %162 = vmatpush2.msra.mxu0 %v46
    %163 = vmatprep.subr.mxu0 0.0
    %164 = vmatpush2.msra.mxu0 %v45
    %165 = vmatprep.subr.mxu0 0.0
    %166 = vmatpush2.msra.mxu0 %v44
    %167 = vmatprep.mubr.f32.mxu0 %v99
    %168 = vmatmul.mubr.f32.gmra.mxu0 %v91
    %v169 = vpop.f32.mrf.mxu0
    %v170 = vadd.f32 %v81, %v169
    %v171 = vpop.f32.mrf.mxu0
    %172 = vdwg.mxu0
    %173 = vmatprep.subr.mxu0 0.0
    %174 = vmatpush1.msra.mxu0 %v75
    %175 = vmatprep.subr.mxu0 0.0
    %176 = vmatpush1.msra.mxu0 %v74
    %177 = vmatprep.subr.mxu0 0.0
    %178 = vmatpush1.msra.mxu0 %v73
    %179 = vmatprep.subr.mxu0 0.0
    %180 = vmatpush1.msra.mxu0 %v72
    %181 = vmatprep.subr.mxu0 0.0
    %182 = vmatpush1.msra.mxu0 %v71
    %183 = vmatprep.subr.mxu0 0.0
    %184 = vmatpush1.msra.mxu0 %v70
    %185 = vmatprep.subr.mxu0 0.0
    %186 = vmatpush1.msra.mxu0 %v69
    %187 = vmatprep.subr.mxu0 0.0
    %188 = vmatpush1.msra.mxu0 %v68
    %189 = vmatprep.subr.mxu0 0.0
    %190 = vmatpush1.msra.mxu0 %v67
    %191 = vmatprep.subr.mxu0 0.0
    %192 = vmatpush1.msra.mxu0 %v66
    %193 = vmatprep.subr.mxu0 0.0
    %194 = vmatpush1.msra.mxu0 %v65
    %195 = vmatprep.subr.mxu0 0.0
    %196 = vmatpush1.msra.mxu0 %v64
    %197 = vmatprep.subr.mxu0 0.0
    %198 = vmatpush1.msra.mxu0 %v63
    %199 = vmatprep.subr.mxu0 0.0
    %200 = vmatpush1.msra.mxu0 %v62
    %201 = vmatprep.subr.mxu0 0.0
    %202 = vmatpush1.msra.mxu0 %v61
    %203 = vmatprep.subr.mxu0 0.0
    %204 = vmatpush1.msra.mxu0 %v60
    %205 = vmatprep.subr.mxu0 0.0
    %206 = vmatpush2.msra.mxu0 0.0
    %207 = vmatprep.subr.mxu0 0.0
    %208 = vmatpush2.msra.mxu0 0.0
    %209 = vmatprep.subr.mxu0 0.0
    %210 = vmatpush2.msra.mxu0 0.0
    %211 = vmatprep.subr.mxu0 0.0
    %212 = vmatpush2.msra.mxu0 0.0
    %213 = vmatprep.subr.mxu0 0.0
    %214 = vmatpush2.msra.mxu0 0.0
    %215 = vmatprep.subr.mxu0 0.0
    %216 = vmatpush2.msra.mxu0 0.0
    %217 = vmatprep.subr.mxu0 0.0
    %218 = vmatpush2.msra.mxu0 0.0
    %219 = vmatprep.subr.mxu0 0.0
    %220 = vmatpush2.msra.mxu0 0.0
    %221 = vmatprep.subr.mxu0 0.0
    %222 = vmatpush2.msra.mxu0 0.0
    %223 = vmatprep.subr.mxu0 0.0
    %224 = vmatpush2.msra.mxu0 0.0
    %225 = vmatprep.subr.mxu0 0.0
    %226 = vmatpush2.msra.mxu0 0.0
    %227 = vmatprep.subr.mxu0 0.0
    %228 = vmatpush2.msra.mxu0 0.0
    %229 = vmatprep.subr.mxu0 0.0
    %230 = vmatpush2.msra.mxu0 0.0
    %231 = vmatprep.subr.mxu0 0.0
    %232 = vmatpush2.msra.mxu0 0.0
    %233 = vmatprep.subr.mxu0 0.0
    %234 = vmatpush2.msra.mxu0 0.0
    %235 = vmatprep.subr.mxu0 0.0
    %236 = vmatpush2.msra.mxu0 0.0
    %237 = vmatprep.mubr.f32.mxu0 0.0
    %238 = vmatmul.mubr.f32.gmra.mxu0 %v98
    %v239 = vpop.f32.mrf.mxu0
    %v240 = vadd.f32 %v170, %v239
    %v241 = vpop.f32.mrf.mxu0
    %242 = vdwg.mxu0
    %v243 = vmax.f32 %v240, 0.0
    %v244 = vld [vmem:[%s3] sm:$0xff]
    %v245 = vld [vmem:[%s3 + $0x8] sm:$0xff]
    %v246 = vld [vmem:[%s3 + $0x10] sm:$0xff]
    %v247 = vld [vmem:[%s3 + $0x18] sm:$0xff]
    %v248 = vld [vmem:[%s3 + $0x20] sm:$0xff]
    %v249 = vld [vmem:[%s3 + $0x28] sm:$0xff]
    %v250 = vld [vmem:[%s3 + $0x30] sm:$0xff]
    %v251 = vld [vmem:[%s3 + $0x38] sm:$0xff]
    %v252 = vld [vmem:[%s3 + $0x40] sm:$0xff]
    %v253 = vld [vmem:[%s3 + $0x48] sm:$0xff]
    %v254 = vld [vmem:[%s3 + $0x50] sm:$0xff]
    %v255 = vld [vmem:[%s3 + $0x58] sm:$0xff]
    %v256 = vld [vmem:[%s3 + $0x60] sm:$0xff]
    %v257 = vld [vmem:[%s3 + $0x68] sm:$0xff]
    %v258 = vld [vmem:[%s3 + $0x70] sm:$0xff]
    %v259 = vld [vmem:[%s3 + $0x78] sm:$0xff]
    %v260 = vld [vmem:[%s4] sm:$0x1]
    %v262 = vlaneseq
    %v263 = vshrl.u32 %v262, 7
    %v264 = vsub.s32 0, %v263
    %v265 = vrot.slane %v260, %v264
    %267 = vmatprep.subr.mxu0 0.0
    %268 = vmatpush1.msra.mxu0 %v259
    %269 = vmatprep.subr.mxu0 0.0
    %270 = vmatpush1.msra.mxu0 %v258
    %271 = vmatprep.subr.mxu0 0.0
    %272 = vmatpush1.msra.mxu0 %v257
    %273 = vmatprep.subr.mxu0 0.0
    %274 = vmatpush1.msra.mxu0 %v256
    %275 = vmatprep.subr.mxu0 0.0
    %276 = vmatpush1.msra.mxu0 %v255
    %277 = vmatprep.subr.mxu0 0.0
    %278 = vmatpush1.msra.mxu0 %v254
    %279 = vmatprep.subr.mxu0 0.0
    %280 = vmatpush1.msra.mxu0 %v253
    %281 = vmatprep.subr.mxu0 0.0
    %282 = vmatpush1.msra.mxu0 %v252
    %283 = vmatprep.subr.mxu0 0.0
    %284 = vmatpush1.msra.mxu0 %v251
    %285 = vmatprep.subr.mxu0 0.0
    %286 = vmatpush1.msra.mxu0 %v250
    %287 = vmatprep.subr.mxu0 0.0
    %288 = vmatpush1.msra.mxu0 %v249
    %289 = vmatprep.subr.mxu0 0.0
    %290 = vmatpush1.msra.mxu0 %v248
    %291 = vmatprep.subr.mxu0 0.0
    %292 = vmatpush1.msra.mxu0 %v247
    %293 = vmatprep.subr.mxu0 0.0
    %294 = vmatpush1.msra.mxu0 %v246
    %295 = vmatprep.subr.mxu0 0.0
    %296 = vmatpush1.msra.mxu0 %v245
    %297 = vmatprep.subr.mxu0 0.0
    %298 = vmatpush1.msra.mxu0 %v244
    %299 = vmatprep.subr.mxu0 0.0
    %300 = vmatpush2.msra.mxu0 0.0
    %301 = vmatprep.subr.mxu0 0.0
    %302 = vmatpush2.msra.mxu0 0.0
    %303 = vmatprep.subr.mxu0 0.0
    %304 = vmatpush2.msra.mxu0 0.0
    %305 = vmatprep.subr.mxu0 0.0
    %306 = vmatpush2.msra.mxu0 0.0
    %307 = vmatprep.subr.mxu0 0.0
    %308 = vmatpush2.msra.mxu0 0.0
    %309 = vmatprep.subr.mxu0 0.0
    %310 = vmatpush2.msra.mxu0 0.0
    %311 = vmatprep.subr.mxu0 0.0
    %312 = vmatpush2.msra.mxu0 0.0
    %313 = vmatprep.subr.mxu0 0.0
    %314 = vmatpush2.msra.mxu0 0.0
    %315 = vmatprep.subr.mxu0 0.0
    %316 = vmatpush2.msra.mxu0 0.0
    %317 = vmatprep.subr.mxu0 0.0
    %318 = vmatpush2.msra.mxu0 0.0
    %319 = vmatprep.subr.mxu0 0.0
    %320 = vmatpush2.msra.mxu0 0.0
    %321 = vmatprep.subr.mxu0 0.0
    %322 = vmatpush2.msra.mxu0 0.0
    %323 = vmatprep.subr.mxu0 0.0
    %324 = vmatpush2.msra.mxu0 0.0
    %325 = vmatprep.subr.mxu0 0.0
    %326 = vmatpush2.msra.mxu0 0.0
    %327 = vmatprep.subr.mxu0 0.0
    %328 = vmatpush2.msra.mxu0 0.0
    %329 = vmatprep.subr.mxu0 0.0
    %330 = vmatpush2.msra.mxu0 0.0
    %331 = vmatprep.mubr.f32.mxu0 0.0
    %332 = vmatmul.mubr.f32.gmra.mxu0 %v243
    %v333 = vpop.f32.mrf.mxu0
    %v334 = vadd.f32 %v265, %v333
    %v335 = vpop.f32.mrf.mxu0
    %336 = vdwg.mxu0
    %v337 = vmax.f32 %v334, 0.0
    %v338 = vld [vmem:[%s5] sm:$0xff]
    %v339 = vld [vmem:[%s5 + $0x8] sm:$0xff]
    %v340 = vld [vmem:[%s5 + $0x10] sm:$0xff]
    %v341 = vld [vmem:[%s5 + $0x18] sm:$0xff]
    %v342 = vld [vmem:[%s5 + $0x20] sm:$0xff]
    %v343 = vld [vmem:[%s5 + $0x28] sm:$0xff]
    %v344 = vld [vmem:[%s5 + $0x30] sm:$0xff]
    %v345 = vld [vmem:[%s5 + $0x38] sm:$0xff]
    %v346 = vld [vmem:[%s5 + $0x40] sm:$0xff]
    %v347 = vld [vmem:[%s5 + $0x48] sm:$0xff]
    %v348 = vld [vmem:[%s5 + $0x50] sm:$0xff]
    %v349 = vld [vmem:[%s5 + $0x58] sm:$0xff]
    %v350 = vld [vmem:[%s5 + $0x60] sm:$0xff]
    %v351 = vld [vmem:[%s5 + $0x68] sm:$0xff]
    %v352 = vld [vmem:[%s5 + $0x70] sm:$0xff]
    %v353 = vld [vmem:[%s5 + $0x78] sm:$0xff]
    %v354 = vld [vmem:[%s6] sm:$0x1]
    %v356 = vlaneseq
    %v357 = vshrl.u32 %v356, 7
    %v358 = vsub.s32 0, %v357
    %v359 = vrot.slane %v354, %v358
    %361 = vmatprep.subr.mxu0 0.0
    %362 = vmatpush1.msra.mxu0 %v353
    %363 = vmatprep.subr.mxu0 0.0
    %364 = vmatpush1.msra.mxu0 %v352
    %365 = vmatprep.subr.mxu0 0.0
    %366 = vmatpush1.msra.mxu0 %v351
    %367 = vmatprep.subr.mxu0 0.0
    %368 = vmatpush1.msra.mxu0 %v350
    %369 = vmatprep.subr.mxu0 0.0
    %370 = vmatpush1.msra.mxu0 %v349
    %371 = vmatprep.subr.mxu0 0.0
    %372 = vmatpush1.msra.mxu0 %v348
    %373 = vmatprep.subr.mxu0 0.0
    %374 = vmatpush1.msra.mxu0 %v347
    %375 = vmatprep.subr.mxu0 0.0
    %376 = vmatpush1.msra.mxu0 %v346
    %377 = vmatprep.subr.mxu0 0.0
    %378 = vmatpush1.msra.mxu0 %v345
    %379 = vmatprep.subr.mxu0 0.0
    %380 = vmatpush1.msra.mxu0 %v344
    %381 = vmatprep.subr.mxu0 0.0
    %382 = vmatpush1.msra.mxu0 %v343
    %383 = vmatprep.subr.mxu0 0.0
    %384 = vmatpush1.msra.mxu0 %v342
    %385 = vmatprep.subr.mxu0 0.0
    %386 = vmatpush1.msra.mxu0 %v341
    %387 = vmatprep.subr.mxu0 0.0
    %388 = vmatpush1.msra.mxu0 %v340
    %389 = vmatprep.subr.mxu0 0.0
    %390 = vmatpush1.msra.mxu0 %v339
    %391 = vmatprep.subr.mxu0 0.0
    %392 = vmatpush1.msra.mxu0 %v338
    %393 = vmatprep.subr.mxu0 0.0
    %394 = vmatpush2.msra.mxu0 0.0
    %395 = vmatprep.subr.mxu0 0.0
    %396 = vmatpush2.msra.mxu0 0.0
    %397 = vmatprep.subr.mxu0 0.0
    %398 = vmatpush2.msra.mxu0 0.0
    %399 = vmatprep.subr.mxu0 0.0
    %400 = vmatpush2.msra.mxu0 0.0
    %401 = vmatprep.subr.mxu0 0.0
    %402 = vmatpush2.msra.mxu0 0.0
    %403 = vmatprep.subr.mxu0 0.0
    %404 = vmatpush2.msra.mxu0 0.0
    %405 = vmatprep.subr.mxu0 0.0
    %406 = vmatpush2.msra.mxu0 0.0
    %407 = vmatprep.subr.mxu0 0.0
    %408 = vmatpush2.msra.mxu0 0.0
    %409 = vmatprep.subr.mxu0 0.0
    %410 = vmatpush2.msra.mxu0 0.0
    %411 = vmatprep.subr.mxu0 0.0
    %412 = vmatpush2.msra.mxu0 0.0
    %413 = vmatprep.subr.mxu0 0.0
    %414 = vmatpush2.msra.mxu0 0.0
    %415 = vmatprep.subr.mxu0 0.0
    %416 = vmatpush2.msra.mxu0 0.0
    %417 = vmatprep.subr.mxu0 0.0
    %418 = vmatpush2.msra.mxu0 0.0
    %419 = vmatprep.subr.mxu0 0.0
    %420 = vmatpush2.msra.mxu0 0.0
    %421 = vmatprep.subr.mxu0 0.0
    %422 = vmatpush2.msra.mxu0 0.0
    %423 = vmatprep.subr.mxu0 0.0
    %424 = vmatpush2.msra.mxu0 0.0
    %425 = vmatprep.mubr.f32.mxu0 0.0
    %426 = vmatmul.mubr.f32.gmra.mxu0 %v337
    %v427 = vpop.f32.mrf.mxu0
    %v428 = vadd.f32 %v359, %v427
    %v429 = vpop.f32.mrf.mxu0
    %430 = vdwg.mxu0
    %vm431 = vcmask 41984
    %432 = vst.msk [vmem:[#allocation2] sm:$0x3] %vm431, %v428
    // Predicated region
    $region30: #{cnn_forward.11} parent=1 // pred_check
      _
    $region31: #{cnn_forward.11} parent=1 // pred_check_branch
      %434 = sbr.rel (0) target = $region33
    $region32: #{cnn_forward.11} parent=1 // pred_region
      %s436 = ssub.s32 32, 32
      %437 = vsyncadd [#allocation3], %s436
      %s439 = sshll.u32 [#allocation2], 4
      %s440 = int_to_ptr.vmem [resolvable:$true] %s439
      %442 = dma.vmem_to_hbm [thread:$0]  %s440, 32, %s7, [#allocation3]
    $region33: #{cnn_forward.11} parent=1 // pred_fallthru
      _
    // Predicated region
    $region34: #{cnn_forward.11} parent=1 // pred_check
      _
    $region35: #{cnn_forward.11} parent=1 // pred_check_branch
      %444 = sbr.rel (0) target = $region37
    $region36: #{cnn_forward.11} parent=1 // pred_region
      %445 = dma.done [#allocation3], 32
    $region37: #{cnn_forward.11} parent=1 // pred_fallthru
      _
    %446 = vsyncpa [#allocation3], 1

</llo_original>
